<compile_context>
chip_gen: v7x
topology: tpu7x:2x2x1
jax: 0.10.0
libtpu: 0.0.40
codegen_flags: <defaults>
</compile_context>

<pallas_src>
import math

import jax
import jax.numpy as jnp
from jax.experimental import pallas as pl
from jax.experimental.pallas import tpu as pltpu  # noqa: F401

# ----------------- small config (consistent with the module) -----------------
B = 2          # batch
L = 8          # seq_len
C_IN = 4       # enc_in
D = 32         # d_model
H = 4          # n_heads
D_FF = 64      # d_ff
E_LAYERS = 2   # e_layers
N_CLASS = 4    # num_class
EPS = 1e-5     # LayerNorm eps (PyTorch default)

BL = B * L         # 16  folded batch*seq rows
DK = D // H        # 8   per-head dim
HBL = H * BL       # 64  head-on-sublane rows
LN = L * N_CLASS   # 32  flattened classification columns
TAPS = 3 * C_IN    # 12  circular conv taps

# ----- packed-slab slot indices (static Python ints -> free in-kernel indexing) -----
# mats slab: each slot is (32, 128), real content at [:rows, :cols] (prefix slices only)
M_TOK = 0                      # (TAPS, D)   stacked Conv1d(k=3) weight
M_HW2 = 1                      # (D, LN)     classification weight, rearranged
M_COLSEL = 2                   # (LN, N)     constant column selector
M_LAYER0 = 3                   # per layer: +0 Wqkv (D,3D), +1 Wo (D,D), +2 W1 (D,D_FF), +3 W2^T (D,D_FF)
N_MATS = M_LAYER0 + 4 * E_LAYERS

# vecs slab: one (128,) row per vector
V_PER_LAYER = 8                # bqkv, bo, g1, be1, bf1, bf2, g2, be2
V_GN = V_PER_LAYER * E_LAYERS  # encoder final LayerNorm gamma
V_BN = V_GN + 1                # encoder final LayerNorm beta
V_PB = V_GN + 2                # classification bias (N_CLASS,)
V_ROWSEL = V_GN + 3            # B rows: batch row-selector (B, BL)
N_VECS = V_ROWSEL + B

# c64 slab: (2, 64, 128)
C64_HEADMASK = 0               # (HBL, 3D) head-wide lane mask
C64_ATTNMASK = 1               # (HBL, HBL) additive (head,batch) block-diag mask
# c16 slab: (3, 16, 128)
C16_PE = 0                     # (BL, D) positional table (tiled over batch)
C16_COLLAPSE = 1               # (BL, HBL) head-sum collapse matrix
C16_HEADMSK = 2                # (BL, LN) classification-head diagonal mask


# --------------------------------- helpers -----------------------------------
def _mm(a, b):
    # a @ b on the MXU, f32 accumulation
    return jax.lax.dot_general(a, b, (((1,), (0,)), ((), ())),
                               preferred_element_type=jnp.float32)


def _mm_t(a, b):
    # a @ b.T without an explicit transpose
    return jax.lax.dot_general(a, b, (((1,), (1,)), ((), ())),
                               preferred_element_type=jnp.float32)


def _gelu(x):
    c = 0.7978845608028654  # sqrt(2/pi)
    return 0.5 * x * (1.0 + jnp.tanh(c * (x + 0.044715 * x * x * x)))


# --------------------------------- fused kernel --------------------------------
def informer_kernel(xm_ref, mats_ref, vecs_ref, c64_ref, c16_ref, o_ref):
    f32 = jnp.float32
    inv_d = jnp.full((D, 1), 1.0 / D, f32)   # LayerNorm mean/var on the MXU
    ones_k = jnp.ones((HBL, 1), f32)         # softmax row-sum on the MXU

    def layernorm(x, g, b):
        mu = _mm(x, inv_d)                   # (rows, 1)
        d = x - mu
        var = _mm(d * d, inv_d)
        return d * jax.lax.rsqrt(var + EPS) * g + b

    taps = xm_ref[:, 0:TAPS]                 # (16, 12) = [x_{l-1} | x_l | x_{l+1}]
    mark = xm_ref[:, TAPS:TAPS + 1]          # (16, 1)  padding mask

    # ---- DataEmbedding: circular Conv1d(k=3, no bias) == taps @ stacked W, + positional ----
    x = _mm(taps, mats_ref[M_TOK, 0:TAPS, 0:D]) + c16_ref[C16_PE, :, 0:D]      # (16, 32)

    head_mask = c64_ref[C64_HEADMASK, :, 0:3 * D]    # (64, 96)
    attn_mask = c64_ref[C64_ATTNMASK, :, 0:HBL]      # (64, 64) additive
    collapse = c16_ref[C16_COLLAPSE, :, 0:HBL]       # (16, 64)

    # ---- encoder layers (static unroll; ProbSparse == dense attention here) ----
    for layer in range(E_LAYERS):
        mb = M_LAYER0 + 4 * layer
        vb = V_PER_LAYER * layer
        w_qkv = mats_ref[mb + 0, :, 0:3 * D]         # (32, 96)  scale folded into Wq
        w_o = mats_ref[mb + 1, :, 0:D]               # (32, 32)
        w_1 = mats_ref[mb + 2, :, 0:D_FF]            # (32, 64)
        w_2t = mats_ref[mb + 3, :, 0:D_FF]           # (32, 64)  == W2^T
        b_qkv = vecs_ref[vb + 0:vb + 1, 0:3 * D]
        b_o = vecs_ref[vb + 1:vb + 2, 0:D]
        g_1 = vecs_ref[vb + 2:vb + 3, 0:D]
        be_1 = vecs_ref[vb + 3:vb + 4, 0:D]
        b_f1 = vecs_ref[vb + 4:vb + 5, 0:D_FF]
        b_f2 = vecs_ref[vb + 5:vb + 6, 0:D]
        g_2 = vecs_ref[vb + 6:vb + 7, 0:D]
        be_2 = vecs_ref[vb + 7:vb + 8, 0:D]

        # fused QKV projection (1 matmul); 1/sqrt(dk) already folded into Wq/bq
        qkv = _mm(x, w_qkv) + b_qkv                                  # (16, 96)

        # head-on-sublane wide layout: row h*16 + b*8 + l carries head h in lane block h only
        qkv4 = jnp.concatenate([qkv] * H, axis=0) * head_mask        # (64, 96)
        qw = qkv4[:, 0:D]                                            # (64, 32)
        kw = qkv4[:, D:2 * D]
        vw = qkv4[:, 2 * D:3 * D]

        # ONE score matmul for all heads & batches; additive mask keeps softmax inside
        # each (head, batch) block of 8 keys and kills the (zero) cross-head products.
        s = _mm_t(qw, kw) + attn_mask                                # (64, 64)
        s = s - jnp.max(s, axis=-1, keepdims=True)                   # row-max on XLU
        p = jnp.exp(s)
        denom = _mm(p, ones_k)                                       # row-sum on MXU (64, 1)
        p = p * pl.reciprocal(denom)                                 # exact reciprocal
        ctxw = _mm(p, vw)                                            # (64, 32) block-sparse ctx

        # output projection + head sum: no per-head slices, no concat
        attn = _mm(collapse, _mm(ctxw, w_o)) + b_o                   # (16, 32)

        x1 = layernorm(x + attn, g_1, be_1)
        y = _gelu(_mm(x1, w_1) + b_f1)                               # conv1 (k=1) == linear
        y = _mm_t(y, w_2t) + b_f2                                    # conv2 (k=1) == linear
        x = layernorm(x1 + y, g_2, be_2)

    # ---- head: final LayerNorm + gelu + mark mask + Linear(L*D -> N_CLASS) ----
    g_n = vecs_ref[V_GN:V_GN + 1, 0:D]
    b_n = vecs_ref[V_BN:V_BN + 1, 0:D]
    hact = _gelu(layernorm(x, g_n, b_n)) * mark                      # (16, 32)
    # flatten-free projection: logits[b,n] = sum_{l,d} hact[b*L+l,d] * Wp[l,d,n]
    t = _mm(hact, mats_ref[M_HW2, :, 0:LN]) * c16_ref[C16_HEADMSK, :, 0:LN]   # (16, 32)
    u = _mm(t, mats_ref[M_COLSEL, :, 0:N_CLASS])                     # (16, 4)
    rowsel = vecs_ref[V_ROWSEL:V_ROWSEL + B, 0:BL]                   # (2, 16)
    logits = _mm(rowsel, u) + vecs_ref[V_PB:V_PB + 1, 0:N_CLASS]     # (2, 4)
    o_ref[...] = logits.astype(o_ref.dtype)


# --------------------------------- wrapper -----------------------------------
@jax.jit
def informer_classification(x_enc, x_mark_enc, packed):
    # Layout plumbing only (no compute hoisted): build the circular conv taps and fold
    # batch into sublane rows so the kernel sees lane/sublane-dense inputs.
    xm1 = jnp.roll(x_enc, 1, axis=1)      # x[:, l-1, :]  (circular within each batch)
    xp1 = jnp.roll(x_enc, -1, axis=1)     # x[:, l+1, :]
    taps = jnp.concatenate([xm1, x_enc, xp1], axis=-1).reshape(BL, TAPS)
    mark = x_mark_enc.reshape(BL, 1)
    xm = jnp.concatenate([taps, mark], axis=-1).astype(jnp.float32)  # (16, 13)
    # Single grid-less pallas_call: 5 full-array VMEM operands, one TC invocation.
    return pl.pallas_call(
        informer_kernel,
        out_shape=jax.ShapeDtypeStruct((B, N_CLASS), jnp.float32),
    )(xm, packed['mats'], packed['vecs'], packed['c64'], packed['c16'])


# ------------------------------ parameter packing ------------------------------
def init_params(key):
    keys = iter(jax.random.split(key, 64))

    def nrm(shape, scale=0.05):
        return (scale * jax.random.normal(next(keys), shape)).astype(jnp.float32)

    def pad_to(m, rows, cols):
        m = jnp.asarray(m, jnp.float32)
        out = jnp.zeros((rows, cols), jnp.float32)
        return out.at[:m.shape[0], :m.shape[1]].set(m)

    def pad_row(v):
        v = jnp.asarray(v, jnp.float32)
        return jnp.zeros((128,), jnp.float32).at[:v.shape[0]].set(v)

    scale = 1.0 / math.sqrt(DK)

    # ---- mats slab: all weight matrices (prefix content, zero-padded lanes) ----
    tok_w = nrm((TAPS, D))                       # stacked Conv1d taps [W_{l-1}; W_l; W_{l+1}]
    proj_w = nrm((L, D, N_CLASS))                # classification Linear(L*D, N) as (L, D, N)
    head_w2 = jnp.transpose(proj_w, (1, 0, 2)).reshape(D, LN)              # (32, 32)
    colsel = (jnp.arange(LN)[:, None] % N_CLASS ==
              jnp.arange(N_CLASS)[None, :]).astype(jnp.float32)            # (32, 4)

    mats_list = [tok_w, head_w2, colsel]
    vec_rows = []
    for _ in range(E_LAYERS):
        wq, wk, wv, wo = nrm((D, D)), nrm((D, D)), nrm((D, D)), nrm((D, D))
        bq, bk, bv, bo = nrm((D,)), nrm((D,)), nrm((D,)), nrm((D,))
        w1, bf1 = nrm((D, D_FF)), nrm((D_FF,))
        w2, bf2 = nrm((D_FF, D)), nrm((D,))
        mats_list += [jnp.concatenate([wq * scale, wk, wv], axis=1),       # (32, 96)
                      wo, w1, w2.T]
        vec_rows += [jnp.concatenate([bq * scale, bk, bv]), bo,
                     jnp.ones((D,), jnp.float32), jnp.zeros((D,), jnp.float32),   # g1, be1
                     bf1, bf2,
                     jnp.ones((D,), jnp.float32), jnp.zeros((D,), jnp.float32)]   # g2, be2
    # encoder final LayerNorm + classification bias + batch row-selector rows
    rowsel = (jnp.arange(BL)[None, :] // L ==
              jnp.arange(B)[:, None]).astype(jnp.float32)                  # (B, BL)
    vec_rows += [jnp.ones((D,), jnp.float32), jnp.zeros((D,), jnp.float32),
                 nrm((N_CLASS,)), rowsel[0], rowsel[1]]

    mats = jnp.stack([pad_to(m, D, 128) for m in mats_list])               # (11, 32, 128)
    vecs = jnp.stack([pad_row(v) for v in vec_rows])                       # (21, 128)

    # ---- 64-row constants: head lane-mask + additive (head,batch) block-diag mask ----
    lane96 = jnp.arange(3 * D)
    row64 = jnp.arange(HBL)
    head_mask = ((lane96[None, :] % D) // DK ==
                 row64[:, None] // BL).astype(jnp.float32)                 # (64, 96)
    attn_mask = jnp.where(row64[:, None] // L == row64[None, :] // L,
                          0.0, -1e30).astype(jnp.float32)                  # (64, 64)
    c64 = jnp.stack([pad_to(head_mask, HBL, 128), pad_to(attn_mask, HBL, 128)])

    # ---- 16-row constants: positional table, head-sum collapse, class-head mask ----
    pos = jnp.arange(L, dtype=jnp.float32)[:, None]
    div = jnp.exp(jnp.arange(0, D, 2, dtype=jnp.float32) * (-math.log(10000.0) / D))
    pe = jnp.zeros((L, D), jnp.float32)
    pe = pe.at[:, 0::2].set(jnp.sin(pos * div)).at[:, 1::2].set(jnp.cos(pos * div))
    pe = jnp.tile(pe, (B, 1))                                              # (16, 32)
    r16 = jnp.arange(BL)
    collapse = (jnp.arange(HBL)[None, :] % BL == r16[:, None]).astype(jnp.float32)   # (16, 64)
    head_msk = (r16[:, None] % L ==
                jnp.arange(LN)[None, :] // N_CLASS).astype(jnp.float32)    # (16, 32)
    c16 = jnp.stack([pad_to(pe, BL, 128), pad_to(collapse, BL, 128),
                     pad_to(head_msk, BL, 128)])

    return {'mats': mats, 'vecs': vecs, 'c64': c64, 'c16': c16}


# ----------------------------------- main --------------------------------------
if __name__ == "__main__":
    key = jax.random.PRNGKey(0)
    k1, k2, kp = jax.random.split(key, 3)

    x_enc = jax.random.normal(k1, (B, L, C_IN), dtype=jnp.float32)
    # x_mark_enc acts as a per-timestep padding mask in the classification path
    x_mark_enc = (jax.random.uniform(k2, (B, L)) > 0.2).astype(jnp.float32)
    # x_dec / x_mark_dec are unused for task_name == 'classification'

    packed = init_params(kp)

    logits = informer_classification(x_enc, x_mark_enc, packed)
    logits = jax.block_until_ready(logits)

    assert logits.shape == (B, N_CLASS), logits.shape
    assert bool(jnp.all(jnp.isfinite(logits)))
    print("KERNEL_OK")
</pallas_src>

<mosaic_0001>
module attributes {stable_mosaic.version = 11 : i64} {
  func.func @informer_kernel(%arg0: memref<16x13xf32, #tpu.memory_space<vmem>>, %arg1: memref<11x32x128xf32, #tpu.memory_space<vmem>>, %arg2: memref<21x128xf32, #tpu.memory_space<vmem>>, %arg3: memref<2x64x128xf32, #tpu.memory_space<vmem>>, %arg4: memref<3x16x128xf32, #tpu.memory_space<vmem>>, %arg5: memref<2x4xf32, #tpu.memory_space<vmem>>) attributes {dimension_semantics = [], scalar_prefetch = 0 : i64, scratch_operands = 0 : i64, tpu.core_type = #tpu.core_type<tc>} {
    %cst = arith.constant 3.125000e-02 : f32
    %0 = vector.broadcast %cst : f32 to vector<32x1xf32>
    %cst_0 = arith.constant 1.000000e+00 : f32
    %1 = vector.broadcast %cst_0 : f32 to vector<64x1xf32>
    %c0 = arith.constant 0 : index
    %c0_1 = arith.constant 0 : index
    %2 = vector.load %arg0[%c0, %c0_1] : memref<16x13xf32, #tpu.memory_space<vmem>>, vector<16x12xf32>
    %c0_2 = arith.constant 0 : index
    %c12 = arith.constant 12 : index
    %3 = vector.load %arg0[%c0_2, %c12] : memref<16x13xf32, #tpu.memory_space<vmem>>, vector<16x1xf32>
    %c0_3 = arith.constant 0 : index
    %c0_4 = arith.constant 0 : index
    %c0_5 = arith.constant 0 : index
    %4 = vector.load %arg1[%c0_3, %c0_4, %c0_5] : memref<11x32x128xf32, #tpu.memory_space<vmem>>, vector<1x12x32xf32>
    %5 = vector.shape_cast %4 : vector<1x12x32xf32> to vector<12x32xf32>
    %cst_6 = arith.constant dense<0.000000e+00> : vector<16x32xf32>
    %6 = tpu.matmul %2, %5, %cst_6 {dimension_numbers = #tpu.dot_dimension_numbers<[1], [0], [0], [1], [0, 0, 1, 1], [], []>} : vector<16x12xf32>, vector<12x32xf32>, vector<16x32xf32> -> vector<16x32xf32>
    %c0_7 = arith.constant 0 : index
    %c0_8 = arith.constant 0 : index
    %c0_9 = arith.constant 0 : index
    %7 = vector.load %arg4[%c0_7, %c0_8, %c0_9] : memref<3x16x128xf32, #tpu.memory_space<vmem>>, vector<1x16x32xf32>
    %8 = vector.shape_cast %7 : vector<1x16x32xf32> to vector<16x32xf32>
    %9 = arith.addf %6, %8 : vector<16x32xf32>
    %c0_10 = arith.constant 0 : index
    %c0_11 = arith.constant 0 : index
    %c0_12 = arith.constant 0 : index
    %10 = vector.load %arg3[%c0_10, %c0_11, %c0_12] : memref<2x64x128xf32, #tpu.memory_space<vmem>>, vector<1x64x96xf32>
    %11 = vector.shape_cast %10 : vector<1x64x96xf32> to vector<64x96xf32>
    %c1 = arith.constant 1 : index
    %c0_13 = arith.constant 0 : index
    %c0_14 = arith.constant 0 : index
    %12 = vector.load %arg3[%c1, %c0_13, %c0_14] : memref<2x64x128xf32, #tpu.memory_space<vmem>>, vector<1x64x64xf32>
    %13 = vector.shape_cast %12 : vector<1x64x64xf32> to vector<64x64xf32>
    %c1_15 = arith.constant 1 : index
    %c0_16 = arith.constant 0 : index
    %c0_17 = arith.constant 0 : index
    %14 = vector.load %arg4[%c1_15, %c0_16, %c0_17] : memref<3x16x128xf32, #tpu.memory_space<vmem>>, vector<1x16x64xf32>
    %15 = vector.shape_cast %14 : vector<1x16x64xf32> to vector<16x64xf32>
    %c3 = arith.constant 3 : index
    %c0_18 = arith.constant 0 : index
    %c0_19 = arith.constant 0 : index
    %16 = vector.load %arg1[%c3, %c0_18, %c0_19] : memref<11x32x128xf32, #tpu.memory_space<vmem>>, vector<1x32x96xf32>
    %17 = vector.shape_cast %16 : vector<1x32x96xf32> to vector<32x96xf32>
    %c4 = arith.constant 4 : index
    %c0_20 = arith.constant 0 : index
    %c0_21 = arith.constant 0 : index
    %18 = vector.load %arg1[%c4, %c0_20, %c0_21] : memref<11x32x128xf32, #tpu.memory_space<vmem>>, vector<1x32x32xf32>
    %19 = vector.shape_cast %18 : vector<1x32x32xf32> to vector<32x32xf32>
    %c5 = arith.constant 5 : index
    %c0_22 = arith.constant 0 : index
    %c0_23 = arith.constant 0 : index
    %20 = vector.load %arg1[%c5, %c0_22, %c0_23] : memref<11x32x128xf32, #tpu.memory_space<vmem>>, vector<1x32x64xf32>
    %21 = vector.shape_cast %20 : vector<1x32x64xf32> to vector<32x64xf32>
    %c6 = arith.constant 6 : index
    %c0_24 = arith.constant 0 : index
    %c0_25 = arith.constant 0 : index
    %22 = vector.load %arg1[%c6, %c0_24, %c0_25] : memref<11x32x128xf32, #tpu.memory_space<vmem>>, vector<1x32x64xf32>
    %23 = vector.shape_cast %22 : vector<1x32x64xf32> to vector<32x64xf32>
    %c0_26 = arith.constant 0 : index
    %c0_27 = arith.constant 0 : index
    %24 = vector.load %arg2[%c0_26, %c0_27] : memref<21x128xf32, #tpu.memory_space<vmem>>, vector<1x96xf32>
    %c1_28 = arith.constant 1 : index
    %c0_29 = arith.constant 0 : index
    %25 = vector.load %arg2[%c1_28, %c0_29] : memref<21x128xf32, #tpu.memory_space<vmem>>, vector<1x32xf32>
    %c2 = arith.constant 2 : index
    %c0_30 = arith.constant 0 : index
    %26 = vector.load %arg2[%c2, %c0_30] : memref<21x128xf32, #tpu.memory_space<vmem>>, vector<1x32xf32>
    %c3_31 = arith.constant 3 : index
    %c0_32 = arith.constant 0 : index
    %27 = vector.load %arg2[%c3_31, %c0_32] : memref<21x128xf32, #tpu.memory_space<vmem>>, vector<1x32xf32>
    %c4_33 = arith.constant 4 : index
    %c0_34 = arith.constant 0 : index
    %28 = vector.load %arg2[%c4_33, %c0_34] : memref<21x128xf32, #tpu.memory_space<vmem>>, vector<1x64xf32>
    %c5_35 = arith.constant 5 : index
    %c0_36 = arith.constant 0 : index
    %29 = vector.load %arg2[%c5_35, %c0_36] : memref<21x128xf32, #tpu.memory_space<vmem>>, vector<1x32xf32>
    %c6_37 = arith.constant 6 : index
    %c0_38 = arith.constant 0 : index
    %30 = vector.load %arg2[%c6_37, %c0_38] : memref<21x128xf32, #tpu.memory_space<vmem>>, vector<1x32xf32>
    %c7 = arith.constant 7 : index
    %c0_39 = arith.constant 0 : index
    %31 = vector.load %arg2[%c7, %c0_39] : memref<21x128xf32, #tpu.memory_space<vmem>>, vector<1x32xf32>
    %cst_40 = arith.constant dense<0.000000e+00> : vector<16x96xf32>
    %32 = tpu.matmul %9, %17, %cst_40 {dimension_numbers = #tpu.dot_dimension_numbers<[1], [0], [0], [1], [0, 0, 1, 1], [], []>} : vector<16x32xf32>, vector<32x96xf32>, vector<16x96xf32> -> vector<16x96xf32>
    %33 = vector.broadcast %24 : vector<1x96xf32> to vector<16x96xf32>
    %34 = arith.addf %32, %33 : vector<16x96xf32>
    %35 = tpu.concatenate %34, %34, %34, %34 in 0 : vector<16x96xf32>, vector<16x96xf32>, vector<16x96xf32>, vector<16x96xf32> -> vector<64x96xf32>
    %36 = arith.mulf %35, %11 : vector<64x96xf32>
    %37 = vector.extract_strided_slice %36 {offsets = [0, 0], sizes = [64, 32], strides = [1, 1]} : vector<64x96xf32> to vector<64x32xf32>
    %38 = vector.extract_strided_slice %36 {offsets = [0, 32], sizes = [64, 32], strides = [1, 1]} : vector<64x96xf32> to vector<64x32xf32>
    %39 = vector.extract_strided_slice %36 {offsets = [0, 64], sizes = [64, 32], strides = [1, 1]} : vector<64x96xf32> to vector<64x32xf32>
    %cst_41 = arith.constant dense<0.000000e+00> : vector<64x64xf32>
    %40 = tpu.matmul %37, %38, %cst_41 {dimension_numbers = #tpu.dot_dimension_numbers<[1], [1], [0], [0], [0, 0, 1, 0], [], []>} : vector<64x32xf32>, vector<64x32xf32>, vector<64x64xf32> -> vector<64x64xf32>
    %41 = arith.addf %40, %13 : vector<64x64xf32>
    %cst_42 = arith.constant dense<0xFF800000> : vector<64xf32>
    %42 = vector.multi_reduction <maximumf>, %41, %cst_42 [1] : vector<64x64xf32> to vector<64xf32>
    %43 = vector.shape_cast %42 : vector<64xf32> to vector<64x1xf32>
    %44 = vector.broadcast %43 : vector<64x1xf32> to vector<64x64xf32>
    %45 = arith.subf %41, %44 : vector<64x64xf32>
    %46 = math.exp %45 : vector<64x64xf32>
    %cst_43 = arith.constant dense<0.000000e+00> : vector<64x1xf32>
    %47 = tpu.matmul %46, %1, %cst_43 {dimension_numbers = #tpu.dot_dimension_numbers<[1], [0], [0], [1], [0, 0, 1, 1], [], []>} : vector<64x64xf32>, vector<64x1xf32>, vector<64x1xf32> -> vector<64x1xf32>
    %48 = tpu.reciprocal %47 : vector<64x1xf32> -> vector<64x1xf32>
    %49 = vector.broadcast %48 : vector<64x1xf32> to vector<64x64xf32>
    %50 = arith.mulf %46, %49 : vector<64x64xf32>
    %cst_44 = arith.constant dense<0.000000e+00> : vector<64x32xf32>
    %51 = tpu.matmul %50, %39, %cst_44 {dimension_numbers = #tpu.dot_dimension_numbers<[1], [0], [0], [1], [0, 0, 1, 1], [], []>} : vector<64x64xf32>, vector<64x32xf32>, vector<64x32xf32> -> vector<64x32xf32>
    %cst_45 = arith.constant dense<0.000000e+00> : vector<64x32xf32>
    %52 = tpu.matmul %51, %19, %cst_45 {dimension_numbers = #tpu.dot_dimension_numbers<[1], [0], [0], [1], [0, 0, 1, 1], [], []>} : vector<64x32xf32>, vector<32x32xf32>, vector<64x32xf32> -> vector<64x32xf32>
    %cst_46 = arith.constant dense<0.000000e+00> : vector<16x32xf32>
    %53 = tpu.matmul %15, %52, %cst_46 {dimension_numbers = #tpu.dot_dimension_numbers<[1], [0], [0], [1], [0, 0, 1, 1], [], []>} : vector<16x64xf32>, vector<64x32xf32>, vector<16x32xf32> -> vector<16x32xf32>
    %54 = vector.broadcast %25 : vector<1x32xf32> to vector<16x32xf32>
    %55 = arith.addf %53, %54 : vector<16x32xf32>
    %56 = arith.addf %9, %55 : vector<16x32xf32>
    %cst_47 = arith.constant dense<0.000000e+00> : vector<16x1xf32>
    %57 = tpu.matmul %56, %0, %cst_47 {dimension_numbers = #tpu.dot_dimension_numbers<[1], [0], [0], [1], [0, 0, 1, 1], [], []>} : vector<16x32xf32>, vector<32x1xf32>, vector<16x1xf32> -> vector<16x1xf32>
    %58 = vector.broadcast %57 : vector<16x1xf32> to vector<16x32xf32>
    %59 = arith.subf %56, %58 : vector<16x32xf32>
    %60 = arith.mulf %59, %59 : vector<16x32xf32>
    %cst_48 = arith.constant dense<0.000000e+00> : vector<16x1xf32>
    %61 = tpu.matmul %60, %0, %cst_48 {dimension_numbers = #tpu.dot_dimension_numbers<[1], [0], [0], [1], [0, 0, 1, 1], [], []>} : vector<16x32xf32>, vector<32x1xf32>, vector<16x1xf32> -> vector<16x1xf32>
    %cst_49 = arith.constant 9.99999974E-6 : f32
    %62 = vector.broadcast %cst_49 : f32 to vector<16x1xf32>
    %63 = arith.addf %61, %62 : vector<16x1xf32>
    %64 = math.rsqrt %63 : vector<16x1xf32>
    %65 = vector.broadcast %64 : vector<16x1xf32> to vector<16x32xf32>
    %66 = arith.mulf %59, %65 : vector<16x32xf32>
    %67 = vector.broadcast %26 : vector<1x32xf32> to vector<16x32xf32>
    %68 = arith.mulf %66, %67 : vector<16x32xf32>
    %69 = vector.broadcast %27 : vector<1x32xf32> to vector<16x32xf32>
    %70 = arith.addf %68, %69 : vector<16x32xf32>
    %cst_50 = arith.constant dense<0.000000e+00> : vector<16x64xf32>
    %71 = tpu.matmul %70, %21, %cst_50 {dimension_numbers = #tpu.dot_dimension_numbers<[1], [0], [0], [1], [0, 0, 1, 1], [], []>} : vector<16x32xf32>, vector<32x64xf32>, vector<16x64xf32> -> vector<16x64xf32>
    %72 = vector.broadcast %28 : vector<1x64xf32> to vector<16x64xf32>
    %73 = arith.addf %71, %72 : vector<16x64xf32>
    %cst_51 = arith.constant 5.000000e-01 : f32
    %74 = vector.broadcast %cst_51 : f32 to vector<16x64xf32>
    %75 = arith.mulf %74, %73 : vector<16x64xf32>
    %cst_52 = arith.constant 4.471500e-02 : f32
    %76 = vector.broadcast %cst_52 : f32 to vector<16x64xf32>
    %77 = arith.mulf %76, %73 : vector<16x64xf32>
    %78 = arith.mulf %77, %73 : vector<16x64xf32>
    %79 = arith.mulf %78, %73 : vector<16x64xf32>
    %80 = arith.addf %73, %79 : vector<16x64xf32>
    %cst_53 = arith.constant 0.797884583 : f32
    %81 = vector.broadcast %cst_53 : f32 to vector<16x64xf32>
    %82 = arith.mulf %81, %80 : vector<16x64xf32>
    %83 = math.tanh %82 : vector<16x64xf32>
    %cst_54 = arith.constant 1.000000e+00 : f32
    %84 = vector.broadcast %cst_54 : f32 to vector<16x64xf32>
    %85 = arith.addf %84, %83 : vector<16x64xf32>
    %86 = arith.mulf %75, %85 : vector<16x64xf32>
    %cst_55 = arith.constant dense<0.000000e+00> : vector<16x32xf32>
    %87 = tpu.matmul %86, %23, %cst_55 {dimension_numbers = #tpu.dot_dimension_numbers<[1], [1], [0], [0], [0, 0, 1, 0], [], []>} : vector<16x64xf32>, vector<32x64xf32>, vector<16x32xf32> -> vector<16x32xf32>
    %88 = vector.broadcast %29 : vector<1x32xf32> to vector<16x32xf32>
    %89 = arith.addf %87, %88 : vector<16x32xf32>
    %90 = arith.addf %70, %89 : vector<16x32xf32>
    %cst_56 = arith.constant dense<0.000000e+00> : vector<16x1xf32>
    %91 = tpu.matmul %90, %0, %cst_56 {dimension_numbers = #tpu.dot_dimension_numbers<[1], [0], [0], [1], [0, 0, 1, 1], [], []>} : vector<16x32xf32>, vector<32x1xf32>, vector<16x1xf32> -> vector<16x1xf32>
    %92 = vector.broadcast %91 : vector<16x1xf32> to vector<16x32xf32>
    %93 = arith.subf %90, %92 : vector<16x32xf32>
    %94 = arith.mulf %93, %93 : vector<16x32xf32>
    %cst_57 = arith.constant dense<0.000000e+00> : vector<16x1xf32>
    %95 = tpu.matmul %94, %0, %cst_57 {dimension_numbers = #tpu.dot_dimension_numbers<[1], [0], [0], [1], [0, 0, 1, 1], [], []>} : vector<16x32xf32>, vector<32x1xf32>, vector<16x1xf32> -> vector<16x1xf32>
    %cst_58 = arith.constant 9.99999974E-6 : f32
    %96 = vector.broadcast %cst_58 : f32 to vector<16x1xf32>
    %97 = arith.addf %95, %96 : vector<16x1xf32>
    %98 = math.rsqrt %97 : vector<16x1xf32>
    %99 = vector.broadcast %98 : vector<16x1xf32> to vector<16x32xf32>
    %100 = arith.mulf %93, %99 : vector<16x32xf32>
    %101 = vector.broadcast %30 : vector<1x32xf32> to vector<16x32xf32>
    %102 = arith.mulf %100, %101 : vector<16x32xf32>
    %103 = vector.broadcast %31 : vector<1x32xf32> to vector<16x32xf32>
    %104 = arith.addf %102, %103 : vector<16x32xf32>
    %c7_59 = arith.constant 7 : index
    %c0_60 = arith.constant 0 : index
    %c0_61 = arith.constant 0 : index
    %105 = vector.load %arg1[%c7_59, %c0_60, %c0_61] : memref<11x32x128xf32, #tpu.memory_space<vmem>>, vector<1x32x96xf32>
    %106 = vector.shape_cast %105 : vector<1x32x96xf32> to vector<32x96xf32>
    %c8 = arith.constant 8 : index
    %c0_62 = arith.constant 0 : index
    %c0_63 = arith.constant 0 : index
    %107 = vector.load %arg1[%c8, %c0_62, %c0_63] : memref<11x32x128xf32, #tpu.memory_space<vmem>>, vector<1x32x32xf32>
    %108 = vector.shape_cast %107 : vector<1x32x32xf32> to vector<32x32xf32>
    %c9 = arith.constant 9 : index
    %c0_64 = arith.constant 0 : index
    %c0_65 = arith.constant 0 : index
    %109 = vector.load %arg1[%c9, %c0_64, %c0_65] : memref<11x32x128xf32, #tpu.memory_space<vmem>>, vector<1x32x64xf32>
    %110 = vector.shape_cast %109 : vector<1x32x64xf32> to vector<32x64xf32>
    %c10 = arith.constant 10 : index
    %c0_66 = arith.constant 0 : index
    %c0_67 = arith.constant 0 : index
    %111 = vector.load %arg1[%c10, %c0_66, %c0_67] : memref<11x32x128xf32, #tpu.memory_space<vmem>>, vector<1x32x64xf32>
    %112 = vector.shape_cast %111 : vector<1x32x64xf32> to vector<32x64xf32>
    %c8_68 = arith.constant 8 : index
    %c0_69 = arith.constant 0 : index
    %113 = vector.load %arg2[%c8_68, %c0_69] : memref<21x128xf32, #tpu.memory_space<vmem>>, vector<1x96xf32>
    %c9_70 = arith.constant 9 : index
    %c0_71 = arith.constant 0 : index
    %114 = vector.load %arg2[%c9_70, %c0_71] : memref<21x128xf32, #tpu.memory_space<vmem>>, vector<1x32xf32>
    %c10_72 = arith.constant 10 : index
    %c0_73 = arith.constant 0 : index
    %115 = vector.load %arg2[%c10_72, %c0_73] : memref<21x128xf32, #tpu.memory_space<vmem>>, vector<1x32xf32>
    %c11 = arith.constant 11 : index
    %c0_74 = arith.constant 0 : index
    %116 = vector.load %arg2[%c11, %c0_74] : memref<21x128xf32, #tpu.memory_space<vmem>>, vector<1x32xf32>
    %c12_75 = arith.constant 12 : index
    %c0_76 = arith.constant 0 : index
    %117 = vector.load %arg2[%c12_75, %c0_76] : memref<21x128xf32, #tpu.memory_space<vmem>>, vector<1x64xf32>
    %c13 = arith.constant 13 : index
    %c0_77 = arith.constant 0 : index
    %118 = vector.load %arg2[%c13, %c0_77] : memref<21x128xf32, #tpu.memory_space<vmem>>, vector<1x32xf32>
    %c14 = arith.constant 14 : index
    %c0_78 = arith.constant 0 : index
    %119 = vector.load %arg2[%c14, %c0_78] : memref<21x128xf32, #tpu.memory_space<vmem>>, vector<1x32xf32>
    %c15 = arith.constant 15 : index
    %c0_79 = arith.constant 0 : index
    %120 = vector.load %arg2[%c15, %c0_79] : memref<21x128xf32, #tpu.memory_space<vmem>>, vector<1x32xf32>
    %cst_80 = arith.constant dense<0.000000e+00> : vector<16x96xf32>
    %121 = tpu.matmul %104, %106, %cst_80 {dimension_numbers = #tpu.dot_dimension_numbers<[1], [0], [0], [1], [0, 0, 1, 1], [], []>} : vector<16x32xf32>, vector<32x96xf32>, vector<16x96xf32> -> vector<16x96xf32>
    %122 = vector.broadcast %113 : vector<1x96xf32> to vector<16x96xf32>
    %123 = arith.addf %121, %122 : vector<16x96xf32>
    %124 = tpu.concatenate %123, %123, %123, %123 in 0 : vector<16x96xf32>, vector<16x96xf32>, vector<16x96xf32>, vector<16x96xf32> -> vector<64x96xf32>
    %125 = arith.mulf %124, %11 : vector<64x96xf32>
    %126 = vector.extract_strided_slice %125 {offsets = [0, 0], sizes = [64, 32], strides = [1, 1]} : vector<64x96xf32> to vector<64x32xf32>
    %127 = vector.extract_strided_slice %125 {offsets = [0, 32], sizes = [64, 32], strides = [1, 1]} : vector<64x96xf32> to vector<64x32xf32>
    %128 = vector.extract_strided_slice %125 {offsets = [0, 64], sizes = [64, 32], strides = [1, 1]} : vector<64x96xf32> to vector<64x32xf32>
    %cst_81 = arith.constant dense<0.000000e+00> : vector<64x64xf32>
    %129 = tpu.matmul %126, %127, %cst_81 {dimension_numbers = #tpu.dot_dimension_numbers<[1], [1], [0], [0], [0, 0, 1, 0], [], []>} : vector<64x32xf32>, vector<64x32xf32>, vector<64x64xf32> -> vector<64x64xf32>
    %130 = arith.addf %129, %13 : vector<64x64xf32>
    %cst_82 = arith.constant dense<0xFF800000> : vector<64xf32>
    %131 = vector.multi_reduction <maximumf>, %130, %cst_82 [1] : vector<64x64xf32> to vector<64xf32>
    %132 = vector.shape_cast %131 : vector<64xf32> to vector<64x1xf32>
    %133 = vector.broadcast %132 : vector<64x1xf32> to vector<64x64xf32>
    %134 = arith.subf %130, %133 : vector<64x64xf32>
    %135 = math.exp %134 : vector<64x64xf32>
    %cst_83 = arith.constant dense<0.000000e+00> : vector<64x1xf32>
    %136 = tpu.matmul %135, %1, %cst_83 {dimension_numbers = #tpu.dot_dimension_numbers<[1], [0], [0], [1], [0, 0, 1, 1], [], []>} : vector<64x64xf32>, vector<64x1xf32>, vector<64x1xf32> -> vector<64x1xf32>
    %137 = tpu.reciprocal %136 : vector<64x1xf32> -> vector<64x1xf32>
    %138 = vector.broadcast %137 : vector<64x1xf32> to vector<64x64xf32>
    %139 = arith.mulf %135, %138 : vector<64x64xf32>
    %cst_84 = arith.constant dense<0.000000e+00> : vector<64x32xf32>
    %140 = tpu.matmul %139, %128, %cst_84 {dimension_numbers = #tpu.dot_dimension_numbers<[1], [0], [0], [1], [0, 0, 1, 1], [], []>} : vector<64x64xf32>, vector<64x32xf32>, vector<64x32xf32> -> vector<64x32xf32>
    %cst_85 = arith.constant dense<0.000000e+00> : vector<64x32xf32>
    %141 = tpu.matmul %140, %108, %cst_85 {dimension_numbers = #tpu.dot_dimension_numbers<[1], [0], [0], [1], [0, 0, 1, 1], [], []>} : vector<64x32xf32>, vector<32x32xf32>, vector<64x32xf32> -> vector<64x32xf32>
    %cst_86 = arith.constant dense<0.000000e+00> : vector<16x32xf32>
    %142 = tpu.matmul %15, %141, %cst_86 {dimension_numbers = #tpu.dot_dimension_numbers<[1], [0], [0], [1], [0, 0, 1, 1], [], []>} : vector<16x64xf32>, vector<64x32xf32>, vector<16x32xf32> -> vector<16x32xf32>
    %143 = vector.broadcast %114 : vector<1x32xf32> to vector<16x32xf32>
    %144 = arith.addf %142, %143 : vector<16x32xf32>
    %145 = arith.addf %104, %144 : vector<16x32xf32>
    %cst_87 = arith.constant dense<0.000000e+00> : vector<16x1xf32>
    %146 = tpu.matmul %145, %0, %cst_87 {dimension_numbers = #tpu.dot_dimension_numbers<[1], [0], [0], [1], [0, 0, 1, 1], [], []>} : vector<16x32xf32>, vector<32x1xf32>, vector<16x1xf32> -> vector<16x1xf32>
    %147 = vector.broadcast %146 : vector<16x1xf32> to vector<16x32xf32>
    %148 = arith.subf %145, %147 : vector<16x32xf32>
    %149 = arith.mulf %148, %148 : vector<16x32xf32>
    %cst_88 = arith.constant dense<0.000000e+00> : vector<16x1xf32>
    %150 = tpu.matmul %149, %0, %cst_88 {dimension_numbers = #tpu.dot_dimension_numbers<[1], [0], [0], [1], [0, 0, 1, 1], [], []>} : vector<16x32xf32>, vector<32x1xf32>, vector<16x1xf32> -> vector<16x1xf32>
    %cst_89 = arith.constant 9.99999974E-6 : f32
    %151 = vector.broadcast %cst_89 : f32 to vector<16x1xf32>
    %152 = arith.addf %150, %151 : vector<16x1xf32>
    %153 = math.rsqrt %152 : vector<16x1xf32>
    %154 = vector.broadcast %153 : vector<16x1xf32> to vector<16x32xf32>
    %155 = arith.mulf %148, %154 : vector<16x32xf32>
    %156 = vector.broadcast %115 : vector<1x32xf32> to vector<16x32xf32>
    %157 = arith.mulf %155, %156 : vector<16x32xf32>
    %158 = vector.broadcast %116 : vector<1x32xf32> to vector<16x32xf32>
    %159 = arith.addf %157, %158 : vector<16x32xf32>
    %cst_90 = arith.constant dense<0.000000e+00> : vector<16x64xf32>
    %160 = tpu.matmul %159, %110, %cst_90 {dimension_numbers = #tpu.dot_dimension_numbers<[1], [0], [0], [1], [0, 0, 1, 1], [], []>} : vector<16x32xf32>, vector<32x64xf32>, vector<16x64xf32> -> vector<16x64xf32>
    %161 = vector.broadcast %117 : vector<1x64xf32> to vector<16x64xf32>
    %162 = arith.addf %160, %161 : vector<16x64xf32>
    %cst_91 = arith.constant 5.000000e-01 : f32
    %163 = vector.broadcast %cst_91 : f32 to vector<16x64xf32>
    %164 = arith.mulf %163, %162 : vector<16x64xf32>
    %cst_92 = arith.constant 4.471500e-02 : f32
    %165 = vector.broadcast %cst_92 : f32 to vector<16x64xf32>
    %166 = arith.mulf %165, %162 : vector<16x64xf32>
    %167 = arith.mulf %166, %162 : vector<16x64xf32>
    %168 = arith.mulf %167, %162 : vector<16x64xf32>
    %169 = arith.addf %162, %168 : vector<16x64xf32>
    %cst_93 = arith.constant 0.797884583 : f32
    %170 = vector.broadcast %cst_93 : f32 to vector<16x64xf32>
    %171 = arith.mulf %170, %169 : vector<16x64xf32>
    %172 = math.tanh %171 : vector<16x64xf32>
    %cst_94 = arith.constant 1.000000e+00 : f32
    %173 = vector.broadcast %cst_94 : f32 to vector<16x64xf32>
    %174 = arith.addf %173, %172 : vector<16x64xf32>
    %175 = arith.mulf %164, %174 : vector<16x64xf32>
    %cst_95 = arith.constant dense<0.000000e+00> : vector<16x32xf32>
    %176 = tpu.matmul %175, %112, %cst_95 {dimension_numbers = #tpu.dot_dimension_numbers<[1], [1], [0], [0], [0, 0, 1, 0], [], []>} : vector<16x64xf32>, vector<32x64xf32>, vector<16x32xf32> -> vector<16x32xf32>
    %177 = vector.broadcast %118 : vector<1x32xf32> to vector<16x32xf32>
    %178 = arith.addf %176, %177 : vector<16x32xf32>
    %179 = arith.addf %159, %178 : vector<16x32xf32>
    %cst_96 = arith.constant dense<0.000000e+00> : vector<16x1xf32>
    %180 = tpu.matmul %179, %0, %cst_96 {dimension_numbers = #tpu.dot_dimension_numbers<[1], [0], [0], [1], [0, 0, 1, 1], [], []>} : vector<16x32xf32>, vector<32x1xf32>, vector<16x1xf32> -> vector<16x1xf32>
    %181 = vector.broadcast %180 : vector<16x1xf32> to vector<16x32xf32>
    %182 = arith.subf %179, %181 : vector<16x32xf32>
    %183 = arith.mulf %182, %182 : vector<16x32xf32>
    %cst_97 = arith.constant dense<0.000000e+00> : vector<16x1xf32>
    %184 = tpu.matmul %183, %0, %cst_97 {dimension_numbers = #tpu.dot_dimension_numbers<[1], [0], [0], [1], [0, 0, 1, 1], [], []>} : vector<16x32xf32>, vector<32x1xf32>, vector<16x1xf32> -> vector<16x1xf32>
    %cst_98 = arith.constant 9.99999974E-6 : f32
    %185 = vector.broadcast %cst_98 : f32 to vector<16x1xf32>
    %186 = arith.addf %184, %185 : vector<16x1xf32>
    %187 = math.rsqrt %186 : vector<16x1xf32>
    %188 = vector.broadcast %187 : vector<16x1xf32> to vector<16x32xf32>
    %189 = arith.mulf %182, %188 : vector<16x32xf32>
    %190 = vector.broadcast %119 : vector<1x32xf32> to vector<16x32xf32>
    %191 = arith.mulf %189, %190 : vector<16x32xf32>
    %192 = vector.broadcast %120 : vector<1x32xf32> to vector<16x32xf32>
    %193 = arith.addf %191, %192 : vector<16x32xf32>
    %c16 = arith.constant 16 : index
    %c0_99 = arith.constant 0 : index
    %194 = vector.load %arg2[%c16, %c0_99] : memref<21x128xf32, #tpu.memory_space<vmem>>, vector<1x32xf32>
    %c17 = arith.constant 17 : index
    %c0_100 = arith.constant 0 : index
    %195 = vector.load %arg2[%c17, %c0_100] : memref<21x128xf32, #tpu.memory_space<vmem>>, vector<1x32xf32>
    %cst_101 = arith.constant dense<0.000000e+00> : vector<16x1xf32>
    %196 = tpu.matmul %193, %0, %cst_101 {dimension_numbers = #tpu.dot_dimension_numbers<[1], [0], [0], [1], [0, 0, 1, 1], [], []>} : vector<16x32xf32>, vector<32x1xf32>, vector<16x1xf32> -> vector<16x1xf32>
    %197 = vector.broadcast %196 : vector<16x1xf32> to vector<16x32xf32>
    %198 = arith.subf %193, %197 : vector<16x32xf32>
    %199 = arith.mulf %198, %198 : vector<16x32xf32>
    %cst_102 = arith.constant dense<0.000000e+00> : vector<16x1xf32>
    %200 = tpu.matmul %199, %0, %cst_102 {dimension_numbers = #tpu.dot_dimension_numbers<[1], [0], [0], [1], [0, 0, 1, 1], [], []>} : vector<16x32xf32>, vector<32x1xf32>, vector<16x1xf32> -> vector<16x1xf32>
    %cst_103 = arith.constant 9.99999974E-6 : f32
    %201 = vector.broadcast %cst_103 : f32 to vector<16x1xf32>
    %202 = arith.addf %200, %201 : vector<16x1xf32>
    %203 = math.rsqrt %202 : vector<16x1xf32>
    %204 = vector.broadcast %203 : vector<16x1xf32> to vector<16x32xf32>
    %205 = arith.mulf %198, %204 : vector<16x32xf32>
    %206 = vector.broadcast %194 : vector<1x32xf32> to vector<16x32xf32>
    %207 = arith.mulf %205, %206 : vector<16x32xf32>
    %208 = vector.broadcast %195 : vector<1x32xf32> to vector<16x32xf32>
    %209 = arith.addf %207, %208 : vector<16x32xf32>
    %cst_104 = arith.constant 5.000000e-01 : f32
    %210 = vector.broadcast %cst_104 : f32 to vector<16x32xf32>
    %211 = arith.mulf %210, %209 : vector<16x32xf32>
    %cst_105 = arith.constant 4.471500e-02 : f32
    %212 = vector.broadcast %cst_105 : f32 to vector<16x32xf32>
    %213 = arith.mulf %212, %209 : vector<16x32xf32>
    %214 = arith.mulf %213, %209 : vector<16x32xf32>
    %215 = arith.mulf %214, %209 : vector<16x32xf32>
    %216 = arith.addf %209, %215 : vector<16x32xf32>
    %cst_106 = arith.constant 0.797884583 : f32
    %217 = vector.broadcast %cst_106 : f32 to vector<16x32xf32>
    %218 = arith.mulf %217, %216 : vector<16x32xf32>
    %219 = math.tanh %218 : vector<16x32xf32>
    %cst_107 = arith.constant 1.000000e+00 : f32
    %220 = vector.broadcast %cst_107 : f32 to vector<16x32xf32>
    %221 = arith.addf %220, %219 : vector<16x32xf32>
    %222 = arith.mulf %211, %221 : vector<16x32xf32>
    %223 = vector.broadcast %3 : vector<16x1xf32> to vector<16x32xf32>
    %224 = arith.mulf %222, %223 : vector<16x32xf32>
    %c1_108 = arith.constant 1 : index
    %c0_109 = arith.constant 0 : index
    %c0_110 = arith.constant 0 : index
    %225 = vector.load %arg1[%c1_108, %c0_109, %c0_110] : memref<11x32x128xf32, #tpu.memory_space<vmem>>, vector<1x32x32xf32>
    %226 = vector.shape_cast %225 : vector<1x32x32xf32> to vector<32x32xf32>
    %cst_111 = arith.constant dense<0.000000e+00> : vector<16x32xf32>
    %227 = tpu.matmul %224, %226, %cst_111 {dimension_numbers = #tpu.dot_dimension_numbers<[1], [0], [0], [1], [0, 0, 1, 1], [], []>} : vector<16x32xf32>, vector<32x32xf32>, vector<16x32xf32> -> vector<16x32xf32>
    %c2_112 = arith.constant 2 : index
    %c0_113 = arith.constant 0 : index
    %c0_114 = arith.constant 0 : index
    %228 = vector.load %arg4[%c2_112, %c0_113, %c0_114] : memref<3x16x128xf32, #tpu.memory_space<vmem>>, vector<1x16x32xf32>
    %229 = vector.shape_cast %228 : vector<1x16x32xf32> to vector<16x32xf32>
    %230 = arith.mulf %227, %229 : vector<16x32xf32>
    %c2_115 = arith.constant 2 : index
    %c0_116 = arith.constant 0 : index
    %c0_117 = arith.constant 0 : index
    %231 = vector.load %arg1[%c2_115, %c0_116, %c0_117] : memref<11x32x128xf32, #tpu.memory_space<vmem>>, vector<1x32x4xf32>
    %232 = vector.shape_cast %231 : vector<1x32x4xf32> to vector<32x4xf32>
    %cst_118 = arith.constant dense<0.000000e+00> : vector<16x4xf32>
    %233 = tpu.matmul %230, %232, %cst_118 {dimension_numbers = #tpu.dot_dimension_numbers<[1], [0], [0], [1], [0, 0, 1, 1], [], []>} : vector<16x32xf32>, vector<32x4xf32>, vector<16x4xf32> -> vector<16x4xf32>
    %c19 = arith.constant 19 : index
    %c0_119 = arith.constant 0 : index
    %234 = vector.load %arg2[%c19, %c0_119] : memref<21x128xf32, #tpu.memory_space<vmem>>, vector<2x16xf32>
    %cst_120 = arith.constant dense<0.000000e+00> : vector<2x4xf32>
    %235 = tpu.matmul %234, %233, %cst_120 {dimension_numbers = #tpu.dot_dimension_numbers<[1], [0], [0], [1], [0, 0, 1, 1], [], []>} : vector<2x16xf32>, vector<16x4xf32>, vector<2x4xf32> -> vector<2x4xf32>
    %c18 = arith.constant 18 : index
    %c0_121 = arith.constant 0 : index
    %236 = vector.load %arg2[%c18, %c0_121] : memref<21x128xf32, #tpu.memory_space<vmem>>, vector<1x4xf32>
    %237 = vector.broadcast %236 : vector<1x4xf32> to vector<2x4xf32>
    %238 = arith.addf %235, %237 : vector<2x4xf32>
    %c0_122 = arith.constant 0 : index
    %c0_123 = arith.constant 0 : index
    %239 = vector.load %arg5[%c0_122, %c0_123] : memref<2x4xf32, #tpu.memory_space<vmem>>, vector<2x4xf32>
    tpu.vector_store %arg5[%c0_122, %c0_123], %238 {strides = array<i32>} : memref<2x4xf32, #tpu.memory_space<vmem>>, vector<2x4xf32>,
    return
  }
}

</mosaic_0001>

<llo_original>
// kernel: informer_classification.1
$region0: #{informer_classification.1}
  #allocation0 [shape = 'u32[]', space=smem, size = 0x4, offset = 0x4, fixed_abs, tag = 'smem constant byte address 0x4 - core index']
  #allocation1 [shape = 'u32[144,128]{1,0:T(1,128)}', space=vmem, size = 0x12000, scoped, tag = 'internal scratch']
  %s0 = inlined_call_operand.vmem [shape: f32[16,13], index: 0, kind: input, shape index: {}]
  %s1 = inlined_call_operand.hbm [shape: f32[11,32,128], index: 1, kind: input, shape index: {}]
  %s2 = inlined_call_operand.vmem [shape: f32[21,128], index: 2, kind: input, shape index: {}]
  %s3 = inlined_call_operand.vmem [shape: f32[2,64,128], index: 3, kind: input, shape index: {}]
  %s4 = inlined_call_operand.vmem [shape: f32[3,16,128], index: 4, kind: input, shape index: {}]
  %s5 = inlined_call_operand.hbm [shape: f32[2,4], index: 5, kind: output, shape index: {}]
  %s6 = sld [smem:[#allocation0]]
  $region34: #{informer_classification.1} parent=0
    _
  %s8 = ssub.s32 1, %s6
  %s9 = scalar_select 0, %s8, %s6
  $region1: #{informer_classification.1} parent=0
    #allocation2 [shape = 'u8[180224]{0}', space=vmem, size = 0x2c000, scoped, tag = 'input window, operand 1, single buffered']
    #allocation3 [shape = 's32[1]{0}', space=sflag, size = 0x4, scoped, tag = 'scoped memory for informer_classification.1']
    #allocation4 [shape = 's32[1]{0}', space=sflag, size = 0x4, scoped, tag = 'scoped memory for informer_classification.1']
    #allocation5 [shape = 'u8[1024]{0}', space=vmem, size = 0x400, scoped, tag = 'output window, operand 0, single buffered']
    %10 = vsyncpa [#allocation3], 0
    %11 = vsyncpa [#allocation4], 0
    // Predicated region
    $region2: #{informer_classification.1} parent=1 // pred_check
      _
    $region3: #{informer_classification.1} parent=1 // pred_check_branch
      %13 = sbr.rel (0) target = $region5
    $region4: #{informer_classification.1} parent=1 // pred_region
      _
    $region5: #{informer_classification.1} parent=1 // pred_fallthru
      _
    // Predicated region
    $region6: #{informer_classification.1} parent=1 // pred_check
      _
    $region7: #{informer_classification.1} parent=1 // pred_check_branch
      %15 = sbr.rel (0) target = $region9
    $region8: #{informer_classification.1} parent=1 // pred_region
      %s17 = ssub.s32 5632, 5632
      %18 = vsyncadd [#allocation3], %s17
      %s19 = sshll.u32 [#allocation2], 4
      %s20 = int_to_ptr.vmem [resolvable:$true] %s19
      %25 = dma.hbm_to_vmem [thread:$0]  %s1, 5632, %s20, [#allocation3], 128, 128, 8
    $region9: #{informer_classification.1} parent=1 // pred_fallthru
      _
    // Predicated region
    $region10: #{informer_classification.1} parent=1 // pred_check
      _
    $region11: #{informer_classification.1} parent=1 // pred_check_branch
      %27 = sbr.rel (0) target = $region13
    $region12: #{informer_classification.1} parent=1 // pred_region
      _
    $region13: #{informer_classification.1} parent=1 // pred_fallthru
      _
    // Predicated region
    $region14: #{informer_classification.1} parent=1 // pred_check
      _
    $region15: #{informer_classification.1} parent=1 // pred_check_branch
      %29 = sbr.rel (0) target = $region17
    $region16: #{informer_classification.1} parent=1 // pred_region
      _
    $region17: #{informer_classification.1} parent=1 // pred_fallthru
      _
    // Predicated region
    $region18: #{informer_classification.1} parent=1 // pred_check
      _
    $region19: #{informer_classification.1} parent=1 // pred_check_branch
      %31 = sbr.rel (0) target = $region21
    $region20: #{informer_classification.1} parent=1 // pred_region
      _
    $region21: #{informer_classification.1} parent=1 // pred_fallthru
      _
    // Predicated region
    $region22: #{informer_classification.1} parent=1 // pred_check
      _
    $region23: #{informer_classification.1} parent=1 // pred_check_branch
      %33 = sbr.rel (0) target = $region25
    $region24: #{informer_classification.1} parent=1 // pred_region
      %34 = dma.done [#allocation3], 5632
    $region25: #{informer_classification.1} parent=1 // pred_fallthru
      _
    %v35 = vld [vmem:[%s0] sm:$0xff]
    %v36 = vld [vmem:[%s0 + $0x8] sm:$0xff]
    %v37 = vld [vmem:[#allocation2] sm:$0xff]
    %v38 = vld [vmem:[#allocation2 + $0x8] sm:$0xf]
    %v39 = vld [vmem:[%s4] sm:$0xff]
    %v40 = vld [vmem:[%s4 + $0x8] sm:$0xff]
    %vm41 = vcmask 97280
    %v43 = vsel %vm41, %v35, 0
    %v46 = vsel %vm41, %v36, 0
    %vm48 = vcmask 1043456
    %v50 = vsel %vm48, %v38, 0
    %52 = vmatprep.subr.mxu0 0.0
    %53 = vmatpush1.msra.mxu0 %v37
    %54 = vmatprep.subr.mxu0 0.0
    %55 = vmatpush1.msra.mxu0 %v50
    %56 = vmatprep.subr.mxu0 0.0
    %57 = vmatpush1.msra.mxu0 0.0
    %58 = vmatprep.subr.mxu0 0.0
    %59 = vmatpush1.msra.mxu0 0.0
    %60 = vmatprep.subr.mxu0 0.0
    %61 = vmatpush1.msra.mxu0 0.0
    %62 = vmatprep.subr.mxu0 0.0
    %63 = vmatpush1.msra.mxu0 0.0
    %64 = vmatprep.subr.mxu0 0.0
    %65 = vmatpush1.msra.mxu0 0.0
    %66 = vmatprep.subr.mxu0 0.0
    %67 = vmatpush1.msra.mxu0 0.0
    %68 = vmatprep.subr.mxu0 0.0
    %69 = vmatpush1.msra.mxu0 0.0
    %70 = vmatprep.subr.mxu0 0.0
    %71 = vmatpush1.msra.mxu0 0.0
    %72 = vmatprep.subr.mxu0 0.0
    %73 = vmatpush1.msra.mxu0 0.0
    %74 = vmatprep.subr.mxu0 0.0
    %75 = vmatpush1.msra.mxu0 0.0
    %76 = vmatprep.subr.mxu0 0.0
    %77 = vmatpush1.msra.mxu0 0.0
    %78 = vmatprep.subr.mxu0 0.0
    %79 = vmatpush1.msra.mxu0 0.0
    %80 = vmatprep.subr.mxu0 0.0
    %81 = vmatpush1.msra.mxu0 0.0
    %82 = vmatprep.subr.mxu0 0.0
    %83 = vmatpush1.msra.mxu0 0.0
    %84 = vmatprep.subr.mxu0 0.0
    %85 = vmatpush1.msra.mxu0 0.0
    %86 = vmatprep.subr.mxu0 0.0
    %87 = vmatpush1.msra.mxu0 0.0
    %88 = vmatprep.subr.mxu0 0.0
    %89 = vmatpush1.msra.mxu0 0.0
    %90 = vmatprep.subr.mxu0 0.0
    %91 = vmatpush1.msra.mxu0 0.0
    %92 = vmatprep.subr.mxu0 0.0
    %93 = vmatpush1.msra.mxu0 0.0
    %94 = vmatprep.subr.mxu0 0.0
    %95 = vmatpush1.msra.mxu0 0.0
    %96 = vmatprep.subr.mxu0 0.0
    %97 = vmatpush1.msra.mxu0 0.0
    %98 = vmatprep.subr.mxu0 0.0
    %99 = vmatpush1.msra.mxu0 0.0
    %100 = vmatprep.subr.mxu0 0.0
    %101 = vmatpush1.msra.mxu0 0.0
    %102 = vmatprep.subr.mxu0 0.0
    %103 = vmatpush1.msra.mxu0 0.0
    %104 = vmatprep.subr.mxu0 0.0
    %105 = vmatpush1.msra.mxu0 0.0
    %106 = vmatprep.subr.mxu0 0.0
    %107 = vmatpush1.msra.mxu0 0.0
    %108 = vmatprep.subr.mxu0 0.0
    %109 = vmatpush1.msra.mxu0 0.0
    %110 = vmatprep.subr.mxu0 0.0
    %111 = vmatpush1.msra.mxu0 0.0
    %112 = vmatprep.subr.mxu0 0.0
    %113 = vmatpush1.msra.mxu0 0.0
    %114 = vmatprep.subr.mxu0 0.0
    %115 = vmatpush1.msra.mxu0 0.0
    %116 = vmatprep.mubr.f32.mxu0 0.0
    %117 = vmatmul.mubr.f32.gmra.mrb[0].mxu0 %v43
    %v118 = vpop.f32.mrb[0].mxu0
    %v119 = vadd.f32 %v39, %v118
    %v120 = vpop.f32.mrb[0].mxu0
    %121 = vmatprep.mubr.f32.mxu0 0.0
    %122 = vmatmul.mubr.f32.gmra.mrb[0].mxu0 %v46
    %v123 = vpop.f32.mrb[0].mxu0
    %v124 = vadd.f32 %v40, %v123
    %v125 = vpop.f32.mrb[0].mxu0
    %126 = vdwg.mxu0
    %v127 = vld [vmem:[%s3] sm:$0xff]
    %v128 = vld [vmem:[%s3 + $0x8] sm:$0xff]
    %v129 = vld [vmem:[%s3 + $0x10] sm:$0xff]
    %v130 = vld [vmem:[%s3 + $0x18] sm:$0xff]
    %v131 = vld [vmem:[%s3 + $0x20] sm:$0xff]
    %v132 = vld [vmem:[%s3 + $0x28] sm:$0xff]
    %v133 = vld [vmem:[%s3 + $0x30] sm:$0xff]
    %v134 = vld [vmem:[%s3 + $0x38] sm:$0xff]
    %s135 = scalar_lea.vmem %s3, 64
    %v136 = vld [vmem:[%s135] sm:$0xff]
    %v137 = vld [vmem:[%s135 + $0x8] sm:$0xff]
    %v138 = vld [vmem:[%s135 + $0x10] sm:$0xff]
    %v139 = vld [vmem:[%s135 + $0x18] sm:$0xff]
    %v140 = vld [vmem:[%s135 + $0x20] sm:$0xff]
    %v141 = vld [vmem:[%s135 + $0x28] sm:$0xff]
    %v142 = vld [vmem:[%s135 + $0x30] sm:$0xff]
    %v143 = vld [vmem:[%s135 + $0x38] sm:$0xff]
    %s144 = scalar_lea.vmem %s4, 16
    %v145 = vld [vmem:[%s144] sm:$0xff]
    %v146 = vld [vmem:[%s144 + $0x8] sm:$0xff]
    %s147 = scalar_lea.vmem [#allocation2], 96
    %v148 = vld [vmem:[%s147] sm:$0xff]
    %v149 = vld [vmem:[%s147 + $0x8] sm:$0xff]
    %v150 = vld [vmem:[%s147 + $0x10] sm:$0xff]
    %v151 = vld [vmem:[%s147 + $0x18] sm:$0xff]
    %s152 = scalar_lea.vmem [#allocation2], 128
    %v153 = vld [vmem:[%s152] sm:$0xff]
    %v154 = vld [vmem:[%s152 + $0x8] sm:$0xff]
    %v155 = vld [vmem:[%s152 + $0x10] sm:$0xff]
    %v156 = vld [vmem:[%s152 + $0x18] sm:$0xff]
    %s157 = scalar_lea.vmem [#allocation2], 160
    %v158 = vld [vmem:[%s157] sm:$0xff]
    %v159 = vld [vmem:[%s157 + $0x8] sm:$0xff]
    %v160 = vld [vmem:[%s157 + $0x10] sm:$0xff]
    %v161 = vld [vmem:[%s157 + $0x18] sm:$0xff]
    %s162 = scalar_lea.vmem [#allocation2], 192
    %v163 = vld [vmem:[%s162] sm:$0xff]
    %v164 = vld [vmem:[%s162 + $0x8] sm:$0xff]
    %v165 = vld [vmem:[%s162 + $0x10] sm:$0xff]
    %v166 = vld [vmem:[%s162 + $0x18] sm:$0xff]
    %v167 = vld [vmem:[%s2] sm:$0x1]
    %v168 = vld [vmem:[%s2 + $0x1] sm:$0x1]
    %v169 = vld [vmem:[%s2 + $0x2] sm:$0x1]
    %v170 = vld [vmem:[%s2 + $0x3] sm:$0x1]
    %v171 = vld [vmem:[%s2 + $0x4] sm:$0x1]
    %v172 = vld [vmem:[%s2 + $0x5] sm:$0x1]
    %v173 = vld [vmem:[%s2 + $0x6] sm:$0x1]
    %v174 = vld [vmem:[%s2 + $0x7] sm:$0x1]
    %v175 = vlaneseq
    %v176 = vshrl.u32 %v175, 7
    %v177 = vsub.s32 0, %v176
    %v178 = vrot.slane %v167, %v177
    %vm179 = vcmask 261120
    %v181 = vsel %vm179, %v119, 0
    %v184 = vsel %vm179, %v124, 0
    %186 = vmatprep.subr.mxu0 0.0
    %187 = vmatpush1.msra.mxu0 %v148
    %188 = vmatprep.subr.mxu0 0.0
    %189 = vmatpush1.msra.mxu0 %v149
    %190 = vmatprep.subr.mxu0 0.0
    %191 = vmatpush1.msra.mxu0 %v150
    %192 = vmatprep.subr.mxu0 0.0
    %193 = vmatpush1.msra.mxu0 %v151
    %194 = vmatprep.subr.mxu0 0.0
    %195 = vmatpush1.msra.mxu0 0.0
    %196 = vmatprep.subr.mxu0 0.0
    %197 = vmatpush1.msra.mxu0 0.0
    %198 = vmatprep.subr.mxu0 0.0
    %199 = vmatpush1.msra.mxu0 0.0
    %200 = vmatprep.subr.mxu0 0.0
    %201 = vmatpush1.msra.mxu0 0.0
    %202 = vmatprep.subr.mxu0 0.0
    %203 = vmatpush1.msra.mxu0 0.0
    %204 = vmatprep.subr.mxu0 0.0
    %205 = vmatpush1.msra.mxu0 0.0
    %206 = vmatprep.subr.mxu0 0.0
    %207 = vmatpush1.msra.mxu0 0.0
    %208 = vmatprep.subr.mxu0 0.0
    %209 = vmatpush1.msra.mxu0 0.0
    %210 = vmatprep.subr.mxu0 0.0
    %211 = vmatpush1.msra.mxu0 0.0
    %212 = vmatprep.subr.mxu0 0.0
    %213 = vmatpush1.msra.mxu0 0.0
    %214 = vmatprep.subr.mxu0 0.0
    %215 = vmatpush1.msra.mxu0 0.0
    %216 = vmatprep.subr.mxu0 0.0
    %217 = vmatpush1.msra.mxu0 0.0
    %218 = vmatprep.subr.mxu0 0.0
    %219 = vmatpush1.msra.mxu0 0.0
    %220 = vmatprep.subr.mxu0 0.0
    %221 = vmatpush1.msra.mxu0 0.0
    %222 = vmatprep.subr.mxu0 0.0
    %223 = vmatpush1.msra.mxu0 0.0
    %224 = vmatprep.subr.mxu0 0.0
    %225 = vmatpush1.msra.mxu0 0.0
    %226 = vmatprep.subr.mxu0 0.0
    %227 = vmatpush1.msra.mxu0 0.0
    %228 = vmatprep.subr.mxu0 0.0
    %229 = vmatpush1.msra.mxu0 0.0
    %230 = vmatprep.subr.mxu0 0.0
    %231 = vmatpush1.msra.mxu0 0.0
    %232 = vmatprep.subr.mxu0 0.0
    %233 = vmatpush1.msra.mxu0 0.0
    %234 = vmatprep.subr.mxu0 0.0
    %235 = vmatpush1.msra.mxu0 0.0
    %236 = vmatprep.subr.mxu0 0.0
    %237 = vmatpush1.msra.mxu0 0.0
    %238 = vmatprep.subr.mxu0 0.0
    %239 = vmatpush1.msra.mxu0 0.0
    %240 = vmatprep.subr.mxu0 0.0
    %241 = vmatpush1.msra.mxu0 0.0
    %242 = vmatprep.subr.mxu0 0.0
    %243 = vmatpush1.msra.mxu0 0.0
    %244 = vmatprep.subr.mxu0 0.0
    %245 = vmatpush1.msra.mxu0 0.0
    %246 = vmatprep.subr.mxu0 0.0
    %247 = vmatpush1.msra.mxu0 0.0
    %248 = vmatprep.subr.mxu0 0.0
    %249 = vmatpush1.msra.mxu0 0.0
    %250 = vmatprep.mubr.f32.mxu0 0.0
    %251 = vmatmul.mubr.f32.gmra.mrb[0].mxu0 %v181
    %v252 = vpop.f32.mrb[0].mxu0
    %v253 = vadd.f32 %v178, %v252
    %v254 = vpop.f32.mrb[0].mxu0
    %255 = vmatprep.mubr.f32.mxu0 0.0
    %256 = vmatmul.mubr.f32.gmra.mrb[0].mxu0 %v184
    %v257 = vpop.f32.mrb[0].mxu0
    %v258 = vadd.f32 %v178, %v257
    %v259 = vpop.f32.mrb[0].mxu0
    %260 = vdwg.mxu0
    %v261 = vmul.f32 %v253, %v127
    %v262 = vmul.f32 %v258, %v128
    %v263 = vmul.f32 %v253, %v129
    %v264 = vmul.f32 %v258, %v130
    %v265 = vmul.f32 %v253, %v131
    %v266 = vmul.f32 %v258, %v132
    %v267 = vmul.f32 %v253, %v133
    %v268 = vmul.f32 %v258, %v134
    %277 = vrot.lane.b32.xlu0 %v261, 96
    %v278 = vpop.permute.xlu0 %277
    %279 = vrot.lane.b32.xlu0 %v262, 96
    %v280 = vpop.permute.xlu0 %279
    %281 = vrot.lane.b32.xlu0 %v263, 96
    %v282 = vpop.permute.xlu0 %281
    %283 = vrot.lane.b32.xlu0 %v264, 96
    %v284 = vpop.permute.xlu0 %283
    %285 = vrot.lane.b32.xlu0 %v265, 96
    %v286 = vpop.permute.xlu0 %285
    %287 = vrot.lane.b32.xlu0 %v266, 96
    %v288 = vpop.permute.xlu0 %287
    %289 = vrot.lane.b32.xlu0 %v267, 96
    %v290 = vpop.permute.xlu0 %289
    %291 = vrot.lane.b32.xlu0 %v268, 96
    %v292 = vpop.permute.xlu0 %291
    %v293 = vsel %vm179, %v261, 0
    %v295 = vsel %vm179, %v262, 0
    %v297 = vsel %vm179, %v263, 0
    %v299 = vsel %vm179, %v264, 0
    %v301 = vsel %vm179, %v265, 0
    %v303 = vsel %vm179, %v266, 0
    %v305 = vsel %vm179, %v267, 0
    %v307 = vsel %vm179, %v268, 0
    %v309 = vsel %vm179, %v278, 0
    %v311 = vsel %vm179, %v280, 0
    %v313 = vsel %vm179, %v282, 0
    %v315 = vsel %vm179, %v284, 0
    %v317 = vsel %vm179, %v286, 0
    %v319 = vsel %vm179, %v288, 0
    %v321 = vsel %vm179, %v290, 0
    %v323 = vsel %vm179, %v292, 0
    %325 = vmatprep.subr.mxu0 0.0
    %326 = vmatpush1.xpose.msra.mxu0 %v309
    %327 = vmatprep.subr.mxu0 0.0
    %328 = vmatpush1.xpose.msra.mxu0 %v311
    %329 = vmatprep.subr.mxu0 0.0
    %330 = vmatpush1.xpose.msra.mxu0 %v313
    %331 = vmatprep.subr.mxu0 0.0
    %332 = vmatpush1.xpose.msra.mxu0 %v315
    %333 = vmatprep.subr.mxu0 0.0
    %334 = vmatpush1.xpose.msra.mxu0 %v317
    %335 = vmatprep.subr.mxu0 0.0
    %336 = vmatpush1.xpose.msra.mxu0 %v319
    %337 = vmatprep.subr.mxu0 0.0
    %338 = vmatpush1.xpose.msra.mxu0 %v321
    %339 = vmatprep.subr.mxu0 0.0
    %340 = vmatpush1.xpose.msra.mxu0 %v323
    %341 = vmatprep.subr.mxu0 0.0
    %342 = vmatpush1.xpose.msra.mxu0 0.0
    %343 = vmatprep.subr.mxu0 0.0
    %344 = vmatpush1.xpose.msra.mxu0 0.0
    %345 = vmatprep.subr.mxu0 0.0
    %346 = vmatpush1.xpose.msra.mxu0 0.0
    %347 = vmatprep.subr.mxu0 0.0
    %348 = vmatpush1.xpose.msra.mxu0 0.0
    %349 = vmatprep.subr.mxu0 0.0
    %350 = vmatpush1.xpose.msra.mxu0 0.0
    %351 = vmatprep.subr.mxu0 0.0
    %352 = vmatpush1.xpose.msra.mxu0 0.0
    %353 = vmatprep.subr.mxu0 0.0
    %354 = vmatpush1.xpose.msra.mxu0 0.0
    %355 = vmatprep.subr.mxu0 0.0
    %356 = vmatpush1.xpose.msra.mxu0 0.0
    %357 = vmatprep.subr.mxu0 0.0
    %358 = vmatpush1.xpose.msra.mxu0 0.0
    %359 = vmatprep.subr.mxu0 0.0
    %360 = vmatpush1.xpose.msra.mxu0 0.0
    %361 = vmatprep.subr.mxu0 0.0
    %362 = vmatpush1.xpose.msra.mxu0 0.0
    %363 = vmatprep.subr.mxu0 0.0
    %364 = vmatpush1.xpose.msra.mxu0 0.0
    %365 = vmatprep.subr.mxu0 0.0
    %366 = vmatpush1.xpose.msra.mxu0 0.0
    %367 = vmatprep.subr.mxu0 0.0
    %368 = vmatpush1.xpose.msra.mxu0 0.0
    %369 = vmatprep.subr.mxu0 0.0
    %370 = vmatpush1.xpose.msra.mxu0 0.0
    %371 = vmatprep.subr.mxu0 0.0
    %372 = vmatpush1.xpose.msra.mxu0 0.0
    %373 = vmatprep.subr.mxu0 0.0
    %374 = vmatpush1.xpose.msra.mxu0 0.0
    %375 = vmatprep.subr.mxu0 0.0
    %376 = vmatpush1.xpose.msra.mxu0 0.0
    %377 = vmatprep.subr.mxu0 0.0
    %378 = vmatpush1.xpose.msra.mxu0 0.0
    %379 = vmatprep.subr.mxu0 0.0
    %380 = vmatpush1.xpose.msra.mxu0 0.0
    %381 = vmatprep.subr.mxu0 0.0
    %382 = vmatpush1.xpose.msra.mxu0 0.0
    %383 = vmatprep.subr.mxu0 0.0
    %384 = vmatpush1.xpose.msra.mxu0 0.0
    %385 = vmatprep.subr.mxu0 0.0
    %386 = vmatpush1.xpose.msra.mxu0 0.0
    %387 = vmatprep.subr.mxu0 0.0
    %388 = vmatpush1.xpose.msra.mxu0 0.0
    %389 = vmatprep.mubr.f32.mxu0 0.0
    %390 = vmatmul.mubr.f32.gmra.mrb[0].mxu0 %v293
    %v391 = vpop.f32.mrb[0].mxu0
    %v392 = vadd.f32 %v136, %v391
    %v393 = vpop.f32.mrb[0].mxu0
    %394 = vmatprep.mubr.f32.mxu0 0.0
    %395 = vmatmul.mubr.f32.gmra.mrb[0].mxu0 %v295
    %v396 = vpop.f32.mrb[0].mxu0
    %v397 = vadd.f32 %v137, %v396
    %v398 = vpop.f32.mrb[0].mxu0
    %399 = vmatprep.mubr.f32.mxu0 0.0
    %400 = vmatmul.mubr.f32.gmra.mrb[0].mxu0 %v297
    %v401 = vpop.f32.mrb[0].mxu0
    %v402 = vadd.f32 %v138, %v401
    %v403 = vpop.f32.mrb[0].mxu0
    %404 = vmatprep.mubr.f32.mxu0 0.0
    %405 = vmatmul.mubr.f32.gmra.mrb[0].mxu0 %v299
    %v406 = vpop.f32.mrb[0].mxu0
    %v407 = vadd.f32 %v139, %v406
    %v408 = vpop.f32.mrb[0].mxu0
    %409 = vmatprep.mubr.f32.mxu0 0.0
    %410 = vmatmul.mubr.f32.gmra.mrb[0].mxu0 %v301
    %v411 = vpop.f32.mrb[0].mxu0
    %v412 = vadd.f32 %v140, %v411
    %v413 = vpop.f32.mrb[0].mxu0
    %414 = vmatprep.mubr.f32.mxu0 0.0
    %415 = vmatmul.mubr.f32.gmra.mrb[0].mxu0 %v303
    %v416 = vpop.f32.mrb[0].mxu0
    %v417 = vadd.f32 %v141, %v416
    %v418 = vpop.f32.mrb[0].mxu0
    %419 = vmatprep.mubr.f32.mxu0 0.0
    %420 = vmatmul.mubr.f32.gmra.mrb[0].mxu0 %v305
    %v421 = vpop.f32.mrb[0].mxu0
    %v422 = vadd.f32 %v142, %v421
    %v423 = vpop.f32.mrb[0].mxu0
    %424 = vmatprep.mubr.f32.mxu0 0.0
    %425 = vmatmul.mubr.f32.gmra.mrb[0].mxu0 %v307
    %v426 = vpop.f32.mrb[0].mxu0
    %v427 = vadd.f32 %v143, %v426
    %v428 = vpop.f32.mrb[0].mxu0
    %429 = vdwg.mxu0
    %vm430 = vcmask 523264
    %v431 = vsel %vm430, %v392, -inf
    %432 = vmax.xlane.f32.xlu0 %v431
    %v433 = vpop.xlane.xlu0 %432
    %v434 = vsel %vm430, %v397, -inf
    %435 = vmax.xlane.f32.xlu0 %v434
    %v436 = vpop.xlane.xlu0 %435
    %v437 = vsel %vm430, %v402, -inf
    %438 = vmax.xlane.f32.xlu0 %v437
    %v439 = vpop.xlane.xlu0 %438
    %v440 = vsel %vm430, %v407, -inf
    %441 = vmax.xlane.f32.xlu0 %v440
    %v442 = vpop.xlane.xlu0 %441
    %v443 = vsel %vm430, %v412, -inf
    %444 = vmax.xlane.f32.xlu0 %v443
    %v445 = vpop.xlane.xlu0 %444
    %v446 = vsel %vm430, %v417, -inf
    %447 = vmax.xlane.f32.xlu0 %v446
    %v448 = vpop.xlane.xlu0 %447
    %v449 = vsel %vm430, %v422, -inf
    %450 = vmax.xlane.f32.xlu0 %v449
    %v451 = vpop.xlane.xlu0 %450
    %v452 = vsel %vm430, %v427, -inf
    %453 = vmax.xlane.f32.xlu0 %v452
    %v454 = vpop.xlane.xlu0 %453
    %v455 = vsub.f32 %v392, %v433
    %v456 = vsub.f32 %v397, %v436
    %v457 = vsub.f32 %v402, %v439
    %v458 = vsub.f32 %v407, %v442
    %v459 = vsub.f32 %v412, %v445
    %v460 = vsub.f32 %v417, %v448
    %v461 = vsub.f32 %v422, %v451
    %v462 = vsub.f32 %v427, %v454
    %v463 = vmul.f32 %v455, 1.442695
    %v464 = vpow.pop %v463
    %v465 = vmul.f32 %v456, 1.442695
    %v466 = vpow.pop %v465
    %v467 = vmul.f32 %v457, 1.442695
    %v468 = vpow.pop %v467
    %v469 = vmul.f32 %v458, 1.442695
    %v470 = vpow.pop %v469
    %v471 = vmul.f32 %v459, 1.442695
    %v472 = vpow.pop %v471
    %v473 = vmul.f32 %v460, 1.442695
    %v474 = vpow.pop %v473
    %v475 = vmul.f32 %v461, 1.442695
    %v476 = vpow.pop %v475
    %v477 = vmul.f32 %v462, 1.442695
    %v478 = vpow.pop %v477
    %v480 = vsel %vm430, %v464, 0
    %v483 = vsel %vm430, %v466, 0
    %v486 = vsel %vm430, %v468, 0
    %v489 = vsel %vm430, %v470, 0
    %v492 = vsel %vm430, %v472, 0
    %v495 = vsel %vm430, %v474, 0
    %v498 = vsel %vm430, %v476, 0
    %v501 = vsel %vm430, %v478, 0
    %503 = vmatprep.subr.mxu0 0.0
    %504 = vmatpush1.msra.mxu0 1.0
    %505 = vmatprep.subr.mxu0 0.0
    %506 = vmatpush1.msra.mxu0 1.0
    %507 = vmatprep.subr.mxu0 0.0
    %508 = vmatpush1.msra.mxu0 1.0
    %509 = vmatprep.subr.mxu0 0.0
    %510 = vmatpush1.msra.mxu0 1.0
    %511 = vmatprep.subr.mxu0 0.0
    %512 = vmatpush1.msra.mxu0 1.0
    %513 = vmatprep.subr.mxu0 0.0
    %514 = vmatpush1.msra.mxu0 1.0
    %515 = vmatprep.subr.mxu0 0.0
    %516 = vmatpush1.msra.mxu0 1.0
    %517 = vmatprep.subr.mxu0 0.0
    %518 = vmatpush1.msra.mxu0 1.0
    %519 = vmatprep.subr.mxu0 0.0
    %520 = vmatpush1.msra.mxu0 0.0
    %521 = vmatprep.subr.mxu0 0.0
    %522 = vmatpush1.msra.mxu0 0.0
    %523 = vmatprep.subr.mxu0 0.0
    %524 = vmatpush1.msra.mxu0 0.0
    %525 = vmatprep.subr.mxu0 0.0
    %526 = vmatpush1.msra.mxu0 0.0
    %527 = vmatprep.subr.mxu0 0.0
    %528 = vmatpush1.msra.mxu0 0.0
    %529 = vmatprep.subr.mxu0 0.0
    %530 = vmatpush1.msra.mxu0 0.0
    %531 = vmatprep.subr.mxu0 0.0
    %532 = vmatpush1.msra.mxu0 0.0
    %533 = vmatprep.subr.mxu0 0.0
    %534 = vmatpush1.msra.mxu0 0.0
    %535 = vmatprep.subr.mxu0 0.0
    %536 = vmatpush1.msra.mxu0 0.0
    %537 = vmatprep.subr.mxu0 0.0
    %538 = vmatpush1.msra.mxu0 0.0
    %539 = vmatprep.subr.mxu0 0.0
    %540 = vmatpush1.msra.mxu0 0.0
    %541 = vmatprep.subr.mxu0 0.0
    %542 = vmatpush1.msra.mxu0 0.0
    %543 = vmatprep.subr.mxu0 0.0
    %544 = vmatpush1.msra.mxu0 0.0
    %545 = vmatprep.subr.mxu0 0.0
    %546 = vmatpush1.msra.mxu0 0.0
    %547 = vmatprep.subr.mxu0 0.0
    %548 = vmatpush1.msra.mxu0 0.0
    %549 = vmatprep.subr.mxu0 0.0
    %550 = vmatpush1.msra.mxu0 0.0
    %551 = vmatprep.subr.mxu0 0.0
    %552 = vmatpush1.msra.mxu0 0.0
    %553 = vmatprep.subr.mxu0 0.0
    %554 = vmatpush1.msra.mxu0 0.0
    %555 = vmatprep.subr.mxu0 0.0
    %556 = vmatpush1.msra.mxu0 0.0
    %557 = vmatprep.subr.mxu0 0.0
    %558 = vmatpush1.msra.mxu0 0.0
    %559 = vmatprep.subr.mxu0 0.0
    %560 = vmatpush1.msra.mxu0 0.0
    %561 = vmatprep.subr.mxu0 0.0
    %562 = vmatpush1.msra.mxu0 0.0
    %563 = vmatprep.subr.mxu0 0.0
    %564 = vmatpush1.msra.mxu0 0.0
    %565 = vmatprep.subr.mxu0 0.0
    %566 = vmatpush1.msra.mxu0 0.0
    %567 = vmatprep.mubr.f32.mxu0 0.0
    %568 = vmatmul.mubr.f32.gmra.mrb[0].mxu0 %v480
    %v569 = vpop.f32.mrb[0].mxu0
    %v570 = vadd.f32 0.0, %v569
    %v571 = vpop.f32.mrb[0].mxu0
    %572 = vmatprep.mubr.f32.mxu0 0.0
    %573 = vmatmul.mubr.f32.gmra.mrb[0].mxu0 %v483
    %v574 = vpop.f32.mrb[0].mxu0
    %v575 = vadd.f32 0.0, %v574
    %v576 = vpop.f32.mrb[0].mxu0
    %577 = vmatprep.mubr.f32.mxu0 0.0
    %578 = vmatmul.mubr.f32.gmra.mrb[0].mxu0 %v486
    %v579 = vpop.f32.mrb[0].mxu0
    %v580 = vadd.f32 0.0, %v579
    %v581 = vpop.f32.mrb[0].mxu0
    %582 = vmatprep.mubr.f32.mxu0 0.0
    %583 = vmatmul.mubr.f32.gmra.mrb[0].mxu0 %v489
    %v584 = vpop.f32.mrb[0].mxu0
    %v585 = vadd.f32 0.0, %v584
    %v586 = vpop.f32.mrb[0].mxu0
    %587 = vmatprep.mubr.f32.mxu0 0.0
    %588 = vmatmul.mubr.f32.gmra.mrb[0].mxu0 %v492
    %v589 = vpop.f32.mrb[0].mxu0
    %v590 = vadd.f32 0.0, %v589
    %v591 = vpop.f32.mrb[0].mxu0
    %592 = vmatprep.mubr.f32.mxu0 0.0
    %593 = vmatmul.mubr.f32.gmra.mrb[0].mxu0 %v495
    %v594 = vpop.f32.mrb[0].mxu0
    %v595 = vadd.f32 0.0, %v594
    %v596 = vpop.f32.mrb[0].mxu0
    %597 = vmatprep.mubr.f32.mxu0 0.0
    %598 = vmatmul.mubr.f32.gmra.mrb[0].mxu0 %v498
    %v599 = vpop.f32.mrb[0].mxu0
    %v600 = vadd.f32 0.0, %v599
    %v601 = vpop.f32.mrb[0].mxu0
    %602 = vmatprep.mubr.f32.mxu0 0.0
    %603 = vmatmul.mubr.f32.gmra.mrb[0].mxu0 %v501
    %v604 = vpop.f32.mrb[0].mxu0
    %v605 = vadd.f32 0.0, %v604
    %v606 = vpop.f32.mrb[0].mxu0
    %607 = vdwg.mxu0
    %v608 = vrcp.pop %v570
    %v609 = vrcp.pop %v575
    %v610 = vrcp.pop %v580
    %v611 = vrcp.pop %v585
    %v612 = vrcp.pop %v590
    %v613 = vrcp.pop %v595
    %v614 = vrcp.pop %v600
    %v615 = vrcp.pop %v605
    %617 = vset.pattern.permute.xlu0 0
    %618 = vperm.xlu0 %617, %v608
    %v619 = vpop.permute.xlu0 %618
    %622 = vset.pattern.permute.xlu0 0
    %623 = vperm.xlu0 %622, %v609
    %v624 = vpop.permute.xlu0 %623
    %627 = vset.pattern.permute.xlu0 0
    %628 = vperm.xlu0 %627, %v610
    %v629 = vpop.permute.xlu0 %628
    %632 = vset.pattern.permute.xlu0 0
    %633 = vperm.xlu0 %632, %v611
    %v634 = vpop.permute.xlu0 %633
    %637 = vset.pattern.permute.xlu0 0
    %638 = vperm.xlu0 %637, %v612
    %v639 = vpop.permute.xlu0 %638
    %642 = vset.pattern.permute.xlu0 0
    %643 = vperm.xlu0 %642, %v613
    %v644 = vpop.permute.xlu0 %643
    %647 = vset.pattern.permute.xlu0 0
    %648 = vperm.xlu0 %647, %v614
    %v649 = vpop.permute.xlu0 %648
    %652 = vset.pattern.permute.xlu0 0
    %653 = vperm.xlu0 %652, %v615
    %v654 = vpop.permute.xlu0 %653
    %v656 = vmul.f32 %v464, %v619
    %v657 = vmul.f32 %v466, %v624
    %v658 = vmul.f32 %v468, %v629
    %v659 = vmul.f32 %v470, %v634
    %v660 = vmul.f32 %v472, %v639
    %v661 = vmul.f32 %v474, %v644
    %v662 = vmul.f32 %v476, %v649
    %v663 = vmul.f32 %v478, %v654
    %664 = vrot.lane.b32.xlu0 %v261, 64
    %v665 = vpop.permute.xlu0 %664
    %666 = vrot.lane.b32.xlu0 %v262, 64
    %v667 = vpop.permute.xlu0 %666
    %668 = vrot.lane.b32.xlu0 %v263, 64
    %v669 = vpop.permute.xlu0 %668
    %670 = vrot.lane.b32.xlu0 %v264, 64
    %v671 = vpop.permute.xlu0 %670
    %672 = vrot.lane.b32.xlu0 %v265, 64
    %v673 = vpop.permute.xlu0 %672
    %674 = vrot.lane.b32.xlu0 %v266, 64
    %v675 = vpop.permute.xlu0 %674
    %676 = vrot.lane.b32.xlu0 %v267, 64
    %v677 = vpop.permute.xlu0 %676
    %678 = vrot.lane.b32.xlu0 %v268, 64
    %v679 = vpop.permute.xlu0 %678
    %v689 = vsel %vm430, %v656, 0
    %v692 = vsel %vm430, %v657, 0
    %v695 = vsel %vm430, %v658, 0
    %v698 = vsel %vm430, %v659, 0
    %v701 = vsel %vm430, %v660, 0
    %v704 = vsel %vm430, %v661, 0
    %v707 = vsel %vm430, %v662, 0
    %v710 = vsel %vm430, %v663, 0
    %712 = vmatprep.subr.mxu0 0.0
    %713 = vmatpush1.msra.mxu0 %v665
    %714 = vmatprep.subr.mxu0 0.0
    %715 = vmatpush1.msra.mxu0 %v667
    %716 = vmatprep.subr.mxu0 0.0
    %717 = vmatpush1.msra.mxu0 %v669
    %718 = vmatprep.subr.mxu0 0.0
    %719 = vmatpush1.msra.mxu0 %v671
    %720 = vmatprep.subr.mxu0 0.0
    %721 = vmatpush1.msra.mxu0 %v673
    %722 = vmatprep.subr.mxu0 0.0
    %723 = vmatpush1.msra.mxu0 %v675
    %724 = vmatprep.subr.mxu0 0.0
    %725 = vmatpush1.msra.mxu0 %v677
    %726 = vmatprep.subr.mxu0 0.0
    %727 = vmatpush1.msra.mxu0 %v679
    %728 = vmatprep.subr.mxu0 0.0
    %729 = vmatpush1.msra.mxu0 0.0
    %730 = vmatprep.subr.mxu0 0.0
    %731 = vmatpush1.msra.mxu0 0.0
    %732 = vmatprep.subr.mxu0 0.0
    %733 = vmatpush1.msra.mxu0 0.0
    %734 = vmatprep.subr.mxu0 0.0
    %735 = vmatpush1.msra.mxu0 0.0
    %736 = vmatprep.subr.mxu0 0.0
    %737 = vmatpush1.msra.mxu0 0.0
    %738 = vmatprep.subr.mxu0 0.0
    %739 = vmatpush1.msra.mxu0 0.0
    %740 = vmatprep.subr.mxu0 0.0
    %741 = vmatpush1.msra.mxu0 0.0
    %742 = vmatprep.subr.mxu0 0.0
    %743 = vmatpush1.msra.mxu0 0.0
    %744 = vmatprep.subr.mxu0 0.0
    %745 = vmatpush1.msra.mxu0 0.0
    %746 = vmatprep.subr.mxu0 0.0
    %747 = vmatpush1.msra.mxu0 0.0
    %748 = vmatprep.subr.mxu0 0.0
    %749 = vmatpush1.msra.mxu0 0.0
    %750 = vmatprep.subr.mxu0 0.0
    %751 = vmatpush1.msra.mxu0 0.0
    %752 = vmatprep.subr.mxu0 0.0
    %753 = vmatpush1.msra.mxu0 0.0
    %754 = vmatprep.subr.mxu0 0.0
    %755 = vmatpush1.msra.mxu0 0.0
    %756 = vmatprep.subr.mxu0 0.0
    %757 = vmatpush1.msra.mxu0 0.0
    %758 = vmatprep.subr.mxu0 0.0
    %759 = vmatpush1.msra.mxu0 0.0
    %760 = vmatprep.subr.mxu0 0.0
    %761 = vmatpush1.msra.mxu0 0.0
    %762 = vmatprep.subr.mxu0 0.0
    %763 = vmatpush1.msra.mxu0 0.0
    %764 = vmatprep.subr.mxu0 0.0
    %765 = vmatpush1.msra.mxu0 0.0
    %766 = vmatprep.subr.mxu0 0.0
    %767 = vmatpush1.msra.mxu0 0.0
    %768 = vmatprep.subr.mxu0 0.0
    %769 = vmatpush1.msra.mxu0 0.0
    %770 = vmatprep.subr.mxu0 0.0
    %771 = vmatpush1.msra.mxu0 0.0
    %772 = vmatprep.subr.mxu0 0.0
    %773 = vmatpush1.msra.mxu0 0.0
    %774 = vmatprep.subr.mxu0 0.0
    %775 = vmatpush1.msra.mxu0 0.0
    %776 = vmatprep.mubr.f32.mxu0 0.0
    %777 = vmatmul.mubr.f32.gmra.mrb[0].mxu0 %v689
    %v778 = vpop.f32.mrb[0].mxu0
    %v779 = vadd.f32 0.0, %v778
    %v780 = vpop.f32.mrb[0].mxu0
    %781 = vmatprep.mubr.f32.mxu0 0.0
    %782 = vmatmul.mubr.f32.gmra.mrb[0].mxu0 %v692
    %v783 = vpop.f32.mrb[0].mxu0
    %v784 = vadd.f32 0.0, %v783
    %v785 = vpop.f32.mrb[0].mxu0
    %786 = vmatprep.mubr.f32.mxu0 0.0
    %787 = vmatmul.mubr.f32.gmra.mrb[0].mxu0 %v695
    %v788 = vpop.f32.mrb[0].mxu0
    %v789 = vadd.f32 0.0, %v788
    %v790 = vpop.f32.mrb[0].mxu0
    %791 = vmatprep.mubr.f32.mxu0 0.0
    %792 = vmatmul.mubr.f32.gmra.mrb[0].mxu0 %v698
    %v793 = vpop.f32.mrb[0].mxu0
    %v794 = vadd.f32 0.0, %v793
    %v795 = vpop.f32.mrb[0].mxu0
    %796 = vmatprep.mubr.f32.mxu0 0.0
    %797 = vmatmul.mubr.f32.gmra.mrb[0].mxu0 %v701
    %v798 = vpop.f32.mrb[0].mxu0
    %v799 = vadd.f32 0.0, %v798
    %v800 = vpop.f32.mrb[0].mxu0
    %801 = vmatprep.mubr.f32.mxu0 0.0
    %802 = vmatmul.mubr.f32.gmra.mrb[0].mxu0 %v704
    %v803 = vpop.f32.mrb[0].mxu0
    %v804 = vadd.f32 0.0, %v803
    %v805 = vpop.f32.mrb[0].mxu0
    %806 = vmatprep.mubr.f32.mxu0 0.0
    %807 = vmatmul.mubr.f32.gmra.mrb[0].mxu0 %v707
    %v808 = vpop.f32.mrb[0].mxu0
    %v809 = vadd.f32 0.0, %v808
    %v810 = vpop.f32.mrb[0].mxu0
    %811 = vmatprep.mubr.f32.mxu0 0.0
    %812 = vmatmul.mubr.f32.gmra.mrb[0].mxu0 %v710
    %v813 = vpop.f32.mrb[0].mxu0
    %v814 = vadd.f32 0.0, %v813
    %v815 = vpop.f32.mrb[0].mxu0
    %816 = vdwg.mxu0
    %v818 = vsel %vm179, %v779, 0
    %v821 = vsel %vm179, %v784, 0
    %v824 = vsel %vm179, %v789, 0
    %v827 = vsel %vm179, %v794, 0
    %v830 = vsel %vm179, %v799, 0
    %v833 = vsel %vm179, %v804, 0
    %v836 = vsel %vm179, %v809, 0
    %v839 = vsel %vm179, %v814, 0
    %841 = vmatprep.subr.mxu0 0.0
    %842 = vmatpush1.msra.mxu0 %v153
    %843 = vmatprep.subr.mxu0 0.0
    %844 = vmatpush1.msra.mxu0 %v154
    %845 = vmatprep.subr.mxu0 0.0
    %846 = vmatpush1.msra.mxu0 %v155
    %847 = vmatprep.subr.mxu0 0.0
    %848 = vmatpush1.msra.mxu0 %v156
    %849 = vmatprep.subr.mxu0 0.0
    %850 = vmatpush1.msra.mxu0 0.0
    %851 = vmatprep.subr.mxu0 0.0
    %852 = vmatpush1.msra.mxu0 0.0
    %853 = vmatprep.subr.mxu0 0.0
    %854 = vmatpush1.msra.mxu0 0.0
    %855 = vmatprep.subr.mxu0 0.0
    %856 = vmatpush1.msra.mxu0 0.0
    %857 = vmatprep.subr.mxu0 0.0
    %858 = vmatpush1.msra.mxu0 0.0
    %859 = vmatprep.subr.mxu0 0.0
    %860 = vmatpush1.msra.mxu0 0.0
    %861 = vmatprep.subr.mxu0 0.0
    %862 = vmatpush1.msra.mxu0 0.0
    %863 = vmatprep.subr.mxu0 0.0
    %864 = vmatpush1.msra.mxu0 0.0
    %865 = vmatprep.subr.mxu0 0.0
    %866 = vmatpush1.msra.mxu0 0.0
    %867 = vmatprep.subr.mxu0 0.0
    %868 = vmatpush1.msra.mxu0 0.0
    %869 = vmatprep.subr.mxu0 0.0
    %870 = vmatpush1.msra.mxu0 0.0
    %871 = vmatprep.subr.mxu0 0.0
    %872 = vmatpush1.msra.mxu0 0.0
    %873 = vmatprep.subr.mxu0 0.0
    %874 = vmatpush1.msra.mxu0 0.0
    %875 = vmatprep.subr.mxu0 0.0
    %876 = vmatpush1.msra.mxu0 0.0
    %877 = vmatprep.subr.mxu0 0.0
    %878 = vmatpush1.msra.mxu0 0.0
    %879 = vmatprep.subr.mxu0 0.0
    %880 = vmatpush1.msra.mxu0 0.0
    %881 = vmatprep.subr.mxu0 0.0
    %882 = vmatpush1.msra.mxu0 0.0
    %883 = vmatprep.subr.mxu0 0.0
    %884 = vmatpush1.msra.mxu0 0.0
    %885 = vmatprep.subr.mxu0 0.0
    %886 = vmatpush1.msra.mxu0 0.0
    %887 = vmatprep.subr.mxu0 0.0
    %888 = vmatpush1.msra.mxu0 0.0
    %889 = vmatprep.subr.mxu0 0.0
    %890 = vmatpush1.msra.mxu0 0.0
    %891 = vmatprep.subr.mxu0 0.0
    %892 = vmatpush1.msra.mxu0 0.0
    %893 = vmatprep.subr.mxu0 0.0
    %894 = vmatpush1.msra.mxu0 0.0
    %895 = vmatprep.subr.mxu0 0.0
    %896 = vmatpush1.msra.mxu0 0.0
    %897 = vmatprep.subr.mxu0 0.0
    %898 = vmatpush1.msra.mxu0 0.0
    %899 = vmatprep.subr.mxu0 0.0
    %900 = vmatpush1.msra.mxu0 0.0
    %901 = vmatprep.subr.mxu0 0.0
    %902 = vmatpush1.msra.mxu0 0.0
    %903 = vmatprep.subr.mxu0 0.0
    %904 = vmatpush1.msra.mxu0 0.0
    %905 = vmatprep.mubr.f32.mxu0 0.0
    %906 = vmatmul.mubr.f32.gmra.mrb[0].mxu0 %v818
    %v907 = vpop.f32.mrb[0].mxu0
    %v908 = vadd.f32 0.0, %v907
    %v909 = vpop.f32.mrb[0].mxu0
    %910 = vmatprep.mubr.f32.mxu0 0.0
    %911 = vmatmul.mubr.f32.gmra.mrb[0].mxu0 %v821
    %v912 = vpop.f32.mrb[0].mxu0
    %v913 = vadd.f32 0.0, %v912
    %v914 = vpop.f32.mrb[0].mxu0
    %915 = vmatprep.mubr.f32.mxu0 0.0
    %916 = vmatmul.mubr.f32.gmra.mrb[0].mxu0 %v824
    %v917 = vpop.f32.mrb[0].mxu0
    %v918 = vadd.f32 0.0, %v917
    %v919 = vpop.f32.mrb[0].mxu0
    %920 = vmatprep.mubr.f32.mxu0 0.0
    %921 = vmatmul.mubr.f32.gmra.mrb[0].mxu0 %v827
    %v922 = vpop.f32.mrb[0].mxu0
    %v923 = vadd.f32 0.0, %v922
    %v924 = vpop.f32.mrb[0].mxu0
    %925 = vmatprep.mubr.f32.mxu0 0.0
    %926 = vmatmul.mubr.f32.gmra.mrb[0].mxu0 %v830
    %v927 = vpop.f32.mrb[0].mxu0
    %v928 = vadd.f32 0.0, %v927
    %v929 = vpop.f32.mrb[0].mxu0
    %930 = vmatprep.mubr.f32.mxu0 0.0
    %931 = vmatmul.mubr.f32.gmra.mrb[0].mxu0 %v833
    %v932 = vpop.f32.mrb[0].mxu0
    %v933 = vadd.f32 0.0, %v932
    %v934 = vpop.f32.mrb[0].mxu0
    %935 = vmatprep.mubr.f32.mxu0 0.0
    %936 = vmatmul.mubr.f32.gmra.mrb[0].mxu0 %v836
    %v937 = vpop.f32.mrb[0].mxu0
    %v938 = vadd.f32 0.0, %v937
    %v939 = vpop.f32.mrb[0].mxu0
    %940 = vmatprep.mubr.f32.mxu0 0.0
    %941 = vmatmul.mubr.f32.gmra.mrb[0].mxu0 %v839
    %v942 = vpop.f32.mrb[0].mxu0
    %v943 = vadd.f32 0.0, %v942
    %v944 = vpop.f32.mrb[0].mxu0
    %945 = vdwg.mxu0
    %v946 = vlaneseq
    %v947 = vshrl.u32 %v946, 7
    %v948 = vsub.s32 0, %v947
    %v949 = vrot.slane %v168, %v948
    %v951 = vsel %vm430, %v145, 0
    %v954 = vsel %vm430, %v146, 0
    %956 = vmatprep.subr.mxu0 0.0
    %957 = vmatpush1.msra.mxu0 %v908
    %958 = vmatprep.subr.mxu0 0.0
    %959 = vmatpush1.msra.mxu0 %v913
    %960 = vmatprep.subr.mxu0 0.0
    %961 = vmatpush1.msra.mxu0 %v918
    %962 = vmatprep.subr.mxu0 0.0
    %963 = vmatpush1.msra.mxu0 %v923
    %964 = vmatprep.subr.mxu0 0.0
    %965 = vmatpush1.msra.mxu0 %v928
    %966 = vmatprep.subr.mxu0 0.0
    %967 = vmatpush1.msra.mxu0 %v933
    %968 = vmatprep.subr.mxu0 0.0
    %969 = vmatpush1.msra.mxu0 %v938
    %970 = vmatprep.subr.mxu0 0.0
    %971 = vmatpush1.msra.mxu0 %v943
    %972 = vmatprep.subr.mxu0 0.0
    %973 = vmatpush1.msra.mxu0 0.0
    %974 = vmatprep.subr.mxu0 0.0
    %975 = vmatpush1.msra.mxu0 0.0
    %976 = vmatprep.subr.mxu0 0.0
    %977 = vmatpush1.msra.mxu0 0.0
    %978 = vmatprep.subr.mxu0 0.0
    %979 = vmatpush1.msra.mxu0 0.0
    %980 = vmatprep.subr.mxu0 0.0
    %981 = vmatpush1.msra.mxu0 0.0
    %982 = vmatprep.subr.mxu0 0.0
    %983 = vmatpush1.msra.mxu0 0.0
    %984 = vmatprep.subr.mxu0 0.0
    %985 = vmatpush1.msra.mxu0 0.0
    %986 = vmatprep.subr.mxu0 0.0
    %987 = vmatpush1.msra.mxu0 0.0
    %988 = vmatprep.subr.mxu0 0.0
    %989 = vmatpush1.msra.mxu0 0.0
    %990 = vmatprep.subr.mxu0 0.0
    %991 = vmatpush1.msra.mxu0 0.0
    %992 = vmatprep.subr.mxu0 0.0
    %993 = vmatpush1.msra.mxu0 0.0
    %994 = vmatprep.subr.mxu0 0.0
    %995 = vmatpush1.msra.mxu0 0.0
    %996 = vmatprep.subr.mxu0 0.0
    %997 = vmatpush1.msra.mxu0 0.0
    %998 = vmatprep.subr.mxu0 0.0
    %999 = vmatpush1.msra.mxu0 0.0
    %1000 = vmatprep.subr.mxu0 0.0
    %1001 = vmatpush1.msra.mxu0 0.0
    %1002 = vmatprep.subr.mxu0 0.0
    %1003 = vmatpush1.msra.mxu0 0.0
    %1004 = vmatprep.subr.mxu0 0.0
    %1005 = vmatpush1.msra.mxu0 0.0
    %1006 = vmatprep.subr.mxu0 0.0
    %1007 = vmatpush1.msra.mxu0 0.0
    %1008 = vmatprep.subr.mxu0 0.0
    %1009 = vmatpush1.msra.mxu0 0.0
    %1010 = vmatprep.subr.mxu0 0.0
    %1011 = vmatpush1.msra.mxu0 0.0
    %1012 = vmatprep.subr.mxu0 0.0
    %1013 = vmatpush1.msra.mxu0 0.0
    %1014 = vmatprep.subr.mxu0 0.0
    %1015 = vmatpush1.msra.mxu0 0.0
    %1016 = vmatprep.subr.mxu0 0.0
    %1017 = vmatpush1.msra.mxu0 0.0
    %1018 = vmatprep.subr.mxu0 0.0
    %1019 = vmatpush1.msra.mxu0 0.0
    %1020 = vmatprep.mubr.f32.mxu0 0.0
    %1021 = vmatmul.mubr.f32.gmra.mrb[0].mxu0 %v951
    %v1022 = vpop.f32.mrb[0].mxu0
    %v1023 = vadd.f32 %v949, %v1022
    %v1024 = vpop.f32.mrb[0].mxu0
    %1025 = vmatprep.mubr.f32.mxu0 0.0
    %1026 = vmatmul.mubr.f32.gmra.mrb[0].mxu0 %v954
    %v1027 = vpop.f32.mrb[0].mxu0
    %v1028 = vadd.f32 %v949, %v1027
    %v1029 = vpop.f32.mrb[0].mxu0
    %1030 = vdwg.mxu0
    %v1031 = vadd.f32 %v119, %v1023
    %v1032 = vadd.f32 %v124, %v1028
    %v1034 = vsel %vm179, %v1031, 0
    %v1037 = vsel %vm179, %v1032, 0
    %1039 = vmatprep.subr.mxu0 0.0
    %1040 = vmatpush1.msra.mxu0 0.03125
    %1041 = vmatprep.subr.mxu0 0.0
    %1042 = vmatpush1.msra.mxu0 0.03125
    %1043 = vmatprep.subr.mxu0 0.0
    %1044 = vmatpush1.msra.mxu0 0.03125
    %1045 = vmatprep.subr.mxu0 0.0
    %1046 = vmatpush1.msra.mxu0 0.03125
    %1047 = vmatprep.subr.mxu0 0.0
    %1048 = vmatpush1.msra.mxu0 0.0
    %1049 = vmatprep.subr.mxu0 0.0
    %1050 = vmatpush1.msra.mxu0 0.0
    %1051 = vmatprep.subr.mxu0 0.0
    %1052 = vmatpush1.msra.mxu0 0.0
    %1053 = vmatprep.subr.mxu0 0.0
    %1054 = vmatpush1.msra.mxu0 0.0
    %1055 = vmatprep.subr.mxu0 0.0
    %1056 = vmatpush1.msra.mxu0 0.0
    %1057 = vmatprep.subr.mxu0 0.0
    %1058 = vmatpush1.msra.mxu0 0.0
    %1059 = vmatprep.subr.mxu0 0.0
    %1060 = vmatpush1.msra.mxu0 0.0
    %1061 = vmatprep.subr.mxu0 0.0
    %1062 = vmatpush1.msra.mxu0 0.0
    %1063 = vmatprep.subr.mxu0 0.0
    %1064 = vmatpush1.msra.mxu0 0.0
    %1065 = vmatprep.subr.mxu0 0.0
    %1066 = vmatpush1.msra.mxu0 0.0
    %1067 = vmatprep.subr.mxu0 0.0
    %1068 = vmatpush1.msra.mxu0 0.0
    %1069 = vmatprep.subr.mxu0 0.0
    %1070 = vmatpush1.msra.mxu0 0.0
    %1071 = vmatprep.subr.mxu0 0.0
    %1072 = vmatpush1.msra.mxu0 0.0
    %1073 = vmatprep.subr.mxu0 0.0
    %1074 = vmatpush1.msra.mxu0 0.0
    %1075 = vmatprep.subr.mxu0 0.0
    %1076 = vmatpush1.msra.mxu0 0.0
    %1077 = vmatprep.subr.mxu0 0.0
    %1078 = vmatpush1.msra.mxu0 0.0
    %1079 = vmatprep.subr.mxu0 0.0
    %1080 = vmatpush1.msra.mxu0 0.0
    %1081 = vmatprep.subr.mxu0 0.0
    %1082 = vmatpush1.msra.mxu0 0.0
    %1083 = vmatprep.subr.mxu0 0.0
    %1084 = vmatpush1.msra.mxu0 0.0
    %1085 = vmatprep.subr.mxu0 0.0
    %1086 = vmatpush1.msra.mxu0 0.0
    %1087 = vmatprep.subr.mxu0 0.0
    %1088 = vmatpush1.msra.mxu0 0.0
    %1089 = vmatprep.subr.mxu0 0.0
    %1090 = vmatpush1.msra.mxu0 0.0
    %1091 = vmatprep.subr.mxu0 0.0
    %1092 = vmatpush1.msra.mxu0 0.0
    %1093 = vmatprep.subr.mxu0 0.0
    %1094 = vmatpush1.msra.mxu0 0.0
    %1095 = vmatprep.subr.mxu0 0.0
    %1096 = vmatpush1.msra.mxu0 0.0
    %1097 = vmatprep.subr.mxu0 0.0
    %1098 = vmatpush1.msra.mxu0 0.0
    %1099 = vmatprep.subr.mxu0 0.0
    %1100 = vmatpush1.msra.mxu0 0.0
    %1101 = vmatprep.subr.mxu0 0.0
    %1102 = vmatpush1.msra.mxu0 0.0
    %1103 = vmatprep.mubr.f32.mxu0 0.0
    %1104 = vmatmul.mubr.f32.gmra.mrb[0].mxu0 %v1034
    %v1105 = vpop.f32.mrb[0].mxu0
    %v1106 = vadd.f32 0.0, %v1105
    %v1107 = vpop.f32.mrb[0].mxu0
    %1108 = vmatprep.mubr.f32.mxu0 0.0
    %1109 = vmatmul.mubr.f32.gmra.mrb[0].mxu0 %v1037
    %v1110 = vpop.f32.mrb[0].mxu0
    %v1111 = vadd.f32 0.0, %v1110
    %v1112 = vpop.f32.mrb[0].mxu0
    %1113 = vdwg.mxu0
    %1115 = vset.pattern.permute.xlu0 0
    %1116 = vperm.xlu0 %1115, %v1106
    %v1117 = vpop.permute.xlu0 %1116
    %1120 = vset.pattern.permute.xlu0 0
    %1121 = vperm.xlu0 %1120, %v1111
    %v1122 = vpop.permute.xlu0 %1121
    %v1124 = vsub.f32 %v1031, %v1117
    %v1125 = vsub.f32 %v1032, %v1122
    %v1126 = vmul.f32 %v1124, %v1124
    %v1127 = vmul.f32 %v1125, %v1125
    %v1129 = vsel %vm179, %v1126, 0
    %v1132 = vsel %vm179, %v1127, 0
    %1134 = vmatprep.subr.mxu0 0.0
    %1135 = vmatpush1.msra.mxu0 0.03125
    %1136 = vmatprep.subr.mxu0 0.0
    %1137 = vmatpush1.msra.mxu0 0.03125
    %1138 = vmatprep.subr.mxu0 0.0
    %1139 = vmatpush1.msra.mxu0 0.03125
    %1140 = vmatprep.subr.mxu0 0.0
    %1141 = vmatpush1.msra.mxu0 0.03125
    %1142 = vmatprep.subr.mxu0 0.0
    %1143 = vmatpush1.msra.mxu0 0.0
    %1144 = vmatprep.subr.mxu0 0.0
    %1145 = vmatpush1.msra.mxu0 0.0
    %1146 = vmatprep.subr.mxu0 0.0
    %1147 = vmatpush1.msra.mxu0 0.0
    %1148 = vmatprep.subr.mxu0 0.0
    %1149 = vmatpush1.msra.mxu0 0.0
    %1150 = vmatprep.subr.mxu0 0.0
    %1151 = vmatpush1.msra.mxu0 0.0
    %1152 = vmatprep.subr.mxu0 0.0
    %1153 = vmatpush1.msra.mxu0 0.0
    %1154 = vmatprep.subr.mxu0 0.0
    %1155 = vmatpush1.msra.mxu0 0.0
    %1156 = vmatprep.subr.mxu0 0.0
    %1157 = vmatpush1.msra.mxu0 0.0
    %1158 = vmatprep.subr.mxu0 0.0
    %1159 = vmatpush1.msra.mxu0 0.0
    %1160 = vmatprep.subr.mxu0 0.0
    %1161 = vmatpush1.msra.mxu0 0.0
    %1162 = vmatprep.subr.mxu0 0.0
    %1163 = vmatpush1.msra.mxu0 0.0
    %1164 = vmatprep.subr.mxu0 0.0
    %1165 = vmatpush1.msra.mxu0 0.0
    %1166 = vmatprep.subr.mxu0 0.0
    %1167 = vmatpush1.msra.mxu0 0.0
    %1168 = vmatprep.subr.mxu0 0.0
    %1169 = vmatpush1.msra.mxu0 0.0
    %1170 = vmatprep.subr.mxu0 0.0
    %1171 = vmatpush1.msra.mxu0 0.0
    %1172 = vmatprep.subr.mxu0 0.0
    %1173 = vmatpush1.msra.mxu0 0.0
    %1174 = vmatprep.subr.mxu0 0.0
    %1175 = vmatpush1.msra.mxu0 0.0
    %1176 = vmatprep.subr.mxu0 0.0
    %1177 = vmatpush1.msra.mxu0 0.0
    %1178 = vmatprep.subr.mxu0 0.0
    %1179 = vmatpush1.msra.mxu0 0.0
    %1180 = vmatprep.subr.mxu0 0.0
    %1181 = vmatpush1.msra.mxu0 0.0
    %1182 = vmatprep.subr.mxu0 0.0
    %1183 = vmatpush1.msra.mxu0 0.0
    %1184 = vmatprep.subr.mxu0 0.0
    %1185 = vmatpush1.msra.mxu0 0.0
    %1186 = vmatprep.subr.mxu0 0.0
    %1187 = vmatpush1.msra.mxu0 0.0
    %1188 = vmatprep.subr.mxu0 0.0
    %1189 = vmatpush1.msra.mxu0 0.0
    %1190 = vmatprep.subr.mxu0 0.0
    %1191 = vmatpush1.msra.mxu0 0.0
    %1192 = vmatprep.subr.mxu0 0.0
    %1193 = vmatpush1.msra.mxu0 0.0
    %1194 = vmatprep.subr.mxu0 0.0
    %1195 = vmatpush1.msra.mxu0 0.0
    %1196 = vmatprep.subr.mxu0 0.0
    %1197 = vmatpush1.msra.mxu0 0.0
    %1198 = vmatprep.mubr.f32.mxu0 0.0
    %1199 = vmatmul.mubr.f32.gmra.mrb[0].mxu0 %v1129
    %v1200 = vpop.f32.mrb[0].mxu0
    %v1201 = vadd.f32 1e-05, %v1200
    %v1202 = vpop.f32.mrb[0].mxu0
    %1203 = vmatprep.mubr.f32.mxu0 0.0
    %1204 = vmatmul.mubr.f32.gmra.mrb[0].mxu0 %v1132
    %v1205 = vpop.f32.mrb[0].mxu0
    %v1206 = vadd.f32 1e-05, %v1205
    %v1207 = vpop.f32.mrb[0].mxu0
    %1208 = vdwg.mxu0
    %v1209 = vrsqrt.pop %v1201
    %v1210 = vrsqrt.pop %v1206
    %1212 = vset.pattern.permute.xlu0 0
    %1213 = vperm.xlu0 %1212, %v1209
    %v1214 = vpop.permute.xlu0 %1213
    %1217 = vset.pattern.permute.xlu0 0
    %1218 = vperm.xlu0 %1217, %v1210
    %v1219 = vpop.permute.xlu0 %1218
    %v1221 = vmul.f32 %v1124, %v1214
    %v1222 = vmul.f32 %v1125, %v1219
    %v1223 = vlaneseq
    %v1224 = vshrl.u32 %v1223, 7
    %v1225 = vsub.s32 0, %v1224
    %v1226 = vrot.slane %v169, %v1225
    %v1227 = vmul.f32 %v1221, %v1226
    %v1228 = vmul.f32 %v1222, %v1226
    %v1229 = vlaneseq
    %v1230 = vshrl.u32 %v1229, 7
    %v1231 = vsub.s32 0, %v1230
    %v1232 = vrot.slane %v170, %v1231
    %v1233 = vadd.f32 %v1227, %v1232
    %v1234 = vadd.f32 %v1228, %v1232
    %v1235 = vlaneseq
    %v1236 = vshrl.u32 %v1235, 7
    %v1237 = vsub.s32 0, %v1236
    %v1238 = vrot.slane %v171, %v1237
    %v1240 = vsel %vm179, %v1233, 0
    %v1243 = vsel %vm179, %v1234, 0
    %1245 = vmatprep.subr.mxu0 0.0
    %1246 = vmatpush1.msra.mxu0 %v158
    %1247 = vmatprep.subr.mxu0 0.0
    %1248 = vmatpush1.msra.mxu0 %v159
    %1249 = vmatprep.subr.mxu0 0.0
    %1250 = vmatpush1.msra.mxu0 %v160
    %1251 = vmatprep.subr.mxu0 0.0
    %1252 = vmatpush1.msra.mxu0 %v161
    %1253 = vmatprep.subr.mxu0 0.0
    %1254 = vmatpush1.msra.mxu0 0.0
    %1255 = vmatprep.subr.mxu0 0.0
    %1256 = vmatpush1.msra.mxu0 0.0
    %1257 = vmatprep.subr.mxu0 0.0
    %1258 = vmatpush1.msra.mxu0 0.0
    %1259 = vmatprep.subr.mxu0 0.0
    %1260 = vmatpush1.msra.mxu0 0.0
    %1261 = vmatprep.subr.mxu0 0.0
    %1262 = vmatpush1.msra.mxu0 0.0
    %1263 = vmatprep.subr.mxu0 0.0
    %1264 = vmatpush1.msra.mxu0 0.0
    %1265 = vmatprep.subr.mxu0 0.0
    %1266 = vmatpush1.msra.mxu0 0.0
    %1267 = vmatprep.subr.mxu0 0.0
    %1268 = vmatpush1.msra.mxu0 0.0
    %1269 = vmatprep.subr.mxu0 0.0
    %1270 = vmatpush1.msra.mxu0 0.0
    %1271 = vmatprep.subr.mxu0 0.0
    %1272 = vmatpush1.msra.mxu0 0.0
    %1273 = vmatprep.subr.mxu0 0.0
    %1274 = vmatpush1.msra.mxu0 0.0
    %1275 = vmatprep.subr.mxu0 0.0
    %1276 = vmatpush1.msra.mxu0 0.0
    %1277 = vmatprep.subr.mxu0 0.0
    %1278 = vmatpush1.msra.mxu0 0.0
    %1279 = vmatprep.subr.mxu0 0.0
    %1280 = vmatpush1.msra.mxu0 0.0
    %1281 = vmatprep.subr.mxu0 0.0
    %1282 = vmatpush1.msra.mxu0 0.0
    %1283 = vmatprep.subr.mxu0 0.0
    %1284 = vmatpush1.msra.mxu0 0.0
    %1285 = vmatprep.subr.mxu0 0.0
    %1286 = vmatpush1.msra.mxu0 0.0
    %1287 = vmatprep.subr.mxu0 0.0
    %1288 = vmatpush1.msra.mxu0 0.0
    %1289 = vmatprep.subr.mxu0 0.0
    %1290 = vmatpush1.msra.mxu0 0.0
    %1291 = vmatprep.subr.mxu0 0.0
    %1292 = vmatpush1.msra.mxu0 0.0
    %1293 = vmatprep.subr.mxu0 0.0
    %1294 = vmatpush1.msra.mxu0 0.0
    %1295 = vmatprep.subr.mxu0 0.0
    %1296 = vmatpush1.msra.mxu0 0.0
    %1297 = vmatprep.subr.mxu0 0.0
    %1298 = vmatpush1.msra.mxu0 0.0
    %1299 = vmatprep.subr.mxu0 0.0
    %1300 = vmatpush1.msra.mxu0 0.0
    %1301 = vmatprep.subr.mxu0 0.0
    %1302 = vmatpush1.msra.mxu0 0.0
    %1303 = vmatprep.subr.mxu0 0.0
    %1304 = vmatpush1.msra.mxu0 0.0
    %1305 = vmatprep.subr.mxu0 0.0
    %1306 = vmatpush1.msra.mxu0 0.0
    %1307 = vmatprep.subr.mxu0 0.0
    %1308 = vmatpush1.msra.mxu0 0.0
    %1309 = vmatprep.mubr.f32.mxu0 0.0
    %1310 = vmatmul.mubr.f32.gmra.mrb[0].mxu0 %v1240
    %v1311 = vpop.f32.mrb[0].mxu0
    %v1312 = vadd.f32 %v1238, %v1311
    %v1313 = vpop.f32.mrb[0].mxu0
    %1314 = vmatprep.mubr.f32.mxu0 0.0
    %1315 = vmatmul.mubr.f32.gmra.mrb[0].mxu0 %v1243
    %v1316 = vpop.f32.mrb[0].mxu0
    %v1317 = vadd.f32 %v1238, %v1316
    %v1318 = vpop.f32.mrb[0].mxu0
    %1319 = vdwg.mxu0
    %v1320 = vmul.f32 %v1312, 0.5
    %v1321 = vmul.f32 %v1317, 0.5
    %v1322 = vmul.f32 %v1312, 0.044715
    %v1323 = vmul.f32 %v1317, 0.044715
    %v1324 = vmul.f32 %v1322, %v1312
    %v1325 = vmul.f32 %v1323, %v1317
    %v1326 = vmul.f32 %v1324, %v1312
    %v1327 = vmul.f32 %v1325, %v1317
    %v1328 = vadd.f32 %v1312, %v1326
    %v1329 = vadd.f32 %v1317, %v1327
    %v1330 = vmul.f32 %v1328, 0.7978846
    %v1331 = vmul.f32 %v1329, 0.7978846
    %v1332 = vtanh.pop %v1330
    %v1333 = vtanh.pop %v1331
    %v1334 = vadd.f32 %v1332, 1.0
    %v1335 = vadd.f32 %v1333, 1.0
    %v1336 = vmul.f32 %v1320, %v1334
    %v1337 = vmul.f32 %v1321, %v1335
    %v1338 = vlaneseq
    %v1339 = vshrl.u32 %v1338, 7
    %v1340 = vsub.s32 0, %v1339
    %v1341 = vrot.slane %v172, %v1340
    %v1343 = vsel %vm430, %v1336, 0
    %v1346 = vsel %vm430, %v1337, 0
    %v1349 = vsel %vm430, %v163, 0
    %v1352 = vsel %vm430, %v164, 0
    %v1355 = vsel %vm430, %v165, 0
    %v1358 = vsel %vm430, %v166, 0
    %1360 = vmatprep.subr.mxu0 0.0
    %1361 = vmatpush1.xpose.msra.mxu0 %v1349
    %1362 = vmatprep.subr.mxu0 0.0
    %1363 = vmatpush1.xpose.msra.mxu0 %v1352
    %1364 = vmatprep.subr.mxu0 0.0
    %1365 = vmatpush1.xpose.msra.mxu0 %v1355
    %1366 = vmatprep.subr.mxu0 0.0
    %1367 = vmatpush1.xpose.msra.mxu0 %v1358
    %1368 = vmatprep.subr.mxu0 0.0
    %1369 = vmatpush1.xpose.msra.mxu0 0.0
    %1370 = vmatprep.subr.mxu0 0.0
    %1371 = vmatpush1.xpose.msra.mxu0 0.0
    %1372 = vmatprep.subr.mxu0 0.0
    %1373 = vmatpush1.xpose.msra.mxu0 0.0
    %1374 = vmatprep.subr.mxu0 0.0
    %1375 = vmatpush1.xpose.msra.mxu0 0.0
    %1376 = vmatprep.subr.mxu0 0.0
    %1377 = vmatpush1.xpose.msra.mxu0 0.0
    %1378 = vmatprep.subr.mxu0 0.0
    %1379 = vmatpush1.xpose.msra.mxu0 0.0
    %1380 = vmatprep.subr.mxu0 0.0
    %1381 = vmatpush1.xpose.msra.mxu0 0.0
    %1382 = vmatprep.subr.mxu0 0.0
    %1383 = vmatpush1.xpose.msra.mxu0 0.0
    %1384 = vmatprep.subr.mxu0 0.0
    %1385 = vmatpush1.xpose.msra.mxu0 0.0
    %1386 = vmatprep.subr.mxu0 0.0
    %1387 = vmatpush1.xpose.msra.mxu0 0.0
    %1388 = vmatprep.subr.mxu0 0.0
    %1389 = vmatpush1.xpose.msra.mxu0 0.0
    %1390 = vmatprep.subr.mxu0 0.0
    %1391 = vmatpush1.xpose.msra.mxu0 0.0
    %1392 = vmatprep.subr.mxu0 0.0
    %1393 = vmatpush1.xpose.msra.mxu0 0.0
    %1394 = vmatprep.subr.mxu0 0.0
    %1395 = vmatpush1.xpose.msra.mxu0 0.0
    %1396 = vmatprep.subr.mxu0 0.0
    %1397 = vmatpush1.xpose.msra.mxu0 0.0
    %1398 = vmatprep.subr.mxu0 0.0
    %1399 = vmatpush1.xpose.msra.mxu0 0.0
    %1400 = vmatprep.subr.mxu0 0.0
    %1401 = vmatpush1.xpose.msra.mxu0 0.0
    %1402 = vmatprep.subr.mxu0 0.0
    %1403 = vmatpush1.xpose.msra.mxu0 0.0
    %1404 = vmatprep.subr.mxu0 0.0
    %1405 = vmatpush1.xpose.msra.mxu0 0.0
    %1406 = vmatprep.subr.mxu0 0.0
    %1407 = vmatpush1.xpose.msra.mxu0 0.0
    %1408 = vmatprep.subr.mxu0 0.0
    %1409 = vmatpush1.xpose.msra.mxu0 0.0
    %1410 = vmatprep.subr.mxu0 0.0
    %1411 = vmatpush1.xpose.msra.mxu0 0.0
    %1412 = vmatprep.subr.mxu0 0.0
    %1413 = vmatpush1.xpose.msra.mxu0 0.0
    %1414 = vmatprep.subr.mxu0 0.0
    %1415 = vmatpush1.xpose.msra.mxu0 0.0
    %1416 = vmatprep.subr.mxu0 0.0
    %1417 = vmatpush1.xpose.msra.mxu0 0.0
    %1418 = vmatprep.subr.mxu0 0.0
    %1419 = vmatpush1.xpose.msra.mxu0 0.0
    %1420 = vmatprep.subr.mxu0 0.0
    %1421 = vmatpush1.xpose.msra.mxu0 0.0
    %1422 = vmatprep.subr.mxu0 0.0
    %1423 = vmatpush1.xpose.msra.mxu0 0.0
    %1424 = vmatprep.mubr.f32.mxu0 0.0
    %1425 = vmatmul.mubr.f32.gmra.mrb[0].mxu0 %v1343
    %v1426 = vpop.f32.mrb[0].mxu0
    %v1427 = vadd.f32 %v1341, %v1426
    %v1428 = vpop.f32.mrb[0].mxu0
    %1429 = vmatprep.mubr.f32.mxu0 0.0
    %1430 = vmatmul.mubr.f32.gmra.mrb[0].mxu0 %v1346
    %v1431 = vpop.f32.mrb[0].mxu0
    %v1432 = vadd.f32 %v1341, %v1431
    %v1433 = vpop.f32.mrb[0].mxu0
    %1434 = vdwg.mxu0
    %v1435 = vadd.f32 %v1233, %v1427
    %v1436 = vadd.f32 %v1234, %v1432
    %v1438 = vsel %vm179, %v1435, 0
    %v1441 = vsel %vm179, %v1436, 0
    %1443 = vmatprep.subr.mxu0 0.0
    %1444 = vmatpush1.msra.mxu0 0.03125
    %1445 = vmatprep.subr.mxu0 0.0
    %1446 = vmatpush1.msra.mxu0 0.03125
    %1447 = vmatprep.subr.mxu0 0.0
    %1448 = vmatpush1.msra.mxu0 0.03125
    %1449 = vmatprep.subr.mxu0 0.0
    %1450 = vmatpush1.msra.mxu0 0.03125
    %1451 = vmatprep.subr.mxu0 0.0
    %1452 = vmatpush1.msra.mxu0 0.0
    %1453 = vmatprep.subr.mxu0 0.0
    %1454 = vmatpush1.msra.mxu0 0.0
    %1455 = vmatprep.subr.mxu0 0.0
    %1456 = vmatpush1.msra.mxu0 0.0
    %1457 = vmatprep.subr.mxu0 0.0
    %1458 = vmatpush1.msra.mxu0 0.0
    %1459 = vmatprep.subr.mxu0 0.0
    %1460 = vmatpush1.msra.mxu0 0.0
    %1461 = vmatprep.subr.mxu0 0.0
    %1462 = vmatpush1.msra.mxu0 0.0
    %1463 = vmatprep.subr.mxu0 0.0
    %1464 = vmatpush1.msra.mxu0 0.0
    %1465 = vmatprep.subr.mxu0 0.0
    %1466 = vmatpush1.msra.mxu0 0.0
    %1467 = vmatprep.subr.mxu0 0.0
    %1468 = vmatpush1.msra.mxu0 0.0
    %1469 = vmatprep.subr.mxu0 0.0
    %1470 = vmatpush1.msra.mxu0 0.0
    %1471 = vmatprep.subr.mxu0 0.0
    %1472 = vmatpush1.msra.mxu0 0.0
    %1473 = vmatprep.subr.mxu0 0.0
    %1474 = vmatpush1.msra.mxu0 0.0
    %1475 = vmatprep.subr.mxu0 0.0
    %1476 = vmatpush1.msra.mxu0 0.0
    %1477 = vmatprep.subr.mxu0 0.0
    %1478 = vmatpush1.msra.mxu0 0.0
    %1479 = vmatprep.subr.mxu0 0.0
    %1480 = vmatpush1.msra.mxu0 0.0
    %1481 = vmatprep.subr.mxu0 0.0
    %1482 = vmatpush1.msra.mxu0 0.0
    %1483 = vmatprep.subr.mxu0 0.0
    %1484 = vmatpush1.msra.mxu0 0.0
    %1485 = vmatprep.subr.mxu0 0.0
    %1486 = vmatpush1.msra.mxu0 0.0
    %1487 = vmatprep.subr.mxu0 0.0
    %1488 = vmatpush1.msra.mxu0 0.0
    %1489 = vmatprep.subr.mxu0 0.0
    %1490 = vmatpush1.msra.mxu0 0.0
    %1491 = vmatprep.subr.mxu0 0.0
    %1492 = vmatpush1.msra.mxu0 0.0
    %1493 = vmatprep.subr.mxu0 0.0
    %1494 = vmatpush1.msra.mxu0 0.0
    %1495 = vmatprep.subr.mxu0 0.0
    %1496 = vmatpush1.msra.mxu0 0.0
    %1497 = vmatprep.subr.mxu0 0.0
    %1498 = vmatpush1.msra.mxu0 0.0
    %1499 = vmatprep.subr.mxu0 0.0
    %1500 = vmatpush1.msra.mxu0 0.0
    %1501 = vmatprep.subr.mxu0 0.0
    %1502 = vmatpush1.msra.mxu0 0.0
    %1503 = vmatprep.subr.mxu0 0.0
    %1504 = vmatpush1.msra.mxu0 0.0
    %1505 = vmatprep.subr.mxu0 0.0
    %1506 = vmatpush1.msra.mxu0 0.0
    %1507 = vmatprep.mubr.f32.mxu0 0.0
    %1508 = vmatmul.mubr.f32.gmra.mrb[0].mxu0 %v1438
    %v1509 = vpop.f32.mrb[0].mxu0
    %v1510 = vadd.f32 0.0, %v1509
    %v1511 = vpop.f32.mrb[0].mxu0
    %1512 = vmatprep.mubr.f32.mxu0 0.0
    %1513 = vmatmul.mubr.f32.gmra.mrb[0].mxu0 %v1441
    %v1514 = vpop.f32.mrb[0].mxu0
    %v1515 = vadd.f32 0.0, %v1514
    %v1516 = vpop.f32.mrb[0].mxu0
    %1517 = vdwg.mxu0
    %1519 = vset.pattern.permute.xlu0 0
    %1520 = vperm.xlu0 %1519, %v1510
    %v1521 = vpop.permute.xlu0 %1520
    %1524 = vset.pattern.permute.xlu0 0
    %1525 = vperm.xlu0 %1524, %v1515
    %v1526 = vpop.permute.xlu0 %1525
    %v1528 = vsub.f32 %v1435, %v1521
    %v1529 = vsub.f32 %v1436, %v1526
    %v1530 = vmul.f32 %v1528, %v1528
    %v1531 = vmul.f32 %v1529, %v1529
    %v1533 = vsel %vm179, %v1530, 0
    %v1536 = vsel %vm179, %v1531, 0
    %1538 = vmatprep.subr.mxu0 0.0
    %1539 = vmatpush1.msra.mxu0 0.03125
    %1540 = vmatprep.subr.mxu0 0.0
    %1541 = vmatpush1.msra.mxu0 0.03125
    %1542 = vmatprep.subr.mxu0 0.0
    %1543 = vmatpush1.msra.mxu0 0.03125
    %1544 = vmatprep.subr.mxu0 0.0
    %1545 = vmatpush1.msra.mxu0 0.03125
    %1546 = vmatprep.subr.mxu0 0.0
    %1547 = vmatpush1.msra.mxu0 0.0
    %1548 = vmatprep.subr.mxu0 0.0
    %1549 = vmatpush1.msra.mxu0 0.0
    %1550 = vmatprep.subr.mxu0 0.0
    %1551 = vmatpush1.msra.mxu0 0.0
    %1552 = vmatprep.subr.mxu0 0.0
    %1553 = vmatpush1.msra.mxu0 0.0
    %1554 = vmatprep.subr.mxu0 0.0
    %1555 = vmatpush1.msra.mxu0 0.0
    %1556 = vmatprep.subr.mxu0 0.0
    %1557 = vmatpush1.msra.mxu0 0.0
    %1558 = vmatprep.subr.mxu0 0.0
    %1559 = vmatpush1.msra.mxu0 0.0
    %1560 = vmatprep.subr.mxu0 0.0
    %1561 = vmatpush1.msra.mxu0 0.0
    %1562 = vmatprep.subr.mxu0 0.0
    %1563 = vmatpush1.msra.mxu0 0.0
    %1564 = vmatprep.subr.mxu0 0.0
    %1565 = vmatpush1.msra.mxu0 0.0
    %1566 = vmatprep.subr.mxu0 0.0
    %1567 = vmatpush1.msra.mxu0 0.0
    %1568 = vmatprep.subr.mxu0 0.0
    %1569 = vmatpush1.msra.mxu0 0.0
    %1570 = vmatprep.subr.mxu0 0.0
    %1571 = vmatpush1.msra.mxu0 0.0
    %1572 = vmatprep.subr.mxu0 0.0
    %1573 = vmatpush1.msra.mxu0 0.0
    %1574 = vmatprep.subr.mxu0 0.0
    %1575 = vmatpush1.msra.mxu0 0.0
    %1576 = vmatprep.subr.mxu0 0.0
    %1577 = vmatpush1.msra.mxu0 0.0
    %1578 = vmatprep.subr.mxu0 0.0
    %1579 = vmatpush1.msra.mxu0 0.0
    %1580 = vmatprep.subr.mxu0 0.0
    %1581 = vmatpush1.msra.mxu0 0.0
    %1582 = vmatprep.subr.mxu0 0.0
    %1583 = vmatpush1.msra.mxu0 0.0
    %1584 = vmatprep.subr.mxu0 0.0
    %1585 = vmatpush1.msra.mxu0 0.0
    %1586 = vmatprep.subr.mxu0 0.0
    %1587 = vmatpush1.msra.mxu0 0.0
    %1588 = vmatprep.subr.mxu0 0.0
    %1589 = vmatpush1.msra.mxu0 0.0
    %1590 = vmatprep.subr.mxu0 0.0
    %1591 = vmatpush1.msra.mxu0 0.0
    %1592 = vmatprep.subr.mxu0 0.0
    %1593 = vmatpush1.msra.mxu0 0.0
    %1594 = vmatprep.subr.mxu0 0.0
    %1595 = vmatpush1.msra.mxu0 0.0
    %1596 = vmatprep.subr.mxu0 0.0
    %1597 = vmatpush1.msra.mxu0 0.0
    %1598 = vmatprep.subr.mxu0 0.0
    %1599 = vmatpush1.msra.mxu0 0.0
    %1600 = vmatprep.subr.mxu0 0.0
    %1601 = vmatpush1.msra.mxu0 0.0
    %1602 = vmatprep.mubr.f32.mxu0 0.0
    %1603 = vmatmul.mubr.f32.gmra.mrb[0].mxu0 %v1533
    %v1604 = vpop.f32.mrb[0].mxu0
    %v1605 = vadd.f32 1e-05, %v1604
    %v1606 = vpop.f32.mrb[0].mxu0
    %1607 = vmatprep.mubr.f32.mxu0 0.0
    %1608 = vmatmul.mubr.f32.gmra.mrb[0].mxu0 %v1536
    %v1609 = vpop.f32.mrb[0].mxu0
    %v1610 = vadd.f32 1e-05, %v1609
    %v1611 = vpop.f32.mrb[0].mxu0
    %1612 = vdwg.mxu0
    %v1613 = vrsqrt.pop %v1605
    %v1614 = vrsqrt.pop %v1610
    %1616 = vset.pattern.permute.xlu0 0
    %1617 = vperm.xlu0 %1616, %v1613
    %v1618 = vpop.permute.xlu0 %1617
    %1621 = vset.pattern.permute.xlu0 0
    %1622 = vperm.xlu0 %1621, %v1614
    %v1623 = vpop.permute.xlu0 %1622
    %v1625 = vmul.f32 %v1528, %v1618
    %v1626 = vmul.f32 %v1529, %v1623
    %v1627 = vlaneseq
    %v1628 = vshrl.u32 %v1627, 7
    %v1629 = vsub.s32 0, %v1628
    %v1630 = vrot.slane %v173, %v1629
    %v1631 = vmul.f32 %v1625, %v1630
    %v1632 = vmul.f32 %v1626, %v1630
    %v1633 = vlaneseq
    %v1634 = vshrl.u32 %v1633, 7
    %v1635 = vsub.s32 0, %v1634
    %v1636 = vrot.slane %v174, %v1635
    %v1637 = vadd.f32 %v1631, %v1636
    %v1638 = vadd.f32 %v1632, %v1636
    %s1639 = scalar_lea.vmem [#allocation2], 224
    %v1640 = vld [vmem:[%s1639] sm:$0xff]
    %v1641 = vld [vmem:[%s1639 + $0x8] sm:$0xff]
    %v1642 = vld [vmem:[%s1639 + $0x10] sm:$0xff]
    %v1643 = vld [vmem:[%s1639 + $0x18] sm:$0xff]
    %s1644 = scalar_lea.vmem [#allocation2], 256
    %v1645 = vld [vmem:[%s1644] sm:$0xff]
    %v1646 = vld [vmem:[%s1644 + $0x8] sm:$0xff]
    %v1647 = vld [vmem:[%s1644 + $0x10] sm:$0xff]
    %v1648 = vld [vmem:[%s1644 + $0x18] sm:$0xff]
    %s1649 = scalar_lea.vmem [#allocation2], 288
    %v1650 = vld [vmem:[%s1649] sm:$0xff]
    %v1651 = vld [vmem:[%s1649 + $0x8] sm:$0xff]
    %v1652 = vld [vmem:[%s1649 + $0x10] sm:$0xff]
    %v1653 = vld [vmem:[%s1649 + $0x18] sm:$0xff]
    %s1654 = scalar_lea.vmem [#allocation2], 320
    %v1655 = vld [vmem:[%s1654] sm:$0xff]
    %v1656 = vld [vmem:[%s1654 + $0x8] sm:$0xff]
    %v1657 = vld [vmem:[%s1654 + $0x10] sm:$0xff]
    %v1658 = vld [vmem:[%s1654 + $0x18] sm:$0xff]
    %v1659 = vld [vmem:[%s2 + $0x8] sm:$0x1]
    %v1660 = vld [vmem:[%s2 + $0x9] sm:$0x1]
    %v1661 = vld [vmem:[%s2 + $0xa] sm:$0x1]
    %v1662 = vld [vmem:[%s2 + $0xb] sm:$0x1]
    %v1663 = vld [vmem:[%s2 + $0xc] sm:$0x1]
    %v1664 = vld [vmem:[%s2 + $0xd] sm:$0x1]
    %v1665 = vld [vmem:[%s2 + $0xe] sm:$0x1]
    %v1666 = vld [vmem:[%s2 + $0xf] sm:$0x1]
    %v1667 = vlaneseq
    %v1668 = vshrl.u32 %v1667, 7
    %v1669 = vsub.s32 0, %v1668
    %v1670 = vrot.slane %v1659, %v1669
    %v1672 = vsel %vm179, %v1637, 0
    %v1675 = vsel %vm179, %v1638, 0
    %1677 = vmatprep.subr.mxu0 0.0
    %1678 = vmatpush1.msra.mxu0 %v1640
    %1679 = vmatprep.subr.mxu0 0.0
    %1680 = vmatpush1.msra.mxu0 %v1641
    %1681 = vmatprep.subr.mxu0 0.0
    %1682 = vmatpush1.msra.mxu0 %v1642
    %1683 = vmatprep.subr.mxu0 0.0
    %1684 = vmatpush1.msra.mxu0 %v1643
    %1685 = vmatprep.subr.mxu0 0.0
    %1686 = vmatpush1.msra.mxu0 0.0
    %1687 = vmatprep.subr.mxu0 0.0
    %1688 = vmatpush1.msra.mxu0 0.0
    %1689 = vmatprep.subr.mxu0 0.0
    %1690 = vmatpush1.msra.mxu0 0.0
    %1691 = vmatprep.subr.mxu0 0.0
    %1692 = vmatpush1.msra.mxu0 0.0
    %1693 = vmatprep.subr.mxu0 0.0
    %1694 = vmatpush1.msra.mxu0 0.0
    %1695 = vmatprep.subr.mxu0 0.0
    %1696 = vmatpush1.msra.mxu0 0.0
    %1697 = vmatprep.subr.mxu0 0.0
    %1698 = vmatpush1.msra.mxu0 0.0
    %1699 = vmatprep.subr.mxu0 0.0
    %1700 = vmatpush1.msra.mxu0 0.0
    %1701 = vmatprep.subr.mxu0 0.0
    %1702 = vmatpush1.msra.mxu0 0.0
    %1703 = vmatprep.subr.mxu0 0.0
    %1704 = vmatpush1.msra.mxu0 0.0
    %1705 = vmatprep.subr.mxu0 0.0
    %1706 = vmatpush1.msra.mxu0 0.0
    %1707 = vmatprep.subr.mxu0 0.0
    %1708 = vmatpush1.msra.mxu0 0.0
    %1709 = vmatprep.subr.mxu0 0.0
    %1710 = vmatpush1.msra.mxu0 0.0
    %1711 = vmatprep.subr.mxu0 0.0
    %1712 = vmatpush1.msra.mxu0 0.0
    %1713 = vmatprep.subr.mxu0 0.0
    %1714 = vmatpush1.msra.mxu0 0.0
    %1715 = vmatprep.subr.mxu0 0.0
    %1716 = vmatpush1.msra.mxu0 0.0
    %1717 = vmatprep.subr.mxu0 0.0
    %1718 = vmatpush1.msra.mxu0 0.0
    %1719 = vmatprep.subr.mxu0 0.0
    %1720 = vmatpush1.msra.mxu0 0.0
    %1721 = vmatprep.subr.mxu0 0.0
    %1722 = vmatpush1.msra.mxu0 0.0
    %1723 = vmatprep.subr.mxu0 0.0
    %1724 = vmatpush1.msra.mxu0 0.0
    %1725 = vmatprep.subr.mxu0 0.0
    %1726 = vmatpush1.msra.mxu0 0.0
    %1727 = vmatprep.subr.mxu0 0.0
    %1728 = vmatpush1.msra.mxu0 0.0
    %1729 = vmatprep.subr.mxu0 0.0
    %1730 = vmatpush1.msra.mxu0 0.0
    %1731 = vmatprep.subr.mxu0 0.0
    %1732 = vmatpush1.msra.mxu0 0.0
    %1733 = vmatprep.subr.mxu0 0.0
    %1734 = vmatpush1.msra.mxu0 0.0
    %1735 = vmatprep.subr.mxu0 0.0
    %1736 = vmatpush1.msra.mxu0 0.0
    %1737 = vmatprep.subr.mxu0 0.0
    %1738 = vmatpush1.msra.mxu0 0.0
    %1739 = vmatprep.subr.mxu0 0.0
    %1740 = vmatpush1.msra.mxu0 0.0
    %1741 = vmatprep.mubr.f32.mxu0 0.0
    %1742 = vmatmul.mubr.f32.gmra.mrb[0].mxu0 %v1672
    %v1743 = vpop.f32.mrb[0].mxu0
    %v1744 = vadd.f32 %v1670, %v1743
    %v1745 = vpop.f32.mrb[0].mxu0
    %1746 = vmatprep.mubr.f32.mxu0 0.0
    %1747 = vmatmul.mubr.f32.gmra.mrb[0].mxu0 %v1675
    %v1748 = vpop.f32.mrb[0].mxu0
    %v1749 = vadd.f32 %v1670, %v1748
    %v1750 = vpop.f32.mrb[0].mxu0
    %1751 = vdwg.mxu0
    %v1752 = vmul.f32 %v1744, %v127
    %v1753 = vmul.f32 %v1749, %v128
    %v1754 = vmul.f32 %v1744, %v129
    %v1755 = vmul.f32 %v1749, %v130
    %v1756 = vmul.f32 %v1744, %v131
    %v1757 = vmul.f32 %v1749, %v132
    %v1758 = vmul.f32 %v1744, %v133
    %v1759 = vmul.f32 %v1749, %v134
    %1768 = vrot.lane.b32.xlu0 %v1752, 96
    %v1769 = vpop.permute.xlu0 %1768
    %1770 = vrot.lane.b32.xlu0 %v1753, 96
    %v1771 = vpop.permute.xlu0 %1770
    %1772 = vrot.lane.b32.xlu0 %v1754, 96
    %v1773 = vpop.permute.xlu0 %1772
    %1774 = vrot.lane.b32.xlu0 %v1755, 96
    %v1775 = vpop.permute.xlu0 %1774
    %1776 = vrot.lane.b32.xlu0 %v1756, 96
    %v1777 = vpop.permute.xlu0 %1776
    %1778 = vrot.lane.b32.xlu0 %v1757, 96
    %v1779 = vpop.permute.xlu0 %1778
    %1780 = vrot.lane.b32.xlu0 %v1758, 96
    %v1781 = vpop.permute.xlu0 %1780
    %1782 = vrot.lane.b32.xlu0 %v1759, 96
    %v1783 = vpop.permute.xlu0 %1782
    %v1784 = vsel %vm179, %v1752, 0
    %v1786 = vsel %vm179, %v1753, 0
    %v1788 = vsel %vm179, %v1754, 0
    %v1790 = vsel %vm179, %v1755, 0
    %v1792 = vsel %vm179, %v1756, 0
    %v1794 = vsel %vm179, %v1757, 0
    %v1796 = vsel %vm179, %v1758, 0
    %v1798 = vsel %vm179, %v1759, 0
    %v1800 = vsel %vm179, %v1769, 0
    %v1802 = vsel %vm179, %v1771, 0
    %v1804 = vsel %vm179, %v1773, 0
    %v1806 = vsel %vm179, %v1775, 0
    %v1808 = vsel %vm179, %v1777, 0
    %v1810 = vsel %vm179, %v1779, 0
    %v1812 = vsel %vm179, %v1781, 0
    %v1814 = vsel %vm179, %v1783, 0
    %1816 = vmatprep.subr.mxu0 0.0
    %1817 = vmatpush1.xpose.msra.mxu0 %v1800
    %1818 = vmatprep.subr.mxu0 0.0
    %1819 = vmatpush1.xpose.msra.mxu0 %v1802
    %1820 = vmatprep.subr.mxu0 0.0
    %1821 = vmatpush1.xpose.msra.mxu0 %v1804
    %1822 = vmatprep.subr.mxu0 0.0
    %1823 = vmatpush1.xpose.msra.mxu0 %v1806
    %1824 = vmatprep.subr.mxu0 0.0
    %1825 = vmatpush1.xpose.msra.mxu0 %v1808
    %1826 = vmatprep.subr.mxu0 0.0
    %1827 = vmatpush1.xpose.msra.mxu0 %v1810
    %1828 = vmatprep.subr.mxu0 0.0
    %1829 = vmatpush1.xpose.msra.mxu0 %v1812
    %1830 = vmatprep.subr.mxu0 0.0
    %1831 = vmatpush1.xpose.msra.mxu0 %v1814
    %1832 = vmatprep.subr.mxu0 0.0
    %1833 = vmatpush1.xpose.msra.mxu0 0.0
    %1834 = vmatprep.subr.mxu0 0.0
    %1835 = vmatpush1.xpose.msra.mxu0 0.0
    %1836 = vmatprep.subr.mxu0 0.0
    %1837 = vmatpush1.xpose.msra.mxu0 0.0
    %1838 = vmatprep.subr.mxu0 0.0
    %1839 = vmatpush1.xpose.msra.mxu0 0.0
    %1840 = vmatprep.subr.mxu0 0.0
    %1841 = vmatpush1.xpose.msra.mxu0 0.0
    %1842 = vmatprep.subr.mxu0 0.0
    %1843 = vmatpush1.xpose.msra.mxu0 0.0
    %1844 = vmatprep.subr.mxu0 0.0
    %1845 = vmatpush1.xpose.msra.mxu0 0.0
    %1846 = vmatprep.subr.mxu0 0.0
    %1847 = vmatpush1.xpose.msra.mxu0 0.0
    %1848 = vmatprep.subr.mxu0 0.0
    %1849 = vmatpush1.xpose.msra.mxu0 0.0
    %1850 = vmatprep.subr.mxu0 0.0
    %1851 = vmatpush1.xpose.msra.mxu0 0.0
    %1852 = vmatprep.subr.mxu0 0.0
    %1853 = vmatpush1.xpose.msra.mxu0 0.0
    %1854 = vmatprep.subr.mxu0 0.0
    %1855 = vmatpush1.xpose.msra.mxu0 0.0
    %1856 = vmatprep.subr.mxu0 0.0
    %1857 = vmatpush1.xpose.msra.mxu0 0.0
    %1858 = vmatprep.subr.mxu0 0.0
    %1859 = vmatpush1.xpose.msra.mxu0 0.0
    %1860 = vmatprep.subr.mxu0 0.0
    %1861 = vmatpush1.xpose.msra.mxu0 0.0
    %1862 = vmatprep.subr.mxu0 0.0
    %1863 = vmatpush1.xpose.msra.mxu0 0.0
    %1864 = vmatprep.subr.mxu0 0.0
    %1865 = vmatpush1.xpose.msra.mxu0 0.0
    %1866 = vmatprep.subr.mxu0 0.0
    %1867 = vmatpush1.xpose.msra.mxu0 0.0
    %1868 = vmatprep.subr.mxu0 0.0
    %1869 = vmatpush1.xpose.msra.mxu0 0.0
    %1870 = vmatprep.subr.mxu0 0.0
    %1871 = vmatpush1.xpose.msra.mxu0 0.0
    %1872 = vmatprep.subr.mxu0 0.0
    %1873 = vmatpush1.xpose.msra.mxu0 0.0
    %1874 = vmatprep.subr.mxu0 0.0
    %1875 = vmatpush1.xpose.msra.mxu0 0.0
    %1876 = vmatprep.subr.mxu0 0.0
    %1877 = vmatpush1.xpose.msra.mxu0 0.0
    %1878 = vmatprep.subr.mxu0 0.0
    %1879 = vmatpush1.xpose.msra.mxu0 0.0
    %1880 = vmatprep.mubr.f32.mxu0 0.0
    %1881 = vmatmul.mubr.f32.gmra.mrb[0].mxu0 %v1784
    %v1882 = vpop.f32.mrb[0].mxu0
    %v1883 = vadd.f32 %v136, %v1882
    %v1884 = vpop.f32.mrb[0].mxu0
    %1885 = vmatprep.mubr.f32.mxu0 0.0
    %1886 = vmatmul.mubr.f32.gmra.mrb[0].mxu0 %v1786
    %v1887 = vpop.f32.mrb[0].mxu0
    %v1888 = vadd.f32 %v137, %v1887
    %v1889 = vpop.f32.mrb[0].mxu0
    %1890 = vmatprep.mubr.f32.mxu0 0.0
    %1891 = vmatmul.mubr.f32.gmra.mrb[0].mxu0 %v1788
    %v1892 = vpop.f32.mrb[0].mxu0
    %v1893 = vadd.f32 %v138, %v1892
    %v1894 = vpop.f32.mrb[0].mxu0
    %1895 = vmatprep.mubr.f32.mxu0 0.0
    %1896 = vmatmul.mubr.f32.gmra.mrb[0].mxu0 %v1790
    %v1897 = vpop.f32.mrb[0].mxu0
    %v1898 = vadd.f32 %v139, %v1897
    %v1899 = vpop.f32.mrb[0].mxu0
    %1900 = vmatprep.mubr.f32.mxu0 0.0
    %1901 = vmatmul.mubr.f32.gmra.mrb[0].mxu0 %v1792
    %v1902 = vpop.f32.mrb[0].mxu0
    %v1903 = vadd.f32 %v140, %v1902
    %v1904 = vpop.f32.mrb[0].mxu0
    %1905 = vmatprep.mubr.f32.mxu0 0.0
    %1906 = vmatmul.mubr.f32.gmra.mrb[0].mxu0 %v1794
    %v1907 = vpop.f32.mrb[0].mxu0
    %v1908 = vadd.f32 %v141, %v1907
    %v1909 = vpop.f32.mrb[0].mxu0
    %1910 = vmatprep.mubr.f32.mxu0 0.0
    %1911 = vmatmul.mubr.f32.gmra.mrb[0].mxu0 %v1796
    %v1912 = vpop.f32.mrb[0].mxu0
    %v1913 = vadd.f32 %v142, %v1912
    %v1914 = vpop.f32.mrb[0].mxu0
    %1915 = vmatprep.mubr.f32.mxu0 0.0
    %1916 = vmatmul.mubr.f32.gmra.mrb[0].mxu0 %v1798
    %v1917 = vpop.f32.mrb[0].mxu0
    %v1918 = vadd.f32 %v143, %v1917
    %v1919 = vpop.f32.mrb[0].mxu0
    %1920 = vdwg.mxu0
    %v1921 = vsel %vm430, %v1883, -inf
    %1922 = vmax.xlane.f32.xlu0 %v1921
    %v1923 = vpop.xlane.xlu0 %1922
    %v1924 = vsel %vm430, %v1888, -inf
    %1925 = vmax.xlane.f32.xlu0 %v1924
    %v1926 = vpop.xlane.xlu0 %1925
    %v1927 = vsel %vm430, %v1893, -inf
    %1928 = vmax.xlane.f32.xlu0 %v1927
    %v1929 = vpop.xlane.xlu0 %1928
    %v1930 = vsel %vm430, %v1898, -inf
    %1931 = vmax.xlane.f32.xlu0 %v1930
    %v1932 = vpop.xlane.xlu0 %1931
    %v1933 = vsel %vm430, %v1903, -inf
    %1934 = vmax.xlane.f32.xlu0 %v1933
    %v1935 = vpop.xlane.xlu0 %1934
    %v1936 = vsel %vm430, %v1908, -inf
    %1937 = vmax.xlane.f32.xlu0 %v1936
    %v1938 = vpop.xlane.xlu0 %1937
    %v1939 = vsel %vm430, %v1913, -inf
    %1940 = vmax.xlane.f32.xlu0 %v1939
    %v1941 = vpop.xlane.xlu0 %1940
    %v1942 = vsel %vm430, %v1918, -inf
    %1943 = vmax.xlane.f32.xlu0 %v1942
    %v1944 = vpop.xlane.xlu0 %1943
    %v1945 = vsub.f32 %v1883, %v1923
    %v1946 = vsub.f32 %v1888, %v1926
    %v1947 = vsub.f32 %v1893, %v1929
    %v1948 = vsub.f32 %v1898, %v1932
    %v1949 = vsub.f32 %v1903, %v1935
    %v1950 = vsub.f32 %v1908, %v1938
    %v1951 = vsub.f32 %v1913, %v1941
    %v1952 = vsub.f32 %v1918, %v1944
    %v1953 = vmul.f32 %v1945, 1.442695
    %v1954 = vpow.pop %v1953
    %v1955 = vmul.f32 %v1946, 1.442695
    %v1956 = vpow.pop %v1955
    %v1957 = vmul.f32 %v1947, 1.442695
    %v1958 = vpow.pop %v1957
    %v1959 = vmul.f32 %v1948, 1.442695
    %v1960 = vpow.pop %v1959
    %v1961 = vmul.f32 %v1949, 1.442695
    %v1962 = vpow.pop %v1961
    %v1963 = vmul.f32 %v1950, 1.442695
    %v1964 = vpow.pop %v1963
    %v1965 = vmul.f32 %v1951, 1.442695
    %v1966 = vpow.pop %v1965
    %v1967 = vmul.f32 %v1952, 1.442695
    %v1968 = vpow.pop %v1967
    %v1970 = vsel %vm430, %v1954, 0
    %v1973 = vsel %vm430, %v1956, 0
    %v1976 = vsel %vm430, %v1958, 0
    %v1979 = vsel %vm430, %v1960, 0
    %v1982 = vsel %vm430, %v1962, 0
    %v1985 = vsel %vm430, %v1964, 0
    %v1988 = vsel %vm430, %v1966, 0
    %v1991 = vsel %vm430, %v1968, 0
    %1993 = vmatprep.subr.mxu0 0.0
    %1994 = vmatpush1.msra.mxu0 1.0
    %1995 = vmatprep.subr.mxu0 0.0
    %1996 = vmatpush1.msra.mxu0 1.0
    %1997 = vmatprep.subr.mxu0 0.0
    %1998 = vmatpush1.msra.mxu0 1.0
    %1999 = vmatprep.subr.mxu0 0.0
    %2000 = vmatpush1.msra.mxu0 1.0
    %2001 = vmatprep.subr.mxu0 0.0
    %2002 = vmatpush1.msra.mxu0 1.0
    %2003 = vmatprep.subr.mxu0 0.0
    %2004 = vmatpush1.msra.mxu0 1.0
    %2005 = vmatprep.subr.mxu0 0.0
    %2006 = vmatpush1.msra.mxu0 1.0
    %2007 = vmatprep.subr.mxu0 0.0
    %2008 = vmatpush1.msra.mxu0 1.0
    %2009 = vmatprep.subr.mxu0 0.0
    %2010 = vmatpush1.msra.mxu0 0.0
    %2011 = vmatprep.subr.mxu0 0.0
    %2012 = vmatpush1.msra.mxu0 0.0
    %2013 = vmatprep.subr.mxu0 0.0
    %2014 = vmatpush1.msra.mxu0 0.0
    %2015 = vmatprep.subr.mxu0 0.0
    %2016 = vmatpush1.msra.mxu0 0.0
    %2017 = vmatprep.subr.mxu0 0.0
    %2018 = vmatpush1.msra.mxu0 0.0
    %2019 = vmatprep.subr.mxu0 0.0
    %2020 = vmatpush1.msra.mxu0 0.0
    %2021 = vmatprep.subr.mxu0 0.0
    %2022 = vmatpush1.msra.mxu0 0.0
    %2023 = vmatprep.subr.mxu0 0.0
    %2024 = vmatpush1.msra.mxu0 0.0
    %2025 = vmatprep.subr.mxu0 0.0
    %2026 = vmatpush1.msra.mxu0 0.0
    %2027 = vmatprep.subr.mxu0 0.0
    %2028 = vmatpush1.msra.mxu0 0.0
    %2029 = vmatprep.subr.mxu0 0.0
    %2030 = vmatpush1.msra.mxu0 0.0
    %2031 = vmatprep.subr.mxu0 0.0
    %2032 = vmatpush1.msra.mxu0 0.0
    %2033 = vmatprep.subr.mxu0 0.0
    %2034 = vmatpush1.msra.mxu0 0.0
    %2035 = vmatprep.subr.mxu0 0.0
    %2036 = vmatpush1.msra.mxu0 0.0
    %2037 = vmatprep.subr.mxu0 0.0
    %2038 = vmatpush1.msra.mxu0 0.0
    %2039 = vmatprep.subr.mxu0 0.0
    %2040 = vmatpush1.msra.mxu0 0.0
    %2041 = vmatprep.subr.mxu0 0.0
    %2042 = vmatpush1.msra.mxu0 0.0
    %2043 = vmatprep.subr.mxu0 0.0
    %2044 = vmatpush1.msra.mxu0 0.0
    %2045 = vmatprep.subr.mxu0 0.0
    %2046 = vmatpush1.msra.mxu0 0.0
    %2047 = vmatprep.subr.mxu0 0.0
    %2048 = vmatpush1.msra.mxu0 0.0
    %2049 = vmatprep.subr.mxu0 0.0
    %2050 = vmatpush1.msra.mxu0 0.0
    %2051 = vmatprep.subr.mxu0 0.0
    %2052 = vmatpush1.msra.mxu0 0.0
    %2053 = vmatprep.subr.mxu0 0.0
    %2054 = vmatpush1.msra.mxu0 0.0
    %2055 = vmatprep.subr.mxu0 0.0
    %2056 = vmatpush1.msra.mxu0 0.0
    %2057 = vmatprep.mubr.f32.mxu0 0.0
    %2058 = vmatmul.mubr.f32.gmra.mrb[0].mxu0 %v1970
    %v2059 = vpop.f32.mrb[0].mxu0
    %v2060 = vadd.f32 0.0, %v2059
    %v2061 = vpop.f32.mrb[0].mxu0
    %2062 = vmatprep.mubr.f32.mxu0 0.0
    %2063 = vmatmul.mubr.f32.gmra.mrb[0].mxu0 %v1973
    %v2064 = vpop.f32.mrb[0].mxu0
    %v2065 = vadd.f32 0.0, %v2064
    %v2066 = vpop.f32.mrb[0].mxu0
    %2067 = vmatprep.mubr.f32.mxu0 0.0
    %2068 = vmatmul.mubr.f32.gmra.mrb[0].mxu0 %v1976
    %v2069 = vpop.f32.mrb[0].mxu0
    %v2070 = vadd.f32 0.0, %v2069
    %v2071 = vpop.f32.mrb[0].mxu0
    %2072 = vmatprep.mubr.f32.mxu0 0.0
    %2073 = vmatmul.mubr.f32.gmra.mrb[0].mxu0 %v1979
    %v2074 = vpop.f32.mrb[0].mxu0
    %v2075 = vadd.f32 0.0, %v2074
    %v2076 = vpop.f32.mrb[0].mxu0
    %2077 = vmatprep.mubr.f32.mxu0 0.0
    %2078 = vmatmul.mubr.f32.gmra.mrb[0].mxu0 %v1982
    %v2079 = vpop.f32.mrb[0].mxu0
    %v2080 = vadd.f32 0.0, %v2079
    %v2081 = vpop.f32.mrb[0].mxu0
    %2082 = vmatprep.mubr.f32.mxu0 0.0
    %2083 = vmatmul.mubr.f32.gmra.mrb[0].mxu0 %v1985
    %v2084 = vpop.f32.mrb[0].mxu0
    %v2085 = vadd.f32 0.0, %v2084
    %v2086 = vpop.f32.mrb[0].mxu0
    %2087 = vmatprep.mubr.f32.mxu0 0.0
    %2088 = vmatmul.mubr.f32.gmra.mrb[0].mxu0 %v1988
    %v2089 = vpop.f32.mrb[0].mxu0
    %v2090 = vadd.f32 0.0, %v2089
    %v2091 = vpop.f32.mrb[0].mxu0
    %2092 = vmatprep.mubr.f32.mxu0 0.0
    %2093 = vmatmul.mubr.f32.gmra.mrb[0].mxu0 %v1991
    %v2094 = vpop.f32.mrb[0].mxu0
    %v2095 = vadd.f32 0.0, %v2094
    %v2096 = vpop.f32.mrb[0].mxu0
    %2097 = vdwg.mxu0
    %v2098 = vrcp.pop %v2060
    %v2099 = vrcp.pop %v2065
    %v2100 = vrcp.pop %v2070
    %v2101 = vrcp.pop %v2075
    %v2102 = vrcp.pop %v2080
    %v2103 = vrcp.pop %v2085
    %v2104 = vrcp.pop %v2090
    %v2105 = vrcp.pop %v2095
    %2107 = vset.pattern.permute.xlu0 0
    %2108 = vperm.xlu0 %2107, %v2098
    %v2109 = vpop.permute.xlu0 %2108
    %2112 = vset.pattern.permute.xlu0 0
    %2113 = vperm.xlu0 %2112, %v2099
    %v2114 = vpop.permute.xlu0 %2113
    %2117 = vset.pattern.permute.xlu0 0
    %2118 = vperm.xlu0 %2117, %v2100
    %v2119 = vpop.permute.xlu0 %2118
    %2122 = vset.pattern.permute.xlu0 0
    %2123 = vperm.xlu0 %2122, %v2101
    %v2124 = vpop.permute.xlu0 %2123
    %2127 = vset.pattern.permute.xlu0 0
    %2128 = vperm.xlu0 %2127, %v2102
    %v2129 = vpop.permute.xlu0 %2128
    %2132 = vset.pattern.permute.xlu0 0
    %2133 = vperm.xlu0 %2132, %v2103
    %v2134 = vpop.permute.xlu0 %2133
    %2137 = vset.pattern.permute.xlu0 0
    %2138 = vperm.xlu0 %2137, %v2104
    %v2139 = vpop.permute.xlu0 %2138
    %2142 = vset.pattern.permute.xlu0 0
    %2143 = vperm.xlu0 %2142, %v2105
    %v2144 = vpop.permute.xlu0 %2143
    %v2146 = vmul.f32 %v1954, %v2109
    %v2147 = vmul.f32 %v1956, %v2114
    %v2148 = vmul.f32 %v1958, %v2119
    %v2149 = vmul.f32 %v1960, %v2124
    %v2150 = vmul.f32 %v1962, %v2129
    %v2151 = vmul.f32 %v1964, %v2134
    %v2152 = vmul.f32 %v1966, %v2139
    %v2153 = vmul.f32 %v1968, %v2144
    %2154 = vrot.lane.b32.xlu0 %v1752, 64
    %v2155 = vpop.permute.xlu0 %2154
    %2156 = vrot.lane.b32.xlu0 %v1753, 64
    %v2157 = vpop.permute.xlu0 %2156
    %2158 = vrot.lane.b32.xlu0 %v1754, 64
    %v2159 = vpop.permute.xlu0 %2158
    %2160 = vrot.lane.b32.xlu0 %v1755, 64
    %v2161 = vpop.permute.xlu0 %2160
    %2162 = vrot.lane.b32.xlu0 %v1756, 64
    %v2163 = vpop.permute.xlu0 %2162
    %2164 = vrot.lane.b32.xlu0 %v1757, 64
    %v2165 = vpop.permute.xlu0 %2164
    %2166 = vrot.lane.b32.xlu0 %v1758, 64
    %v2167 = vpop.permute.xlu0 %2166
    %2168 = vrot.lane.b32.xlu0 %v1759, 64
    %v2169 = vpop.permute.xlu0 %2168
    %v2179 = vsel %vm430, %v2146, 0
    %v2182 = vsel %vm430, %v2147, 0
    %v2185 = vsel %vm430, %v2148, 0
    %v2188 = vsel %vm430, %v2149, 0
    %v2191 = vsel %vm430, %v2150, 0
    %v2194 = vsel %vm430, %v2151, 0
    %v2197 = vsel %vm430, %v2152, 0
    %v2200 = vsel %vm430, %v2153, 0
    %2202 = vmatprep.subr.mxu0 0.0
    %2203 = vmatpush1.msra.mxu0 %v2155
    %2204 = vmatprep.subr.mxu0 0.0
    %2205 = vmatpush1.msra.mxu0 %v2157
    %2206 = vmatprep.subr.mxu0 0.0
    %2207 = vmatpush1.msra.mxu0 %v2159
    %2208 = vmatprep.subr.mxu0 0.0
    %2209 = vmatpush1.msra.mxu0 %v2161
    %2210 = vmatprep.subr.mxu0 0.0
    %2211 = vmatpush1.msra.mxu0 %v2163
    %2212 = vmatprep.subr.mxu0 0.0
    %2213 = vmatpush1.msra.mxu0 %v2165
    %2214 = vmatprep.subr.mxu0 0.0
    %2215 = vmatpush1.msra.mxu0 %v2167
    %2216 = vmatprep.subr.mxu0 0.0
    %2217 = vmatpush1.msra.mxu0 %v2169
    %2218 = vmatprep.subr.mxu0 0.0
    %2219 = vmatpush1.msra.mxu0 0.0
    %2220 = vmatprep.subr.mxu0 0.0
    %2221 = vmatpush1.msra.mxu0 0.0
    %2222 = vmatprep.subr.mxu0 0.0
    %2223 = vmatpush1.msra.mxu0 0.0
    %2224 = vmatprep.subr.mxu0 0.0
    %2225 = vmatpush1.msra.mxu0 0.0
    %2226 = vmatprep.subr.mxu0 0.0
    %2227 = vmatpush1.msra.mxu0 0.0
    %2228 = vmatprep.subr.mxu0 0.0
    %2229 = vmatpush1.msra.mxu0 0.0
    %2230 = vmatprep.subr.mxu0 0.0
    %2231 = vmatpush1.msra.mxu0 0.0
    %2232 = vmatprep.subr.mxu0 0.0
    %2233 = vmatpush1.msra.mxu0 0.0
    %2234 = vmatprep.subr.mxu0 0.0
    %2235 = vmatpush1.msra.mxu0 0.0
    %2236 = vmatprep.subr.mxu0 0.0
    %2237 = vmatpush1.msra.mxu0 0.0
    %2238 = vmatprep.subr.mxu0 0.0
    %2239 = vmatpush1.msra.mxu0 0.0
    %2240 = vmatprep.subr.mxu0 0.0
    %2241 = vmatpush1.msra.mxu0 0.0
    %2242 = vmatprep.subr.mxu0 0.0
    %2243 = vmatpush1.msra.mxu0 0.0
    %2244 = vmatprep.subr.mxu0 0.0
    %2245 = vmatpush1.msra.mxu0 0.0
    %2246 = vmatprep.subr.mxu0 0.0
    %2247 = vmatpush1.msra.mxu0 0.0
    %2248 = vmatprep.subr.mxu0 0.0
    %2249 = vmatpush1.msra.mxu0 0.0
    %2250 = vmatprep.subr.mxu0 0.0
    %2251 = vmatpush1.msra.mxu0 0.0
    %2252 = vmatprep.subr.mxu0 0.0
    %2253 = vmatpush1.msra.mxu0 0.0
    %2254 = vmatprep.subr.mxu0 0.0
    %2255 = vmatpush1.msra.mxu0 0.0
    %2256 = vmatprep.subr.mxu0 0.0
    %2257 = vmatpush1.msra.mxu0 0.0
    %2258 = vmatprep.subr.mxu0 0.0
    %2259 = vmatpush1.msra.mxu0 0.0
    %2260 = vmatprep.subr.mxu0 0.0
    %2261 = vmatpush1.msra.mxu0 0.0
    %2262 = vmatprep.subr.mxu0 0.0
    %2263 = vmatpush1.msra.mxu0 0.0
    %2264 = vmatprep.subr.mxu0 0.0
    %2265 = vmatpush1.msra.mxu0 0.0
    %2266 = vmatprep.mubr.f32.mxu0 0.0
    %2267 = vmatmul.mubr.f32.gmra.mrb[0].mxu0 %v2179
    %v2268 = vpop.f32.mrb[0].mxu0
    %v2269 = vadd.f32 0.0, %v2268
    %v2270 = vpop.f32.mrb[0].mxu0
    %2271 = vmatprep.mubr.f32.mxu0 0.0
    %2272 = vmatmul.mubr.f32.gmra.mrb[0].mxu0 %v2182
    %v2273 = vpop.f32.mrb[0].mxu0
    %v2274 = vadd.f32 0.0, %v2273
    %v2275 = vpop.f32.mrb[0].mxu0
    %2276 = vmatprep.mubr.f32.mxu0 0.0
    %2277 = vmatmul.mubr.f32.gmra.mrb[0].mxu0 %v2185
    %v2278 = vpop.f32.mrb[0].mxu0
    %v2279 = vadd.f32 0.0, %v2278
    %v2280 = vpop.f32.mrb[0].mxu0
    %2281 = vmatprep.mubr.f32.mxu0 0.0
    %2282 = vmatmul.mubr.f32.gmra.mrb[0].mxu0 %v2188
    %v2283 = vpop.f32.mrb[0].mxu0
    %v2284 = vadd.f32 0.0, %v2283
    %v2285 = vpop.f32.mrb[0].mxu0
    %2286 = vmatprep.mubr.f32.mxu0 0.0
    %2287 = vmatmul.mubr.f32.gmra.mrb[0].mxu0 %v2191
    %v2288 = vpop.f32.mrb[0].mxu0
    %v2289 = vadd.f32 0.0, %v2288
    %v2290 = vpop.f32.mrb[0].mxu0
    %2291 = vmatprep.mubr.f32.mxu0 0.0
    %2292 = vmatmul.mubr.f32.gmra.mrb[0].mxu0 %v2194
    %v2293 = vpop.f32.mrb[0].mxu0
    %v2294 = vadd.f32 0.0, %v2293
    %v2295 = vpop.f32.mrb[0].mxu0
    %2296 = vmatprep.mubr.f32.mxu0 0.0
    %2297 = vmatmul.mubr.f32.gmra.mrb[0].mxu0 %v2197
    %v2298 = vpop.f32.mrb[0].mxu0
    %v2299 = vadd.f32 0.0, %v2298
    %v2300 = vpop.f32.mrb[0].mxu0
    %2301 = vmatprep.mubr.f32.mxu0 0.0
    %2302 = vmatmul.mubr.f32.gmra.mrb[0].mxu0 %v2200
    %v2303 = vpop.f32.mrb[0].mxu0
    %v2304 = vadd.f32 0.0, %v2303
    %v2305 = vpop.f32.mrb[0].mxu0
    %2306 = vdwg.mxu0
    %v2308 = vsel %vm179, %v2269, 0
    %v2311 = vsel %vm179, %v2274, 0
    %v2314 = vsel %vm179, %v2279, 0
    %v2317 = vsel %vm179, %v2284, 0
    %v2320 = vsel %vm179, %v2289, 0
    %v2323 = vsel %vm179, %v2294, 0
    %v2326 = vsel %vm179, %v2299, 0
    %v2329 = vsel %vm179, %v2304, 0
    %2331 = vmatprep.subr.mxu0 0.0
    %2332 = vmatpush1.msra.mxu0 %v1645
    %2333 = vmatprep.subr.mxu0 0.0
    %2334 = vmatpush1.msra.mxu0 %v1646
    %2335 = vmatprep.subr.mxu0 0.0
    %2336 = vmatpush1.msra.mxu0 %v1647
    %2337 = vmatprep.subr.mxu0 0.0
    %2338 = vmatpush1.msra.mxu0 %v1648
    %2339 = vmatprep.subr.mxu0 0.0
    %2340 = vmatpush1.msra.mxu0 0.0
    %2341 = vmatprep.subr.mxu0 0.0
    %2342 = vmatpush1.msra.mxu0 0.0
    %2343 = vmatprep.subr.mxu0 0.0
    %2344 = vmatpush1.msra.mxu0 0.0
    %2345 = vmatprep.subr.mxu0 0.0
    %2346 = vmatpush1.msra.mxu0 0.0
    %2347 = vmatprep.subr.mxu0 0.0
    %2348 = vmatpush1.msra.mxu0 0.0
    %2349 = vmatprep.subr.mxu0 0.0
    %2350 = vmatpush1.msra.mxu0 0.0
    %2351 = vmatprep.subr.mxu0 0.0
    %2352 = vmatpush1.msra.mxu0 0.0
    %2353 = vmatprep.subr.mxu0 0.0
    %2354 = vmatpush1.msra.mxu0 0.0
    %2355 = vmatprep.subr.mxu0 0.0
    %2356 = vmatpush1.msra.mxu0 0.0
    %2357 = vmatprep.subr.mxu0 0.0
    %2358 = vmatpush1.msra.mxu0 0.0
    %2359 = vmatprep.subr.mxu0 0.0
    %2360 = vmatpush1.msra.mxu0 0.0
    %2361 = vmatprep.subr.mxu0 0.0
    %2362 = vmatpush1.msra.mxu0 0.0
    %2363 = vmatprep.subr.mxu0 0.0
    %2364 = vmatpush1.msra.mxu0 0.0
    %2365 = vmatprep.subr.mxu0 0.0
    %2366 = vmatpush1.msra.mxu0 0.0
    %2367 = vmatprep.subr.mxu0 0.0
    %2368 = vmatpush1.msra.mxu0 0.0
    %2369 = vmatprep.subr.mxu0 0.0
    %2370 = vmatpush1.msra.mxu0 0.0
    %2371 = vmatprep.subr.mxu0 0.0
    %2372 = vmatpush1.msra.mxu0 0.0
    %2373 = vmatprep.subr.mxu0 0.0
    %2374 = vmatpush1.msra.mxu0 0.0
    %2375 = vmatprep.subr.mxu0 0.0
    %2376 = vmatpush1.msra.mxu0 0.0
    %2377 = vmatprep.subr.mxu0 0.0
    %2378 = vmatpush1.msra.mxu0 0.0
    %2379 = vmatprep.subr.mxu0 0.0
    %2380 = vmatpush1.msra.mxu0 0.0
    %2381 = vmatprep.subr.mxu0 0.0
    %2382 = vmatpush1.msra.mxu0 0.0
    %2383 = vmatprep.subr.mxu0 0.0
    %2384 = vmatpush1.msra.mxu0 0.0
    %2385 = vmatprep.subr.mxu0 0.0
    %2386 = vmatpush1.msra.mxu0 0.0
    %2387 = vmatprep.subr.mxu0 0.0
    %2388 = vmatpush1.msra.mxu0 0.0
    %2389 = vmatprep.subr.mxu0 0.0
    %2390 = vmatpush1.msra.mxu0 0.0
    %2391 = vmatprep.subr.mxu0 0.0
    %2392 = vmatpush1.msra.mxu0 0.0
    %2393 = vmatprep.subr.mxu0 0.0
    %2394 = vmatpush1.msra.mxu0 0.0
    %2395 = vmatprep.mubr.f32.mxu0 0.0
    %2396 = vmatmul.mubr.f32.gmra.mrb[0].mxu0 %v2308
    %v2397 = vpop.f32.mrb[0].mxu0
    %v2398 = vadd.f32 0.0, %v2397
    %v2399 = vpop.f32.mrb[0].mxu0
    %2400 = vmatprep.mubr.f32.mxu0 0.0
    %2401 = vmatmul.mubr.f32.gmra.mrb[0].mxu0 %v2311
    %v2402 = vpop.f32.mrb[0].mxu0
    %v2403 = vadd.f32 0.0, %v2402
    %v2404 = vpop.f32.mrb[0].mxu0
    %2405 = vmatprep.mubr.f32.mxu0 0.0
    %2406 = vmatmul.mubr.f32.gmra.mrb[0].mxu0 %v2314
    %v2407 = vpop.f32.mrb[0].mxu0
    %v2408 = vadd.f32 0.0, %v2407
    %v2409 = vpop.f32.mrb[0].mxu0
    %2410 = vmatprep.mubr.f32.mxu0 0.0
    %2411 = vmatmul.mubr.f32.gmra.mrb[0].mxu0 %v2317
    %v2412 = vpop.f32.mrb[0].mxu0
    %v2413 = vadd.f32 0.0, %v2412
    %v2414 = vpop.f32.mrb[0].mxu0
    %2415 = vmatprep.mubr.f32.mxu0 0.0
    %2416 = vmatmul.mubr.f32.gmra.mrb[0].mxu0 %v2320
    %v2417 = vpop.f32.mrb[0].mxu0
    %v2418 = vadd.f32 0.0, %v2417
    %v2419 = vpop.f32.mrb[0].mxu0
    %2420 = vmatprep.mubr.f32.mxu0 0.0
    %2421 = vmatmul.mubr.f32.gmra.mrb[0].mxu0 %v2323
    %v2422 = vpop.f32.mrb[0].mxu0
    %v2423 = vadd.f32 0.0, %v2422
    %v2424 = vpop.f32.mrb[0].mxu0
    %2425 = vmatprep.mubr.f32.mxu0 0.0
    %2426 = vmatmul.mubr.f32.gmra.mrb[0].mxu0 %v2326
    %v2427 = vpop.f32.mrb[0].mxu0
    %v2428 = vadd.f32 0.0, %v2427
    %v2429 = vpop.f32.mrb[0].mxu0
    %2430 = vmatprep.mubr.f32.mxu0 0.0
    %2431 = vmatmul.mubr.f32.gmra.mrb[0].mxu0 %v2329
    %v2432 = vpop.f32.mrb[0].mxu0
    %v2433 = vadd.f32 0.0, %v2432
    %v2434 = vpop.f32.mrb[0].mxu0
    %2435 = vdwg.mxu0
    %v2436 = vlaneseq
    %v2437 = vshrl.u32 %v2436, 7
    %v2438 = vsub.s32 0, %v2437
    %v2439 = vrot.slane %v1660, %v2438
    %2440 = vmatprep.subr.mxu0 0.0
    %2441 = vmatpush1.msra.mxu0 %v2398
    %2442 = vmatprep.subr.mxu0 0.0
    %2443 = vmatpush1.msra.mxu0 %v2403
    %2444 = vmatprep.subr.mxu0 0.0
    %2445 = vmatpush1.msra.mxu0 %v2408
    %2446 = vmatprep.subr.mxu0 0.0
    %2447 = vmatpush1.msra.mxu0 %v2413
    %2448 = vmatprep.subr.mxu0 0.0
    %2449 = vmatpush1.msra.mxu0 %v2418
    %2450 = vmatprep.subr.mxu0 0.0
    %2451 = vmatpush1.msra.mxu0 %v2423
    %2452 = vmatprep.subr.mxu0 0.0
    %2453 = vmatpush1.msra.mxu0 %v2428
    %2454 = vmatprep.subr.mxu0 0.0
    %2455 = vmatpush1.msra.mxu0 %v2433
    %2456 = vmatprep.subr.mxu0 0.0
    %2457 = vmatpush1.msra.mxu0 0.0
    %2458 = vmatprep.subr.mxu0 0.0
    %2459 = vmatpush1.msra.mxu0 0.0
    %2460 = vmatprep.subr.mxu0 0.0
    %2461 = vmatpush1.msra.mxu0 0.0
    %2462 = vmatprep.subr.mxu0 0.0
    %2463 = vmatpush1.msra.mxu0 0.0
    %2464 = vmatprep.subr.mxu0 0.0
    %2465 = vmatpush1.msra.mxu0 0.0
    %2466 = vmatprep.subr.mxu0 0.0
    %2467 = vmatpush1.msra.mxu0 0.0
    %2468 = vmatprep.subr.mxu0 0.0
    %2469 = vmatpush1.msra.mxu0 0.0
    %2470 = vmatprep.subr.mxu0 0.0
    %2471 = vmatpush1.msra.mxu0 0.0
    %2472 = vmatprep.subr.mxu0 0.0
    %2473 = vmatpush1.msra.mxu0 0.0
    %2474 = vmatprep.subr.mxu0 0.0
    %2475 = vmatpush1.msra.mxu0 0.0
    %2476 = vmatprep.subr.mxu0 0.0
    %2477 = vmatpush1.msra.mxu0 0.0
    %2478 = vmatprep.subr.mxu0 0.0
    %2479 = vmatpush1.msra.mxu0 0.0
    %2480 = vmatprep.subr.mxu0 0.0
    %2481 = vmatpush1.msra.mxu0 0.0
    %2482 = vmatprep.subr.mxu0 0.0
    %2483 = vmatpush1.msra.mxu0 0.0
    %2484 = vmatprep.subr.mxu0 0.0
    %2485 = vmatpush1.msra.mxu0 0.0
    %2486 = vmatprep.subr.mxu0 0.0
    %2487 = vmatpush1.msra.mxu0 0.0
    %2488 = vmatprep.subr.mxu0 0.0
    %2489 = vmatpush1.msra.mxu0 0.0
    %2490 = vmatprep.subr.mxu0 0.0
    %2491 = vmatpush1.msra.mxu0 0.0
    %2492 = vmatprep.subr.mxu0 0.0
    %2493 = vmatpush1.msra.mxu0 0.0
    %2494 = vmatprep.subr.mxu0 0.0
    %2495 = vmatpush1.msra.mxu0 0.0
    %2496 = vmatprep.subr.mxu0 0.0
    %2497 = vmatpush1.msra.mxu0 0.0
    %2498 = vmatprep.subr.mxu0 0.0
    %2499 = vmatpush1.msra.mxu0 0.0
    %2500 = vmatprep.subr.mxu0 0.0
    %2501 = vmatpush1.msra.mxu0 0.0
    %2502 = vmatprep.subr.mxu0 0.0
    %2503 = vmatpush1.msra.mxu0 0.0
    %2504 = vmatprep.mubr.f32.mxu0 0.0
    %2505 = vmatmul.mubr.f32.gmra.mrb[0].mxu0 %v951
    %v2506 = vpop.f32.mrb[0].mxu0
    %v2507 = vadd.f32 %v2439, %v2506
    %v2508 = vpop.f32.mrb[0].mxu0
    %2509 = vmatprep.mubr.f32.mxu0 0.0
    %2510 = vmatmul.mubr.f32.gmra.mrb[0].mxu0 %v954
    %v2511 = vpop.f32.mrb[0].mxu0
    %v2512 = vadd.f32 %v2439, %v2511
    %v2513 = vpop.f32.mrb[0].mxu0
    %2514 = vdwg.mxu0
    %v2515 = vadd.f32 %v1637, %v2507
    %v2516 = vadd.f32 %v1638, %v2512
    %v2518 = vsel %vm179, %v2515, 0
    %v2521 = vsel %vm179, %v2516, 0
    %2523 = vmatprep.subr.mxu0 0.0
    %2524 = vmatpush1.msra.mxu0 0.03125
    %2525 = vmatprep.subr.mxu0 0.0
    %2526 = vmatpush1.msra.mxu0 0.03125
    %2527 = vmatprep.subr.mxu0 0.0
    %2528 = vmatpush1.msra.mxu0 0.03125
    %2529 = vmatprep.subr.mxu0 0.0
    %2530 = vmatpush1.msra.mxu0 0.03125
    %2531 = vmatprep.subr.mxu0 0.0
    %2532 = vmatpush1.msra.mxu0 0.0
    %2533 = vmatprep.subr.mxu0 0.0
    %2534 = vmatpush1.msra.mxu0 0.0
    %2535 = vmatprep.subr.mxu0 0.0
    %2536 = vmatpush1.msra.mxu0 0.0
    %2537 = vmatprep.subr.mxu0 0.0
    %2538 = vmatpush1.msra.mxu0 0.0
    %2539 = vmatprep.subr.mxu0 0.0
    %2540 = vmatpush1.msra.mxu0 0.0
    %2541 = vmatprep.subr.mxu0 0.0
    %2542 = vmatpush1.msra.mxu0 0.0
    %2543 = vmatprep.subr.mxu0 0.0
    %2544 = vmatpush1.msra.mxu0 0.0
    %2545 = vmatprep.subr.mxu0 0.0
    %2546 = vmatpush1.msra.mxu0 0.0
    %2547 = vmatprep.subr.mxu0 0.0
    %2548 = vmatpush1.msra.mxu0 0.0
    %2549 = vmatprep.subr.mxu0 0.0
    %2550 = vmatpush1.msra.mxu0 0.0
    %2551 = vmatprep.subr.mxu0 0.0
    %2552 = vmatpush1.msra.mxu0 0.0
    %2553 = vmatprep.subr.mxu0 0.0
    %2554 = vmatpush1.msra.mxu0 0.0
    %2555 = vmatprep.subr.mxu0 0.0
    %2556 = vmatpush1.msra.mxu0 0.0
    %2557 = vmatprep.subr.mxu0 0.0
    %2558 = vmatpush1.msra.mxu0 0.0
    %2559 = vmatprep.subr.mxu0 0.0
    %2560 = vmatpush1.msra.mxu0 0.0
    %2561 = vmatprep.subr.mxu0 0.0
    %2562 = vmatpush1.msra.mxu0 0.0
    %2563 = vmatprep.subr.mxu0 0.0
    %2564 = vmatpush1.msra.mxu0 0.0
    %2565 = vmatprep.subr.mxu0 0.0
    %2566 = vmatpush1.msra.mxu0 0.0
    %2567 = vmatprep.subr.mxu0 0.0
    %2568 = vmatpush1.msra.mxu0 0.0
    %2569 = vmatprep.subr.mxu0 0.0
    %2570 = vmatpush1.msra.mxu0 0.0
    %2571 = vmatprep.subr.mxu0 0.0
    %2572 = vmatpush1.msra.mxu0 0.0
    %2573 = vmatprep.subr.mxu0 0.0
    %2574 = vmatpush1.msra.mxu0 0.0
    %2575 = vmatprep.subr.mxu0 0.0
    %2576 = vmatpush1.msra.mxu0 0.0
    %2577 = vmatprep.subr.mxu0 0.0
    %2578 = vmatpush1.msra.mxu0 0.0
    %2579 = vmatprep.subr.mxu0 0.0
    %2580 = vmatpush1.msra.mxu0 0.0
    %2581 = vmatprep.subr.mxu0 0.0
    %2582 = vmatpush1.msra.mxu0 0.0
    %2583 = vmatprep.subr.mxu0 0.0
    %2584 = vmatpush1.msra.mxu0 0.0
    %2585 = vmatprep.subr.mxu0 0.0
    %2586 = vmatpush1.msra.mxu0 0.0
    %2587 = vmatprep.mubr.f32.mxu0 0.0
    %2588 = vmatmul.mubr.f32.gmra.mrb[0].mxu0 %v2518
    %v2589 = vpop.f32.mrb[0].mxu0
    %v2590 = vadd.f32 0.0, %v2589
    %v2591 = vpop.f32.mrb[0].mxu0
    %2592 = vmatprep.mubr.f32.mxu0 0.0
    %2593 = vmatmul.mubr.f32.gmra.mrb[0].mxu0 %v2521
    %v2594 = vpop.f32.mrb[0].mxu0
    %v2595 = vadd.f32 0.0, %v2594
    %v2596 = vpop.f32.mrb[0].mxu0
    %2597 = vdwg.mxu0
    %2599 = vset.pattern.permute.xlu0 0
    %2600 = vperm.xlu0 %2599, %v2590
    %v2601 = vpop.permute.xlu0 %2600
    %2604 = vset.pattern.permute.xlu0 0
    %2605 = vperm.xlu0 %2604, %v2595
    %v2606 = vpop.permute.xlu0 %2605
    %v2608 = vsub.f32 %v2515, %v2601
    %v2609 = vsub.f32 %v2516, %v2606
    %v2610 = vmul.f32 %v2608, %v2608
    %v2611 = vmul.f32 %v2609, %v2609
    %v2613 = vsel %vm179, %v2610, 0
    %v2616 = vsel %vm179, %v2611, 0
    %2618 = vmatprep.subr.mxu0 0.0
    %2619 = vmatpush1.msra.mxu0 0.03125
    %2620 = vmatprep.subr.mxu0 0.0
    %2621 = vmatpush1.msra.mxu0 0.03125
    %2622 = vmatprep.subr.mxu0 0.0
    %2623 = vmatpush1.msra.mxu0 0.03125
    %2624 = vmatprep.subr.mxu0 0.0
    %2625 = vmatpush1.msra.mxu0 0.03125
    %2626 = vmatprep.subr.mxu0 0.0
    %2627 = vmatpush1.msra.mxu0 0.0
    %2628 = vmatprep.subr.mxu0 0.0
    %2629 = vmatpush1.msra.mxu0 0.0
    %2630 = vmatprep.subr.mxu0 0.0
    %2631 = vmatpush1.msra.mxu0 0.0
    %2632 = vmatprep.subr.mxu0 0.0
    %2633 = vmatpush1.msra.mxu0 0.0
    %2634 = vmatprep.subr.mxu0 0.0
    %2635 = vmatpush1.msra.mxu0 0.0
    %2636 = vmatprep.subr.mxu0 0.0
    %2637 = vmatpush1.msra.mxu0 0.0
    %2638 = vmatprep.subr.mxu0 0.0
    %2639 = vmatpush1.msra.mxu0 0.0
    %2640 = vmatprep.subr.mxu0 0.0
    %2641 = vmatpush1.msra.mxu0 0.0
    %2642 = vmatprep.subr.mxu0 0.0
    %2643 = vmatpush1.msra.mxu0 0.0
    %2644 = vmatprep.subr.mxu0 0.0
    %2645 = vmatpush1.msra.mxu0 0.0
    %2646 = vmatprep.subr.mxu0 0.0
    %2647 = vmatpush1.msra.mxu0 0.0
    %2648 = vmatprep.subr.mxu0 0.0
    %2649 = vmatpush1.msra.mxu0 0.0
    %2650 = vmatprep.subr.mxu0 0.0
    %2651 = vmatpush1.msra.mxu0 0.0
    %2652 = vmatprep.subr.mxu0 0.0
    %2653 = vmatpush1.msra.mxu0 0.0
    %2654 = vmatprep.subr.mxu0 0.0
    %2655 = vmatpush1.msra.mxu0 0.0
    %2656 = vmatprep.subr.mxu0 0.0
    %2657 = vmatpush1.msra.mxu0 0.0
    %2658 = vmatprep.subr.mxu0 0.0
    %2659 = vmatpush1.msra.mxu0 0.0
    %2660 = vmatprep.subr.mxu0 0.0
    %2661 = vmatpush1.msra.mxu0 0.0
    %2662 = vmatprep.subr.mxu0 0.0
    %2663 = vmatpush1.msra.mxu0 0.0
    %2664 = vmatprep.subr.mxu0 0.0
    %2665 = vmatpush1.msra.mxu0 0.0
    %2666 = vmatprep.subr.mxu0 0.0
    %2667 = vmatpush1.msra.mxu0 0.0
    %2668 = vmatprep.subr.mxu0 0.0
    %2669 = vmatpush1.msra.mxu0 0.0
    %2670 = vmatprep.subr.mxu0 0.0
    %2671 = vmatpush1.msra.mxu0 0.0
    %2672 = vmatprep.subr.mxu0 0.0
    %2673 = vmatpush1.msra.mxu0 0.0
    %2674 = vmatprep.subr.mxu0 0.0
    %2675 = vmatpush1.msra.mxu0 0.0
    %2676 = vmatprep.subr.mxu0 0.0
    %2677 = vmatpush1.msra.mxu0 0.0
    %2678 = vmatprep.subr.mxu0 0.0
    %2679 = vmatpush1.msra.mxu0 0.0
    %2680 = vmatprep.subr.mxu0 0.0
    %2681 = vmatpush1.msra.mxu0 0.0
    %2682 = vmatprep.mubr.f32.mxu0 0.0
    %2683 = vmatmul.mubr.f32.gmra.mrb[0].mxu0 %v2613
    %v2684 = vpop.f32.mrb[0].mxu0
    %v2685 = vadd.f32 1e-05, %v2684
    %v2686 = vpop.f32.mrb[0].mxu0
    %2687 = vmatprep.mubr.f32.mxu0 0.0
    %2688 = vmatmul.mubr.f32.gmra.mrb[0].mxu0 %v2616
    %v2689 = vpop.f32.mrb[0].mxu0
    %v2690 = vadd.f32 1e-05, %v2689
    %v2691 = vpop.f32.mrb[0].mxu0
    %2692 = vdwg.mxu0
    %v2693 = vrsqrt.pop %v2685
    %v2694 = vrsqrt.pop %v2690
    %2696 = vset.pattern.permute.xlu0 0
    %2697 = vperm.xlu0 %2696, %v2693
    %v2698 = vpop.permute.xlu0 %2697
    %2701 = vset.pattern.permute.xlu0 0
    %2702 = vperm.xlu0 %2701, %v2694
    %v2703 = vpop.permute.xlu0 %2702
    %v2705 = vmul.f32 %v2608, %v2698
    %v2706 = vmul.f32 %v2609, %v2703
    %v2707 = vlaneseq
    %v2708 = vshrl.u32 %v2707, 7
    %v2709 = vsub.s32 0, %v2708
    %v2710 = vrot.slane %v1661, %v2709
    %v2711 = vmul.f32 %v2705, %v2710
    %v2712 = vmul.f32 %v2706, %v2710
    %v2713 = vlaneseq
    %v2714 = vshrl.u32 %v2713, 7
    %v2715 = vsub.s32 0, %v2714
    %v2716 = vrot.slane %v1662, %v2715
    %v2717 = vadd.f32 %v2711, %v2716
    %v2718 = vadd.f32 %v2712, %v2716
    %v2719 = vlaneseq
    %v2720 = vshrl.u32 %v2719, 7
    %v2721 = vsub.s32 0, %v2720
    %v2722 = vrot.slane %v1663, %v2721
    %v2724 = vsel %vm179, %v2717, 0
    %v2727 = vsel %vm179, %v2718, 0
    %2729 = vmatprep.subr.mxu0 0.0
    %2730 = vmatpush1.msra.mxu0 %v1650
    %2731 = vmatprep.subr.mxu0 0.0
    %2732 = vmatpush1.msra.mxu0 %v1651
    %2733 = vmatprep.subr.mxu0 0.0
    %2734 = vmatpush1.msra.mxu0 %v1652
    %2735 = vmatprep.subr.mxu0 0.0
    %2736 = vmatpush1.msra.mxu0 %v1653
    %2737 = vmatprep.subr.mxu0 0.0
    %2738 = vmatpush1.msra.mxu0 0.0
    %2739 = vmatprep.subr.mxu0 0.0
    %2740 = vmatpush1.msra.mxu0 0.0
    %2741 = vmatprep.subr.mxu0 0.0
    %2742 = vmatpush1.msra.mxu0 0.0
    %2743 = vmatprep.subr.mxu0 0.0
    %2744 = vmatpush1.msra.mxu0 0.0
    %2745 = vmatprep.subr.mxu0 0.0
    %2746 = vmatpush1.msra.mxu0 0.0
    %2747 = vmatprep.subr.mxu0 0.0
    %2748 = vmatpush1.msra.mxu0 0.0
    %2749 = vmatprep.subr.mxu0 0.0
    %2750 = vmatpush1.msra.mxu0 0.0
    %2751 = vmatprep.subr.mxu0 0.0
    %2752 = vmatpush1.msra.mxu0 0.0
    %2753 = vmatprep.subr.mxu0 0.0
    %2754 = vmatpush1.msra.mxu0 0.0
    %2755 = vmatprep.subr.mxu0 0.0
    %2756 = vmatpush1.msra.mxu0 0.0
    %2757 = vmatprep.subr.mxu0 0.0
    %2758 = vmatpush1.msra.mxu0 0.0
    %2759 = vmatprep.subr.mxu0 0.0
    %2760 = vmatpush1.msra.mxu0 0.0
    %2761 = vmatprep.subr.mxu0 0.0
    %2762 = vmatpush1.msra.mxu0 0.0
    %2763 = vmatprep.subr.mxu0 0.0
    %2764 = vmatpush1.msra.mxu0 0.0
    %2765 = vmatprep.subr.mxu0 0.0
    %2766 = vmatpush1.msra.mxu0 0.0
    %2767 = vmatprep.subr.mxu0 0.0
    %2768 = vmatpush1.msra.mxu0 0.0
    %2769 = vmatprep.subr.mxu0 0.0
    %2770 = vmatpush1.msra.mxu0 0.0
    %2771 = vmatprep.subr.mxu0 0.0
    %2772 = vmatpush1.msra.mxu0 0.0
    %2773 = vmatprep.subr.mxu0 0.0
    %2774 = vmatpush1.msra.mxu0 0.0
    %2775 = vmatprep.subr.mxu0 0.0
    %2776 = vmatpush1.msra.mxu0 0.0
    %2777 = vmatprep.subr.mxu0 0.0
    %2778 = vmatpush1.msra.mxu0 0.0
    %2779 = vmatprep.subr.mxu0 0.0
    %2780 = vmatpush1.msra.mxu0 0.0
    %2781 = vmatprep.subr.mxu0 0.0
    %2782 = vmatpush1.msra.mxu0 0.0
    %2783 = vmatprep.subr.mxu0 0.0
    %2784 = vmatpush1.msra.mxu0 0.0
    %2785 = vmatprep.subr.mxu0 0.0
    %2786 = vmatpush1.msra.mxu0 0.0
    %2787 = vmatprep.subr.mxu0 0.0
    %2788 = vmatpush1.msra.mxu0 0.0
    %2789 = vmatprep.subr.mxu0 0.0
    %2790 = vmatpush1.msra.mxu0 0.0
    %2791 = vmatprep.subr.mxu0 0.0
    %2792 = vmatpush1.msra.mxu0 0.0
    %2793 = vmatprep.mubr.f32.mxu0 0.0
    %2794 = vmatmul.mubr.f32.gmra.mrb[0].mxu0 %v2724
    %v2795 = vpop.f32.mrb[0].mxu0
    %v2796 = vadd.f32 %v2722, %v2795
    %v2797 = vpop.f32.mrb[0].mxu0
    %2798 = vmatprep.mubr.f32.mxu0 0.0
    %2799 = vmatmul.mubr.f32.gmra.mrb[0].mxu0 %v2727
    %v2800 = vpop.f32.mrb[0].mxu0
    %v2801 = vadd.f32 %v2722, %v2800
    %v2802 = vpop.f32.mrb[0].mxu0
    %2803 = vdwg.mxu0
    %v2804 = vmul.f32 %v2796, 0.5
    %v2805 = vmul.f32 %v2801, 0.5
    %v2806 = vmul.f32 %v2796, 0.044715
    %v2807 = vmul.f32 %v2801, 0.044715
    %v2808 = vmul.f32 %v2806, %v2796
    %v2809 = vmul.f32 %v2807, %v2801
    %v2810 = vmul.f32 %v2808, %v2796
    %v2811 = vmul.f32 %v2809, %v2801
    %v2812 = vadd.f32 %v2796, %v2810
    %v2813 = vadd.f32 %v2801, %v2811
    %v2814 = vmul.f32 %v2812, 0.7978846
    %v2815 = vmul.f32 %v2813, 0.7978846
    %v2816 = vtanh.pop %v2814
    %v2817 = vtanh.pop %v2815
    %v2818 = vadd.f32 %v2816, 1.0
    %v2819 = vadd.f32 %v2817, 1.0
    %v2820 = vmul.f32 %v2804, %v2818
    %v2821 = vmul.f32 %v2805, %v2819
    %v2822 = vlaneseq
    %v2823 = vshrl.u32 %v2822, 7
    %v2824 = vsub.s32 0, %v2823
    %v2825 = vrot.slane %v1664, %v2824
    %v2827 = vsel %vm430, %v2820, 0
    %v2830 = vsel %vm430, %v2821, 0
    %v2833 = vsel %vm430, %v1655, 0
    %v2836 = vsel %vm430, %v1656, 0
    %v2839 = vsel %vm430, %v1657, 0
    %v2842 = vsel %vm430, %v1658, 0
    %2844 = vmatprep.subr.mxu0 0.0
    %2845 = vmatpush1.xpose.msra.mxu0 %v2833
    %2846 = vmatprep.subr.mxu0 0.0
    %2847 = vmatpush1.xpose.msra.mxu0 %v2836
    %2848 = vmatprep.subr.mxu0 0.0
    %2849 = vmatpush1.xpose.msra.mxu0 %v2839
    %2850 = vmatprep.subr.mxu0 0.0
    %2851 = vmatpush1.xpose.msra.mxu0 %v2842
    %2852 = vmatprep.subr.mxu0 0.0
    %2853 = vmatpush1.xpose.msra.mxu0 0.0
    %2854 = vmatprep.subr.mxu0 0.0
    %2855 = vmatpush1.xpose.msra.mxu0 0.0
    %2856 = vmatprep.subr.mxu0 0.0
    %2857 = vmatpush1.xpose.msra.mxu0 0.0
    %2858 = vmatprep.subr.mxu0 0.0
    %2859 = vmatpush1.xpose.msra.mxu0 0.0
    %2860 = vmatprep.subr.mxu0 0.0
    %2861 = vmatpush1.xpose.msra.mxu0 0.0
    %2862 = vmatprep.subr.mxu0 0.0
    %2863 = vmatpush1.xpose.msra.mxu0 0.0
    %2864 = vmatprep.subr.mxu0 0.0
    %2865 = vmatpush1.xpose.msra.mxu0 0.0
    %2866 = vmatprep.subr.mxu0 0.0
    %2867 = vmatpush1.xpose.msra.mxu0 0.0
    %2868 = vmatprep.subr.mxu0 0.0
    %2869 = vmatpush1.xpose.msra.mxu0 0.0
    %2870 = vmatprep.subr.mxu0 0.0
    %2871 = vmatpush1.xpose.msra.mxu0 0.0
    %2872 = vmatprep.subr.mxu0 0.0
    %2873 = vmatpush1.xpose.msra.mxu0 0.0
    %2874 = vmatprep.subr.mxu0 0.0
    %2875 = vmatpush1.xpose.msra.mxu0 0.0
    %2876 = vmatprep.subr.mxu0 0.0
    %2877 = vmatpush1.xpose.msra.mxu0 0.0
    %2878 = vmatprep.subr.mxu0 0.0
    %2879 = vmatpush1.xpose.msra.mxu0 0.0
    %2880 = vmatprep.subr.mxu0 0.0
    %2881 = vmatpush1.xpose.msra.mxu0 0.0
    %2882 = vmatprep.subr.mxu0 0.0
    %2883 = vmatpush1.xpose.msra.mxu0 0.0
    %2884 = vmatprep.subr.mxu0 0.0
    %2885 = vmatpush1.xpose.msra.mxu0 0.0
    %2886 = vmatprep.subr.mxu0 0.0
    %2887 = vmatpush1.xpose.msra.mxu0 0.0
    %2888 = vmatprep.subr.mxu0 0.0
    %2889 = vmatpush1.xpose.msra.mxu0 0.0
    %2890 = vmatprep.subr.mxu0 0.0
    %2891 = vmatpush1.xpose.msra.mxu0 0.0
    %2892 = vmatprep.subr.mxu0 0.0
    %2893 = vmatpush1.xpose.msra.mxu0 0.0
    %2894 = vmatprep.subr.mxu0 0.0
    %2895 = vmatpush1.xpose.msra.mxu0 0.0
    %2896 = vmatprep.subr.mxu0 0.0
    %2897 = vmatpush1.xpose.msra.mxu0 0.0
    %2898 = vmatprep.subr.mxu0 0.0
    %2899 = vmatpush1.xpose.msra.mxu0 0.0
    %2900 = vmatprep.subr.mxu0 0.0
    %2901 = vmatpush1.xpose.msra.mxu0 0.0
    %2902 = vmatprep.subr.mxu0 0.0
    %2903 = vmatpush1.xpose.msra.mxu0 0.0
    %2904 = vmatprep.subr.mxu0 0.0
    %2905 = vmatpush1.xpose.msra.mxu0 0.0
    %2906 = vmatprep.subr.mxu0 0.0
    %2907 = vmatpush1.xpose.msra.mxu0 0.0
    %2908 = vmatprep.mubr.f32.mxu0 0.0
    %2909 = vmatmul.mubr.f32.gmra.mrb[0].mxu0 %v2827
    %v2910 = vpop.f32.mrb[0].mxu0
    %v2911 = vadd.f32 %v2825, %v2910
    %v2912 = vpop.f32.mrb[0].mxu0
    %2913 = vmatprep.mubr.f32.mxu0 0.0
    %2914 = vmatmul.mubr.f32.gmra.mrb[0].mxu0 %v2830
    %v2915 = vpop.f32.mrb[0].mxu0
    %v2916 = vadd.f32 %v2825, %v2915
    %v2917 = vpop.f32.mrb[0].mxu0
    %2918 = vdwg.mxu0
    %v2919 = vadd.f32 %v2717, %v2911
    %v2920 = vadd.f32 %v2718, %v2916
    %v2922 = vsel %vm179, %v2919, 0
    %v2925 = vsel %vm179, %v2920, 0
    %2927 = vmatprep.subr.mxu0 0.0
    %2928 = vmatpush1.msra.mxu0 0.03125
    %2929 = vmatprep.subr.mxu0 0.0
    %2930 = vmatpush1.msra.mxu0 0.03125
    %2931 = vmatprep.subr.mxu0 0.0
    %2932 = vmatpush1.msra.mxu0 0.03125
    %2933 = vmatprep.subr.mxu0 0.0
    %2934 = vmatpush1.msra.mxu0 0.03125
    %2935 = vmatprep.subr.mxu0 0.0
    %2936 = vmatpush1.msra.mxu0 0.0
    %2937 = vmatprep.subr.mxu0 0.0
    %2938 = vmatpush1.msra.mxu0 0.0
    %2939 = vmatprep.subr.mxu0 0.0
    %2940 = vmatpush1.msra.mxu0 0.0
    %2941 = vmatprep.subr.mxu0 0.0
    %2942 = vmatpush1.msra.mxu0 0.0
    %2943 = vmatprep.subr.mxu0 0.0
    %2944 = vmatpush1.msra.mxu0 0.0
    %2945 = vmatprep.subr.mxu0 0.0
    %2946 = vmatpush1.msra.mxu0 0.0
    %2947 = vmatprep.subr.mxu0 0.0
    %2948 = vmatpush1.msra.mxu0 0.0
    %2949 = vmatprep.subr.mxu0 0.0
    %2950 = vmatpush1.msra.mxu0 0.0
    %2951 = vmatprep.subr.mxu0 0.0
    %2952 = vmatpush1.msra.mxu0 0.0
    %2953 = vmatprep.subr.mxu0 0.0
    %2954 = vmatpush1.msra.mxu0 0.0
    %2955 = vmatprep.subr.mxu0 0.0
    %2956 = vmatpush1.msra.mxu0 0.0
    %2957 = vmatprep.subr.mxu0 0.0
    %2958 = vmatpush1.msra.mxu0 0.0
    %2959 = vmatprep.subr.mxu0 0.0
    %2960 = vmatpush1.msra.mxu0 0.0
    %2961 = vmatprep.subr.mxu0 0.0
    %2962 = vmatpush1.msra.mxu0 0.0
    %2963 = vmatprep.subr.mxu0 0.0
    %2964 = vmatpush1.msra.mxu0 0.0
    %2965 = vmatprep.subr.mxu0 0.0
    %2966 = vmatpush1.msra.mxu0 0.0
    %2967 = vmatprep.subr.mxu0 0.0
    %2968 = vmatpush1.msra.mxu0 0.0
    %2969 = vmatprep.subr.mxu0 0.0
    %2970 = vmatpush1.msra.mxu0 0.0
    %2971 = vmatprep.subr.mxu0 0.0
    %2972 = vmatpush1.msra.mxu0 0.0
    %2973 = vmatprep.subr.mxu0 0.0
    %2974 = vmatpush1.msra.mxu0 0.0
    %2975 = vmatprep.subr.mxu0 0.0
    %2976 = vmatpush1.msra.mxu0 0.0
    %2977 = vmatprep.subr.mxu0 0.0
    %2978 = vmatpush1.msra.mxu0 0.0
    %2979 = vmatprep.subr.mxu0 0.0
    %2980 = vmatpush1.msra.mxu0 0.0
    %2981 = vmatprep.subr.mxu0 0.0
    %2982 = vmatpush1.msra.mxu0 0.0
    %2983 = vmatprep.subr.mxu0 0.0
    %2984 = vmatpush1.msra.mxu0 0.0
    %2985 = vmatprep.subr.mxu0 0.0
    %2986 = vmatpush1.msra.mxu0 0.0
    %2987 = vmatprep.subr.mxu0 0.0
    %2988 = vmatpush1.msra.mxu0 0.0
    %2989 = vmatprep.subr.mxu0 0.0
    %2990 = vmatpush1.msra.mxu0 0.0
    %2991 = vmatprep.mubr.f32.mxu0 0.0
    %2992 = vmatmul.mubr.f32.gmra.mrb[0].mxu0 %v2922
    %v2993 = vpop.f32.mrb[0].mxu0
    %v2994 = vadd.f32 0.0, %v2993
    %v2995 = vpop.f32.mrb[0].mxu0
    %2996 = vmatprep.mubr.f32.mxu0 0.0
    %2997 = vmatmul.mubr.f32.gmra.mrb[0].mxu0 %v2925
    %v2998 = vpop.f32.mrb[0].mxu0
    %v2999 = vadd.f32 0.0, %v2998
    %v3000 = vpop.f32.mrb[0].mxu0
    %3001 = vdwg.mxu0
    %3003 = vset.pattern.permute.xlu0 0
    %3004 = vperm.xlu0 %3003, %v2994
    %v3005 = vpop.permute.xlu0 %3004
    %3008 = vset.pattern.permute.xlu0 0
    %3009 = vperm.xlu0 %3008, %v2999
    %v3010 = vpop.permute.xlu0 %3009
    %v3012 = vsub.f32 %v2919, %v3005
    %v3013 = vsub.f32 %v2920, %v3010
    %v3014 = vmul.f32 %v3012, %v3012
    %v3015 = vmul.f32 %v3013, %v3013
    %v3017 = vsel %vm179, %v3014, 0
    %v3020 = vsel %vm179, %v3015, 0
    %3022 = vmatprep.subr.mxu0 0.0
    %3023 = vmatpush1.msra.mxu0 0.03125
    %3024 = vmatprep.subr.mxu0 0.0
    %3025 = vmatpush1.msra.mxu0 0.03125
    %3026 = vmatprep.subr.mxu0 0.0
    %3027 = vmatpush1.msra.mxu0 0.03125
    %3028 = vmatprep.subr.mxu0 0.0
    %3029 = vmatpush1.msra.mxu0 0.03125
    %3030 = vmatprep.subr.mxu0 0.0
    %3031 = vmatpush1.msra.mxu0 0.0
    %3032 = vmatprep.subr.mxu0 0.0
    %3033 = vmatpush1.msra.mxu0 0.0
    %3034 = vmatprep.subr.mxu0 0.0
    %3035 = vmatpush1.msra.mxu0 0.0
    %3036 = vmatprep.subr.mxu0 0.0
    %3037 = vmatpush1.msra.mxu0 0.0
    %3038 = vmatprep.subr.mxu0 0.0
    %3039 = vmatpush1.msra.mxu0 0.0
    %3040 = vmatprep.subr.mxu0 0.0
    %3041 = vmatpush1.msra.mxu0 0.0
    %3042 = vmatprep.subr.mxu0 0.0
    %3043 = vmatpush1.msra.mxu0 0.0
    %3044 = vmatprep.subr.mxu0 0.0
    %3045 = vmatpush1.msra.mxu0 0.0
    %3046 = vmatprep.subr.mxu0 0.0
    %3047 = vmatpush1.msra.mxu0 0.0
    %3048 = vmatprep.subr.mxu0 0.0
    %3049 = vmatpush1.msra.mxu0 0.0
    %3050 = vmatprep.subr.mxu0 0.0
    %3051 = vmatpush1.msra.mxu0 0.0
    %3052 = vmatprep.subr.mxu0 0.0
    %3053 = vmatpush1.msra.mxu0 0.0
    %3054 = vmatprep.subr.mxu0 0.0
    %3055 = vmatpush1.msra.mxu0 0.0
    %3056 = vmatprep.subr.mxu0 0.0
    %3057 = vmatpush1.msra.mxu0 0.0
    %3058 = vmatprep.subr.mxu0 0.0
    %3059 = vmatpush1.msra.mxu0 0.0
    %3060 = vmatprep.subr.mxu0 0.0
    %3061 = vmatpush1.msra.mxu0 0.0
    %3062 = vmatprep.subr.mxu0 0.0
    %3063 = vmatpush1.msra.mxu0 0.0
    %3064 = vmatprep.subr.mxu0 0.0
    %3065 = vmatpush1.msra.mxu0 0.0
    %3066 = vmatprep.subr.mxu0 0.0
    %3067 = vmatpush1.msra.mxu0 0.0
    %3068 = vmatprep.subr.mxu0 0.0
    %3069 = vmatpush1.msra.mxu0 0.0
    %3070 = vmatprep.subr.mxu0 0.0
    %3071 = vmatpush1.msra.mxu0 0.0
    %3072 = vmatprep.subr.mxu0 0.0
    %3073 = vmatpush1.msra.mxu0 0.0
    %3074 = vmatprep.subr.mxu0 0.0
    %3075 = vmatpush1.msra.mxu0 0.0
    %3076 = vmatprep.subr.mxu0 0.0
    %3077 = vmatpush1.msra.mxu0 0.0
    %3078 = vmatprep.subr.mxu0 0.0
    %3079 = vmatpush1.msra.mxu0 0.0
    %3080 = vmatprep.subr.mxu0 0.0
    %3081 = vmatpush1.msra.mxu0 0.0
    %3082 = vmatprep.subr.mxu0 0.0
    %3083 = vmatpush1.msra.mxu0 0.0
    %3084 = vmatprep.subr.mxu0 0.0
    %3085 = vmatpush1.msra.mxu0 0.0
    %3086 = vmatprep.mubr.f32.mxu0 0.0
    %3087 = vmatmul.mubr.f32.gmra.mrb[0].mxu0 %v3017
    %v3088 = vpop.f32.mrb[0].mxu0
    %v3089 = vadd.f32 1e-05, %v3088
    %v3090 = vpop.f32.mrb[0].mxu0
    %3091 = vmatprep.mubr.f32.mxu0 0.0
    %3092 = vmatmul.mubr.f32.gmra.mrb[0].mxu0 %v3020
    %v3093 = vpop.f32.mrb[0].mxu0
    %v3094 = vadd.f32 1e-05, %v3093
    %v3095 = vpop.f32.mrb[0].mxu0
    %3096 = vdwg.mxu0
    %v3097 = vrsqrt.pop %v3089
    %v3098 = vrsqrt.pop %v3094
    %3100 = vset.pattern.permute.xlu0 0
    %3101 = vperm.xlu0 %3100, %v3097
    %v3102 = vpop.permute.xlu0 %3101
    %3105 = vset.pattern.permute.xlu0 0
    %3106 = vperm.xlu0 %3105, %v3098
    %v3107 = vpop.permute.xlu0 %3106
    %v3109 = vmul.f32 %v3012, %v3102
    %v3110 = vmul.f32 %v3013, %v3107
    %v3111 = vlaneseq
    %v3112 = vshrl.u32 %v3111, 7
    %v3113 = vsub.s32 0, %v3112
    %v3114 = vrot.slane %v1665, %v3113
    %v3115 = vmul.f32 %v3109, %v3114
    %v3116 = vmul.f32 %v3110, %v3114
    %v3117 = vlaneseq
    %v3118 = vshrl.u32 %v3117, 7
    %v3119 = vsub.s32 0, %v3118
    %v3120 = vrot.slane %v1666, %v3119
    %v3121 = vadd.f32 %v3115, %v3120
    %v3122 = vadd.f32 %v3116, %v3120
    %v3123 = vld [vmem:[%s2 + $0x10] sm:$0x1]
    %v3124 = vld [vmem:[%s2 + $0x11] sm:$0x1]
    %v3126 = vsel %vm179, %v3121, 0
    %v3129 = vsel %vm179, %v3122, 0
    %3131 = vmatprep.subr.mxu0 0.0
    %3132 = vmatpush1.msra.mxu0 0.03125
    %3133 = vmatprep.subr.mxu0 0.0
    %3134 = vmatpush1.msra.mxu0 0.03125
    %3135 = vmatprep.subr.mxu0 0.0
    %3136 = vmatpush1.msra.mxu0 0.03125
    %3137 = vmatprep.subr.mxu0 0.0
    %3138 = vmatpush1.msra.mxu0 0.03125
    %3139 = vmatprep.subr.mxu0 0.0
    %3140 = vmatpush1.msra.mxu0 0.0
    %3141 = vmatprep.subr.mxu0 0.0
    %3142 = vmatpush1.msra.mxu0 0.0
    %3143 = vmatprep.subr.mxu0 0.0
    %3144 = vmatpush1.msra.mxu0 0.0
    %3145 = vmatprep.subr.mxu0 0.0
    %3146 = vmatpush1.msra.mxu0 0.0
    %3147 = vmatprep.subr.mxu0 0.0
    %3148 = vmatpush1.msra.mxu0 0.0
    %3149 = vmatprep.subr.mxu0 0.0
    %3150 = vmatpush1.msra.mxu0 0.0
    %3151 = vmatprep.subr.mxu0 0.0
    %3152 = vmatpush1.msra.mxu0 0.0
    %3153 = vmatprep.subr.mxu0 0.0
    %3154 = vmatpush1.msra.mxu0 0.0
    %3155 = vmatprep.subr.mxu0 0.0
    %3156 = vmatpush1.msra.mxu0 0.0
    %3157 = vmatprep.subr.mxu0 0.0
    %3158 = vmatpush1.msra.mxu0 0.0
    %3159 = vmatprep.subr.mxu0 0.0
    %3160 = vmatpush1.msra.mxu0 0.0
    %3161 = vmatprep.subr.mxu0 0.0
    %3162 = vmatpush1.msra.mxu0 0.0
    %3163 = vmatprep.subr.mxu0 0.0
    %3164 = vmatpush1.msra.mxu0 0.0
    %3165 = vmatprep.subr.mxu0 0.0
    %3166 = vmatpush1.msra.mxu0 0.0
    %3167 = vmatprep.subr.mxu0 0.0
    %3168 = vmatpush1.msra.mxu0 0.0
    %3169 = vmatprep.subr.mxu0 0.0
    %3170 = vmatpush1.msra.mxu0 0.0
    %3171 = vmatprep.subr.mxu0 0.0
    %3172 = vmatpush1.msra.mxu0 0.0
    %3173 = vmatprep.subr.mxu0 0.0
    %3174 = vmatpush1.msra.mxu0 0.0
    %3175 = vmatprep.subr.mxu0 0.0
    %3176 = vmatpush1.msra.mxu0 0.0
    %3177 = vmatprep.subr.mxu0 0.0
    %3178 = vmatpush1.msra.mxu0 0.0
    %3179 = vmatprep.subr.mxu0 0.0
    %3180 = vmatpush1.msra.mxu0 0.0
    %3181 = vmatprep.subr.mxu0 0.0
    %3182 = vmatpush1.msra.mxu0 0.0
    %3183 = vmatprep.subr.mxu0 0.0
    %3184 = vmatpush1.msra.mxu0 0.0
    %3185 = vmatprep.subr.mxu0 0.0
    %3186 = vmatpush1.msra.mxu0 0.0
    %3187 = vmatprep.subr.mxu0 0.0
    %3188 = vmatpush1.msra.mxu0 0.0
    %3189 = vmatprep.subr.mxu0 0.0
    %3190 = vmatpush1.msra.mxu0 0.0
    %3191 = vmatprep.subr.mxu0 0.0
    %3192 = vmatpush1.msra.mxu0 0.0
    %3193 = vmatprep.subr.mxu0 0.0
    %3194 = vmatpush1.msra.mxu0 0.0
    %3195 = vmatprep.mubr.f32.mxu0 0.0
    %3196 = vmatmul.mubr.f32.gmra.mrb[0].mxu0 %v3126
    %v3197 = vpop.f32.mrb[0].mxu0
    %v3198 = vadd.f32 0.0, %v3197
    %v3199 = vpop.f32.mrb[0].mxu0
    %3200 = vmatprep.mubr.f32.mxu0 0.0
    %3201 = vmatmul.mubr.f32.gmra.mrb[0].mxu0 %v3129
    %v3202 = vpop.f32.mrb[0].mxu0
    %v3203 = vadd.f32 0.0, %v3202
    %v3204 = vpop.f32.mrb[0].mxu0
    %3205 = vdwg.mxu0
    %3207 = vset.pattern.permute.xlu0 0
    %3208 = vperm.xlu0 %3207, %v3198
    %v3209 = vpop.permute.xlu0 %3208
    %3212 = vset.pattern.permute.xlu0 0
    %3213 = vperm.xlu0 %3212, %v3203
    %v3214 = vpop.permute.xlu0 %3213
    %v3216 = vsub.f32 %v3121, %v3209
    %v3217 = vsub.f32 %v3122, %v3214
    %v3218 = vmul.f32 %v3216, %v3216
    %v3219 = vmul.f32 %v3217, %v3217
    %v3221 = vsel %vm179, %v3218, 0
    %v3224 = vsel %vm179, %v3219, 0
    %3226 = vmatprep.subr.mxu0 0.0
    %3227 = vmatpush1.msra.mxu0 0.03125
    %3228 = vmatprep.subr.mxu0 0.0
    %3229 = vmatpush1.msra.mxu0 0.03125
    %3230 = vmatprep.subr.mxu0 0.0
    %3231 = vmatpush1.msra.mxu0 0.03125
    %3232 = vmatprep.subr.mxu0 0.0
    %3233 = vmatpush1.msra.mxu0 0.03125
    %3234 = vmatprep.subr.mxu0 0.0
    %3235 = vmatpush1.msra.mxu0 0.0
    %3236 = vmatprep.subr.mxu0 0.0
    %3237 = vmatpush1.msra.mxu0 0.0
    %3238 = vmatprep.subr.mxu0 0.0
    %3239 = vmatpush1.msra.mxu0 0.0
    %3240 = vmatprep.subr.mxu0 0.0
    %3241 = vmatpush1.msra.mxu0 0.0
    %3242 = vmatprep.subr.mxu0 0.0
    %3243 = vmatpush1.msra.mxu0 0.0
    %3244 = vmatprep.subr.mxu0 0.0
    %3245 = vmatpush1.msra.mxu0 0.0
    %3246 = vmatprep.subr.mxu0 0.0
    %3247 = vmatpush1.msra.mxu0 0.0
    %3248 = vmatprep.subr.mxu0 0.0
    %3249 = vmatpush1.msra.mxu0 0.0
    %3250 = vmatprep.subr.mxu0 0.0
    %3251 = vmatpush1.msra.mxu0 0.0
    %3252 = vmatprep.subr.mxu0 0.0
    %3253 = vmatpush1.msra.mxu0 0.0
    %3254 = vmatprep.subr.mxu0 0.0
    %3255 = vmatpush1.msra.mxu0 0.0
    %3256 = vmatprep.subr.mxu0 0.0
    %3257 = vmatpush1.msra.mxu0 0.0
    %3258 = vmatprep.subr.mxu0 0.0
    %3259 = vmatpush1.msra.mxu0 0.0
    %3260 = vmatprep.subr.mxu0 0.0
    %3261 = vmatpush1.msra.mxu0 0.0
    %3262 = vmatprep.subr.mxu0 0.0
    %3263 = vmatpush1.msra.mxu0 0.0
    %3264 = vmatprep.subr.mxu0 0.0
    %3265 = vmatpush1.msra.mxu0 0.0
    %3266 = vmatprep.subr.mxu0 0.0
    %3267 = vmatpush1.msra.mxu0 0.0
    %3268 = vmatprep.subr.mxu0 0.0
    %3269 = vmatpush1.msra.mxu0 0.0
    %3270 = vmatprep.subr.mxu0 0.0
    %3271 = vmatpush1.msra.mxu0 0.0
    %3272 = vmatprep.subr.mxu0 0.0
    %3273 = vmatpush1.msra.mxu0 0.0
    %3274 = vmatprep.subr.mxu0 0.0
    %3275 = vmatpush1.msra.mxu0 0.0
    %3276 = vmatprep.subr.mxu0 0.0
    %3277 = vmatpush1.msra.mxu0 0.0
    %3278 = vmatprep.subr.mxu0 0.0
    %3279 = vmatpush1.msra.mxu0 0.0
    %3280 = vmatprep.subr.mxu0 0.0
    %3281 = vmatpush1.msra.mxu0 0.0
    %3282 = vmatprep.subr.mxu0 0.0
    %3283 = vmatpush1.msra.mxu0 0.0
    %3284 = vmatprep.subr.mxu0 0.0
    %3285 = vmatpush1.msra.mxu0 0.0
    %3286 = vmatprep.subr.mxu0 0.0
    %3287 = vmatpush1.msra.mxu0 0.0
    %3288 = vmatprep.subr.mxu0 0.0
    %3289 = vmatpush1.msra.mxu0 0.0
    %3290 = vmatprep.mubr.f32.mxu0 0.0
    %3291 = vmatmul.mubr.f32.gmra.mrb[0].mxu0 %v3221
    %v3292 = vpop.f32.mrb[0].mxu0
    %v3293 = vadd.f32 1e-05, %v3292
    %v3294 = vpop.f32.mrb[0].mxu0
    %3295 = vmatprep.mubr.f32.mxu0 0.0
    %3296 = vmatmul.mubr.f32.gmra.mrb[0].mxu0 %v3224
    %v3297 = vpop.f32.mrb[0].mxu0
    %v3298 = vadd.f32 1e-05, %v3297
    %v3299 = vpop.f32.mrb[0].mxu0
    %3300 = vdwg.mxu0
    %v3301 = vrsqrt.pop %v3293
    %v3302 = vrsqrt.pop %v3298
    %3304 = vset.pattern.permute.xlu0 0
    %3305 = vperm.xlu0 %3304, %v3301
    %v3306 = vpop.permute.xlu0 %3305
    %3309 = vset.pattern.permute.xlu0 0
    %3310 = vperm.xlu0 %3309, %v3302
    %v3311 = vpop.permute.xlu0 %3310
    %v3313 = vmul.f32 %v3216, %v3306
    %v3314 = vmul.f32 %v3217, %v3311
    %v3315 = vlaneseq
    %v3316 = vshrl.u32 %v3315, 7
    %v3317 = vsub.s32 0, %v3316
    %v3318 = vrot.slane %v3123, %v3317
    %v3319 = vmul.f32 %v3313, %v3318
    %v3320 = vmul.f32 %v3314, %v3318
    %v3321 = vlaneseq
    %v3322 = vshrl.u32 %v3321, 7
    %v3323 = vsub.s32 0, %v3322
    %v3324 = vrot.slane %v3124, %v3323
    %v3325 = vadd.f32 %v3319, %v3324
    %v3326 = vadd.f32 %v3320, %v3324
    %v3327 = vmul.f32 %v3325, 0.5
    %v3328 = vmul.f32 %v3326, 0.5
    %v3329 = vmul.f32 %v3325, 0.044715
    %v3330 = vmul.f32 %v3326, 0.044715
    %v3331 = vmul.f32 %v3329, %v3325
    %v3332 = vmul.f32 %v3330, %v3326
    %v3333 = vmul.f32 %v3331, %v3325
    %v3334 = vmul.f32 %v3332, %v3326
    %v3335 = vadd.f32 %v3325, %v3333
    %v3336 = vadd.f32 %v3326, %v3334
    %v3337 = vmul.f32 %v3335, 0.7978846
    %v3338 = vmul.f32 %v3336, 0.7978846
    %v3339 = vtanh.pop %v3337
    %v3340 = vtanh.pop %v3338
    %v3341 = vadd.f32 %v3339, 1.0
    %v3342 = vadd.f32 %v3340, 1.0
    %v3343 = vmul.f32 %v3327, %v3341
    %v3344 = vmul.f32 %v3328, %v3342
    %3345 = vset.pattern.permute.xlu0 12
    %3346 = vperm.xlu0 %3345, %v35
    %v3347 = vpop.permute.xlu0 %3346
    %3349 = vset.pattern.permute.xlu0 12
    %3350 = vperm.xlu0 %3349, %v36
    %v3351 = vpop.permute.xlu0 %3350
    %v3353 = vmul.f32 %v3343, %v3347
    %v3354 = vmul.f32 %v3344, %v3351
    %s3355 = scalar_lea.vmem [#allocation2], 32
    %v3356 = vld [vmem:[%s3355] sm:$0xff]
    %v3357 = vld [vmem:[%s3355 + $0x8] sm:$0xff]
    %v3358 = vld [vmem:[%s3355 + $0x10] sm:$0xff]
    %v3359 = vld [vmem:[%s3355 + $0x18] sm:$0xff]
    %v3361 = vsel %vm179, %v3353, 0
    %v3364 = vsel %vm179, %v3354, 0
    %3366 = vmatprep.subr.mxu0 0.0
    %3367 = vmatpush1.msra.mxu0 %v3356
    %3368 = vmatprep.subr.mxu0 0.0
    %3369 = vmatpush1.msra.mxu0 %v3357
    %3370 = vmatprep.subr.mxu0 0.0
    %3371 = vmatpush1.msra.mxu0 %v3358
    %3372 = vmatprep.subr.mxu0 0.0
    %3373 = vmatpush1.msra.mxu0 %v3359
    %3374 = vmatprep.subr.mxu0 0.0
    %3375 = vmatpush1.msra.mxu0 0.0
    %3376 = vmatprep.subr.mxu0 0.0
    %3377 = vmatpush1.msra.mxu0 0.0
    %3378 = vmatprep.subr.mxu0 0.0
    %3379 = vmatpush1.msra.mxu0 0.0
    %3380 = vmatprep.subr.mxu0 0.0
    %3381 = vmatpush1.msra.mxu0 0.0
    %3382 = vmatprep.subr.mxu0 0.0
    %3383 = vmatpush1.msra.mxu0 0.0
    %3384 = vmatprep.subr.mxu0 0.0
    %3385 = vmatpush1.msra.mxu0 0.0
    %3386 = vmatprep.subr.mxu0 0.0
    %3387 = vmatpush1.msra.mxu0 0.0
    %3388 = vmatprep.subr.mxu0 0.0
    %3389 = vmatpush1.msra.mxu0 0.0
    %3390 = vmatprep.subr.mxu0 0.0
    %3391 = vmatpush1.msra.mxu0 0.0
    %3392 = vmatprep.subr.mxu0 0.0
    %3393 = vmatpush1.msra.mxu0 0.0
    %3394 = vmatprep.subr.mxu0 0.0
    %3395 = vmatpush1.msra.mxu0 0.0
    %3396 = vmatprep.subr.mxu0 0.0
    %3397 = vmatpush1.msra.mxu0 0.0
    %3398 = vmatprep.subr.mxu0 0.0
    %3399 = vmatpush1.msra.mxu0 0.0
    %3400 = vmatprep.subr.mxu0 0.0
    %3401 = vmatpush1.msra.mxu0 0.0
    %3402 = vmatprep.subr.mxu0 0.0
    %3403 = vmatpush1.msra.mxu0 0.0
    %3404 = vmatprep.subr.mxu0 0.0
    %3405 = vmatpush1.msra.mxu0 0.0
    %3406 = vmatprep.subr.mxu0 0.0
    %3407 = vmatpush1.msra.mxu0 0.0
    %3408 = vmatprep.subr.mxu0 0.0
    %3409 = vmatpush1.msra.mxu0 0.0
    %3410 = vmatprep.subr.mxu0 0.0
    %3411 = vmatpush1.msra.mxu0 0.0
    %3412 = vmatprep.subr.mxu0 0.0
    %3413 = vmatpush1.msra.mxu0 0.0
    %3414 = vmatprep.subr.mxu0 0.0
    %3415 = vmatpush1.msra.mxu0 0.0
    %3416 = vmatprep.subr.mxu0 0.0
    %3417 = vmatpush1.msra.mxu0 0.0
    %3418 = vmatprep.subr.mxu0 0.0
    %3419 = vmatpush1.msra.mxu0 0.0
    %3420 = vmatprep.subr.mxu0 0.0
    %3421 = vmatpush1.msra.mxu0 0.0
    %3422 = vmatprep.subr.mxu0 0.0
    %3423 = vmatpush1.msra.mxu0 0.0
    %3424 = vmatprep.subr.mxu0 0.0
    %3425 = vmatpush1.msra.mxu0 0.0
    %3426 = vmatprep.subr.mxu0 0.0
    %3427 = vmatpush1.msra.mxu0 0.0
    %3428 = vmatprep.subr.mxu0 0.0
    %3429 = vmatpush1.msra.mxu0 0.0
    %3430 = vmatprep.mubr.f32.mxu0 0.0
    %3431 = vmatmul.mubr.f32.gmra.mrb[0].mxu0 %v3361
    %v3432 = vpop.f32.mrb[0].mxu0
    %v3433 = vadd.f32 0.0, %v3432
    %v3434 = vpop.f32.mrb[0].mxu0
    %3435 = vmatprep.mubr.f32.mxu0 0.0
    %3436 = vmatmul.mubr.f32.gmra.mrb[0].mxu0 %v3364
    %v3437 = vpop.f32.mrb[0].mxu0
    %v3438 = vadd.f32 0.0, %v3437
    %v3439 = vpop.f32.mrb[0].mxu0
    %3440 = vdwg.mxu0
    %s3441 = scalar_lea.vmem %s4, 32
    %v3442 = vld [vmem:[%s3441] sm:$0xff]
    %v3443 = vld [vmem:[%s3441 + $0x8] sm:$0xff]
    %v3444 = vmul.f32 %v3433, %v3442
    %v3445 = vmul.f32 %v3438, %v3443
    %s3446 = scalar_lea.vmem [#allocation2], 64
    %v3447 = vld [vmem:[%s3446] sm:$0xff]
    %v3448 = vld [vmem:[%s3446 + $0x8] sm:$0xff]
    %v3449 = vld [vmem:[%s3446 + $0x10] sm:$0xff]
    %v3450 = vld [vmem:[%s3446 + $0x18] sm:$0xff]
    %v3452 = vsel %vm179, %v3444, 0
    %v3455 = vsel %vm179, %v3445, 0
    %3457 = vmatprep.subr.mxu0 0.0
    %3458 = vmatpush1.msra.mxu0 %v3447
    %3459 = vmatprep.subr.mxu0 0.0
    %3460 = vmatpush1.msra.mxu0 %v3448
    %3461 = vmatprep.subr.mxu0 0.0
    %3462 = vmatpush1.msra.mxu0 %v3449
    %3463 = vmatprep.subr.mxu0 0.0
    %3464 = vmatpush1.msra.mxu0 %v3450
    %3465 = vmatprep.subr.mxu0 0.0
    %3466 = vmatpush1.msra.mxu0 0.0
    %3467 = vmatprep.subr.mxu0 0.0
    %3468 = vmatpush1.msra.mxu0 0.0
    %3469 = vmatprep.subr.mxu0 0.0
    %3470 = vmatpush1.msra.mxu0 0.0
    %3471 = vmatprep.subr.mxu0 0.0
    %3472 = vmatpush1.msra.mxu0 0.0
    %3473 = vmatprep.subr.mxu0 0.0
    %3474 = vmatpush1.msra.mxu0 0.0
    %3475 = vmatprep.subr.mxu0 0.0
    %3476 = vmatpush1.msra.mxu0 0.0
    %3477 = vmatprep.subr.mxu0 0.0
    %3478 = vmatpush1.msra.mxu0 0.0
    %3479 = vmatprep.subr.mxu0 0.0
    %3480 = vmatpush1.msra.mxu0 0.0
    %3481 = vmatprep.subr.mxu0 0.0
    %3482 = vmatpush1.msra.mxu0 0.0
    %3483 = vmatprep.subr.mxu0 0.0
    %3484 = vmatpush1.msra.mxu0 0.0
    %3485 = vmatprep.subr.mxu0 0.0
    %3486 = vmatpush1.msra.mxu0 0.0
    %3487 = vmatprep.subr.mxu0 0.0
    %3488 = vmatpush1.msra.mxu0 0.0
    %3489 = vmatprep.subr.mxu0 0.0
    %3490 = vmatpush1.msra.mxu0 0.0
    %3491 = vmatprep.subr.mxu0 0.0
    %3492 = vmatpush1.msra.mxu0 0.0
    %3493 = vmatprep.subr.mxu0 0.0
    %3494 = vmatpush1.msra.mxu0 0.0
    %3495 = vmatprep.subr.mxu0 0.0
    %3496 = vmatpush1.msra.mxu0 0.0
    %3497 = vmatprep.subr.mxu0 0.0
    %3498 = vmatpush1.msra.mxu0 0.0
    %3499 = vmatprep.subr.mxu0 0.0
    %3500 = vmatpush1.msra.mxu0 0.0
    %3501 = vmatprep.subr.mxu0 0.0
    %3502 = vmatpush1.msra.mxu0 0.0
    %3503 = vmatprep.subr.mxu0 0.0
    %3504 = vmatpush1.msra.mxu0 0.0
    %3505 = vmatprep.subr.mxu0 0.0
    %3506 = vmatpush1.msra.mxu0 0.0
    %3507 = vmatprep.subr.mxu0 0.0
    %3508 = vmatpush1.msra.mxu0 0.0
    %3509 = vmatprep.subr.mxu0 0.0
    %3510 = vmatpush1.msra.mxu0 0.0
    %3511 = vmatprep.subr.mxu0 0.0
    %3512 = vmatpush1.msra.mxu0 0.0
    %3513 = vmatprep.subr.mxu0 0.0
    %3514 = vmatpush1.msra.mxu0 0.0
    %3515 = vmatprep.subr.mxu0 0.0
    %3516 = vmatpush1.msra.mxu0 0.0
    %3517 = vmatprep.subr.mxu0 0.0
    %3518 = vmatpush1.msra.mxu0 0.0
    %3519 = vmatprep.subr.mxu0 0.0
    %3520 = vmatpush1.msra.mxu0 0.0
    %3521 = vmatprep.mubr.f32.mxu0 0.0
    %3522 = vmatmul.mubr.f32.gmra.mrb[0].mxu0 %v3452
    %v3523 = vpop.f32.mrb[0].mxu0
    %v3524 = vadd.f32 0.0, %v3523
    %v3525 = vpop.f32.mrb[0].mxu0
    %3526 = vmatprep.mubr.f32.mxu0 0.0
    %3527 = vmatmul.mubr.f32.gmra.mrb[0].mxu0 %v3455
    %v3528 = vpop.f32.mrb[0].mxu0
    %v3529 = vadd.f32 0.0, %v3528
    %v3530 = vpop.f32.mrb[0].mxu0
    %3531 = vdwg.mxu0
    %v3532 = vld [vmem:[%s2 + $0x13] sm:$0x3]
    %v3533 = vld [vmem:[%s2 + $0x12] sm:$0x1]
    %v3534 = vlaneseq
    %v3535 = vshrl.u32 %v3534, 7
    %v3536 = vsub.s32 0, %v3535
    %v3537 = vrot.slane %v3533, %v3536
    %vm3538 = vcmask 130048
    %v3540 = vsel %vm3538, %v3532, 0
    %3542 = vmatprep.subr.mxu0 0.0
    %3543 = vmatpush1.msra.mxu0 %v3524
    %3544 = vmatprep.subr.mxu0 0.0
    %3545 = vmatpush1.msra.mxu0 %v3529
    %3546 = vmatprep.subr.mxu0 0.0
    %3547 = vmatpush1.msra.mxu0 0.0
    %3548 = vmatprep.subr.mxu0 0.0
    %3549 = vmatpush1.msra.mxu0 0.0
    %3550 = vmatprep.subr.mxu0 0.0
    %3551 = vmatpush1.msra.mxu0 0.0
    %3552 = vmatprep.subr.mxu0 0.0
    %3553 = vmatpush1.msra.mxu0 0.0
    %3554 = vmatprep.subr.mxu0 0.0
    %3555 = vmatpush1.msra.mxu0 0.0
    %3556 = vmatprep.subr.mxu0 0.0
    %3557 = vmatpush1.msra.mxu0 0.0
    %3558 = vmatprep.subr.mxu0 0.0
    %3559 = vmatpush1.msra.mxu0 0.0
    %3560 = vmatprep.subr.mxu0 0.0
    %3561 = vmatpush1.msra.mxu0 0.0
    %3562 = vmatprep.subr.mxu0 0.0
    %3563 = vmatpush1.msra.mxu0 0.0
    %3564 = vmatprep.subr.mxu0 0.0
    %3565 = vmatpush1.msra.mxu0 0.0
    %3566 = vmatprep.subr.mxu0 0.0
    %3567 = vmatpush1.msra.mxu0 0.0
    %3568 = vmatprep.subr.mxu0 0.0
    %3569 = vmatpush1.msra.mxu0 0.0
    %3570 = vmatprep.subr.mxu0 0.0
    %3571 = vmatpush1.msra.mxu0 0.0
    %3572 = vmatprep.subr.mxu0 0.0
    %3573 = vmatpush1.msra.mxu0 0.0
    %3574 = vmatprep.subr.mxu0 0.0
    %3575 = vmatpush1.msra.mxu0 0.0
    %3576 = vmatprep.subr.mxu0 0.0
    %3577 = vmatpush1.msra.mxu0 0.0
    %3578 = vmatprep.subr.mxu0 0.0
    %3579 = vmatpush1.msra.mxu0 0.0
    %3580 = vmatprep.subr.mxu0 0.0
    %3581 = vmatpush1.msra.mxu0 0.0
    %3582 = vmatprep.subr.mxu0 0.0
    %3583 = vmatpush1.msra.mxu0 0.0
    %3584 = vmatprep.subr.mxu0 0.0
    %3585 = vmatpush1.msra.mxu0 0.0
    %3586 = vmatprep.subr.mxu0 0.0
    %3587 = vmatpush1.msra.mxu0 0.0
    %3588 = vmatprep.subr.mxu0 0.0
    %3589 = vmatpush1.msra.mxu0 0.0
    %3590 = vmatprep.subr.mxu0 0.0
    %3591 = vmatpush1.msra.mxu0 0.0
    %3592 = vmatprep.subr.mxu0 0.0
    %3593 = vmatpush1.msra.mxu0 0.0
    %3594 = vmatprep.subr.mxu0 0.0
    %3595 = vmatpush1.msra.mxu0 0.0
    %3596 = vmatprep.subr.mxu0 0.0
    %3597 = vmatpush1.msra.mxu0 0.0
    %3598 = vmatprep.subr.mxu0 0.0
    %3599 = vmatpush1.msra.mxu0 0.0
    %3600 = vmatprep.subr.mxu0 0.0
    %3601 = vmatpush1.msra.mxu0 0.0
    %3602 = vmatprep.subr.mxu0 0.0
    %3603 = vmatpush1.msra.mxu0 0.0
    %3604 = vmatprep.subr.mxu0 0.0
    %3605 = vmatpush1.msra.mxu0 0.0
    %3606 = vmatprep.mubr.f32.mxu0 0.0
    %3607 = vmatmul.mubr.f32.gmra.mrb[0].mxu0 %v3540
    %v3608 = vpop.f32.mrb[0].mxu0
    %v3609 = vadd.f32 %v3537, %v3608
    %v3610 = vpop.f32.mrb[0].mxu0
    %3611 = vdwg.mxu0
    %vm3612 = vcmask 25600
    %3613 = vst.msk [vmem:[#allocation5] sm:$0x3] %vm3612, %v3609
    // Predicated region
    $region26: #{informer_classification.1} parent=1 // pred_check
      _
    $region27: #{informer_classification.1} parent=1 // pred_check_branch
      %3615 = sbr.rel (0) target = $region29
    $region28: #{informer_classification.1} parent=1 // pred_region
      %s3617 = ssub.s32 32, 32
      %3618 = vsyncadd [#allocation4], %s3617
      %s3620 = sshll.u32 [#allocation5], 4
      %s3621 = int_to_ptr.vmem [resolvable:$true] %s3620
      %3623 = dma.vmem_to_hbm [thread:$0]  %s3621, 32, %s5, [#allocation4]
    $region29: #{informer_classification.1} parent=1 // pred_fallthru
      _
    // Predicated region
    $region30: #{informer_classification.1} parent=1 // pred_check
      _
    $region31: #{informer_classification.1} parent=1 // pred_check_branch
      %3625 = sbr.rel (0) target = $region33
    $region32: #{informer_classification.1} parent=1 // pred_region
      %3626 = dma.done [#allocation4], 32
    $region33: #{informer_classification.1} parent=1 // pred_fallthru
      _
    %3627 = vsyncpa [#allocation3], 1
    %3628 = vsyncpa [#allocation4], 1

</llo_original>
